<compile_context>
chip_gen: v5e
topology: v5e:2x2
jax: 0.10.0
libtpu: 0.0.40
codegen_flags: <defaults>
</compile_context>

<pallas_src>
import jax
import jax.numpy as jnp
from jax.experimental import pallas as pl
from jax.experimental.pallas import tpu as pltpu

_BN_EPS = 1e-5


# ---------------------------------------------------------------------------
# Fused kernel:
#   [optional: BN-affine + ReLU of previous layer on the input, once per image]
#   -> 3x3 same conv (+bias) as one im2col matmul (bf16 MXU, fp32 accumulate)
#   -> per-channel partial sum / sum-of-squares for BatchNorm batch statistics
#   -> (optionally) writes into a zero-padded output buffer for the next layer.
# ---------------------------------------------------------------------------
def _make_conv_kernel(H, W, TH, apply_in_act, pad_output):
    Hp, Wp = H + 2, W + 2

    def kernel(x_ref, w_ref, b_ref, *rest):
        if apply_in_act:
            sc_ref, bi_ref, y_ref, ssum_ref, ssq_ref, act_scr = rest
        else:
            y_ref, ssum_ref, ssq_ref, act_scr = rest

        h = pl.program_id(1)
        Cin = act_scr.shape[-1]
        Cout = y_ref.shape[-1]

        # Once per image (the input block is VMEM-resident across all H tiles):
        # build the activated, zero-haloed input in a VMEM scratch.
        @pl.when(h == 0)
        def _prepare():
            x = x_ref[0].astype(jnp.float32)                     # (Hp, Wp, Cin)
            if apply_in_act:
                a = jnp.maximum(x * sc_ref[0] + bi_ref[0], 0.0)  # prev BN + ReLU
                row = jax.lax.broadcasted_iota(jnp.int32, (Hp, Wp, 1), 0)
                col = jax.lax.broadcasted_iota(jnp.int32, (Hp, Wp, 1), 1)
                inside = (row >= 1) & (row <= H) & (col >= 1) & (col <= W)
                a = jnp.where(inside, a, 0.0)    # halo must stay exactly zero
            else:
                a = x                            # already zero-padded raw input
            act_scr[...] = a
            if pad_output:
                # Zero the whole padded output block once; interior tiles are
                # overwritten below (block stays resident across the h axis).
                y_ref[...] = jnp.zeros_like(y_ref)

        row0 = pl.multiple_of(h * TH, TH)

        # im2col: gather the 9 shifted taps and fuse them into one (TH*W, 9*Cin)
        # patch matrix in registers, then a single deep MXU matmul.
        taps = []
        for ky in range(3):
            for kx in range(3):
                taps.append(act_scr[pl.ds(row0 + ky, TH), pl.ds(kx, W), :])
        patch = jnp.concatenate(taps, axis=-1).reshape(TH * W, 9 * Cin)

        acc = jnp.dot(patch.astype(jnp.bfloat16), w_ref[...],
                      preferred_element_type=jnp.float32)        # MXU, fp32 acc
        acc = acc + b_ref[0]                                     # conv bias

        # Partial BatchNorm statistics in fp32 (E[x^2]-E[x]^2 finalized in glue).
        ssum_ref[...] = jnp.sum(acc, axis=0).reshape(1, 1, 1, Cout)
        ssq_ref[...] = jnp.sum(acc * acc, axis=0).reshape(1, 1, 1, Cout)

        tile = acc.reshape(TH, W, Cout)
        if pad_output:
            # write the interior of the zero-padded (bf16) buffer for the next conv
            y_ref[0, pl.ds(1 + row0, TH), pl.ds(1, W), :] = tile.astype(y_ref.dtype)
        else:
            y_ref[0] = tile.astype(y_ref.dtype)

    return kernel


def _conv_layer(x_pad, w, b, in_scale=None, in_bias=None, *, pad_output):
    """x_pad: (N, H+2, W+2, Cin) zero-padded input.
    Returns (y, ssum, ssq); y is padded bf16 if pad_output else (N,H,W,Cout) f32."""
    N, Hp, Wp, Cin = x_pad.shape
    H, W = Hp - 2, Wp - 2
    Cout = w.shape[-1]
    TH = 8 if H % 8 == 0 else H
    nH = H // TH
    apply_in_act = in_scale is not None

    w2d = w.reshape(9 * Cin, Cout).astype(jnp.bfloat16)   # (ky,kx,ci) flattened
    b2d = b.reshape(1, Cout).astype(jnp.float32)

    in_specs = [
        pl.BlockSpec((1, Hp, Wp, Cin), lambda n, h: (n, 0, 0, 0)),
        pl.BlockSpec((9 * Cin, Cout), lambda n, h: (0, 0)),
        pl.BlockSpec((1, Cout), lambda n, h: (0, 0)),
    ]
    args = [x_pad, w2d, b2d]
    if apply_in_act:
        in_specs += [
            pl.BlockSpec((1, Cin), lambda n, h: (0, 0)),
            pl.BlockSpec((1, Cin), lambda n, h: (0, 0)),
        ]
        args += [in_scale.reshape(1, Cin).astype(jnp.float32),
                 in_bias.reshape(1, Cin).astype(jnp.float32)]

    if pad_output:
        y_shape = jax.ShapeDtypeStruct((N, Hp, Wp, Cout), jnp.bfloat16)
        y_spec = pl.BlockSpec((1, Hp, Wp, Cout), lambda n, h: (n, 0, 0, 0))
    else:
        y_shape = jax.ShapeDtypeStruct((N, H, W, Cout), jnp.float32)
        y_spec = pl.BlockSpec((1, TH, W, Cout), lambda n, h: (n, h, 0, 0))

    stats_shape = jax.ShapeDtypeStruct((N, nH, 1, Cout), jnp.float32)
    stats_spec = pl.BlockSpec((1, 1, 1, Cout), lambda n, h: (n, h, 0, 0))

    kernel = _make_conv_kernel(H, W, TH, apply_in_act, pad_output)

    return pl.pallas_call(
        kernel,
        out_shape=(y_shape, stats_shape, stats_shape),
        grid=(N, nH),
        in_specs=in_specs,
        out_specs=(y_spec, stats_spec, stats_spec),
        scratch_shapes=[
            pltpu.VMEM((Hp, Wp, Cin), jnp.float32),   # activated, zero-haloed input
        ],
        compiler_params=pltpu.CompilerParams(
            dimension_semantics=("parallel", "arbitrary")),
    )(*args)


def _finalize_bn(ssum, ssq, gamma, beta, count):
    mean = jnp.sum(ssum, axis=(0, 1, 2)) / count
    ex2 = jnp.sum(ssq, axis=(0, 1, 2)) / count
    var = jnp.maximum(ex2 - mean * mean, 0.0)   # biased batch var (PyTorch train-mode)
    scale = gamma * jax.lax.rsqrt(var + _BN_EPS)
    bias = beta - mean * scale
    return scale, bias


# ---------------------------------------------------------------------------
# Final BN + ReLU, lane-dense elementwise pass on an (N, H, W*C) view.
# ---------------------------------------------------------------------------
def _bn_relu_kernel(x_ref, s_ref, b_ref, o_ref):
    y = x_ref[...].astype(jnp.float32) * s_ref[0] + b_ref[0]
    o_ref[...] = jnp.maximum(y, 0.0).astype(o_ref.dtype)


def _bn_relu_lane_dense(y, scale, bias):
    N, H, W, C = y.shape
    TH = 8 if H % 8 == 0 else H
    y_flat = y.reshape(N, H, W * C)
    s_t = jnp.tile(scale.astype(jnp.float32), W).reshape(1, W * C)
    b_t = jnp.tile(bias.astype(jnp.float32), W).reshape(1, W * C)
    out = pl.pallas_call(
        _bn_relu_kernel,
        out_shape=jax.ShapeDtypeStruct((N, H, W * C), jnp.float32),
        grid=(N, H // TH),
        in_specs=[
            pl.BlockSpec((1, TH, W * C), lambda n, h: (n, h, 0)),
            pl.BlockSpec((1, W * C), lambda n, h: (0, 0)),
            pl.BlockSpec((1, W * C), lambda n, h: (0, 0)),
        ],
        out_specs=pl.BlockSpec((1, TH, W * C), lambda n, h: (n, h, 0)),
        compiler_params=pltpu.CompilerParams(
            dimension_semantics=("parallel", "parallel")),
    )(y_flat, s_t, b_t)
    return out.reshape(N, H, W, C)


# ---------------------------------------------------------------------------
# DoubleConv forward: (conv -> BN(train-mode batch stats) -> ReLU) * 2
# TODO(synk): PyTorch BatchNorm's running-stat buffer updates are a training
# side effect and are not modeled; normalization uses batch stats, as in the
# module's train-mode forward.
# ---------------------------------------------------------------------------
def double_conv_forward(x_nchw, params):
    (w1, b1, g1, bt1), (w2, b2, g2, bt2) = params
    x = jnp.transpose(x_nchw, (0, 2, 3, 1)).astype(jnp.float32)   # NCHW -> NHWC
    N, H, W, _ = x.shape
    count = N * H * W

    # layer 1: conv -> zero-padded bf16 pre-BN output + batch statistics
    x_pad = jnp.pad(x, ((0, 0), (1, 1), (1, 1), (0, 0)))   # only pad in the forward
    y1_pad, s1, q1 = _conv_layer(x_pad, w1, b1, pad_output=True)
    scale1, bias1 = _finalize_bn(s1, q1, g1, bt1, count)

    # layer 2: BN1 + ReLU fused into the conv's input stage; conv + statistics
    y2, s2, q2 = _conv_layer(y1_pad, w2, b2, scale1, bias1, pad_output=False)
    scale2, bias2 = _finalize_bn(s2, q2, g2, bt2, count)

    # final BN2 + ReLU (single lane-dense elementwise pass)
    out = _bn_relu_lane_dense(y2, scale2, bias2)
    return jnp.transpose(out, (0, 3, 1, 2))                        # NHWC -> NCHW


# ---------------------------------------------------------------------------
# Deterministic parameter construction (DoubleConv(in_ch, out_ch): mid=out).
# ---------------------------------------------------------------------------
def make_params(key, in_channels, out_channels, mid_channels=None):
    if not mid_channels:
        mid_channels = out_channels
    params = []
    chans = [(in_channels, mid_channels), (mid_channels, out_channels)]
    for i, (cin, cout) in enumerate(chans):
        kw, kb = jax.random.split(jax.random.fold_in(key, i))
        fan_in = cin * 9
        w = jax.random.normal(kw, (3, 3, cin, cout), jnp.float32) / jnp.sqrt(fan_in)
        b = jax.random.normal(kb, (cout,), jnp.float32) * 0.01
        gamma = jnp.ones((cout,), jnp.float32)   # BN weight init
        beta = jnp.zeros((cout,), jnp.float32)   # BN bias init
        params.append((w, b, gamma, beta))
    return params


# pure-JAX fp32 reference for a sanity check
def _reference(x_nchw, params):
    x = x_nchw.astype(jnp.float32)
    for (w, b, gamma, beta) in params:
        w_oihw = jnp.transpose(w, (3, 2, 0, 1))  # (Cout, Cin, 3, 3)
        y = jax.lax.conv_general_dilated(
            x, w_oihw, window_strides=(1, 1), padding="SAME",
            dimension_numbers=("NCHW", "OIHW", "NCHW"))
        y = y + b[None, :, None, None]
        mean = jnp.mean(y, axis=(0, 2, 3), keepdims=True)
        var = jnp.var(y, axis=(0, 2, 3), keepdims=True)
        y = (y - mean) / jnp.sqrt(var + _BN_EPS)
        y = y * gamma[None, :, None, None] + beta[None, :, None, None]
        x = jnp.maximum(y, 0.0)
    return x


if __name__ == "__main__":
    key = jax.random.PRNGKey(0)
    kx, kp = jax.random.split(key)

    N, Cin, H, W = 2, 4, 16, 16
    Cout = 8
    x = jax.random.normal(kx, (N, Cin, H, W), jnp.float32)
    params = make_params(kp, Cin, Cout)

    fwd = jax.jit(double_conv_forward)
    out = jax.block_until_ready(fwd(x, params))

    ref = _reference(x, params)
    assert out.shape == (N, Cout, H, W)
    # bf16 MXU operands + bf16 intermediate activation -> looser tolerance than fp32.
    max_err = float(jnp.max(jnp.abs(out - ref)))
    assert max_err < 2e-1, max_err

    print("KERNEL_OK")
</pallas_src>

<mosaic_0001>
module attributes {stable_mosaic.version = 11 : i64} {
  func.func @kernel(%arg0: i32, %arg1: i32, %arg2: memref<1x18x18x4xf32, #tpu.memory_space<vmem>>, %arg3: memref<36x8xbf16, #tpu.memory_space<vmem>>, %arg4: memref<1x8xf32, #tpu.memory_space<vmem>>, %arg5: memref<1x18x18x8xbf16, #tpu.memory_space<vmem>>, %arg6: memref<1x1x1x8xf32, #tpu.memory_space<vmem>>, %arg7: memref<1x1x1x8xf32, #tpu.memory_space<vmem>>, %arg8: memref<18x18x4xf32, #tpu.memory_space<vmem>>) attributes {dimension_semantics = [#tpu.dimension_semantics<parallel>, #tpu.dimension_semantics<arbitrary>], iteration_bounds = array<i64: 2, 2>, scalar_prefetch = 0 : i64, scratch_operands = 1 : i64, tpu.core_type = #tpu.core_type<tc>, window_params = [{transform_indices = @transform_0, window_bounds = array<i64: 1, 18, 18, 4>}, {pipeline_mode = #tpu.pipeline_mode<synchronous>, transform_indices = @transform_1, window_bounds = array<i64: 36, 8>}, {pipeline_mode = #tpu.pipeline_mode<synchronous>, transform_indices = @transform_2, window_bounds = array<i64: 1, 8>}, {transform_indices = @transform_3, window_bounds = array<i64: 1, 18, 18, 8>}, {transform_indices = @transform_4, window_bounds = array<i64: 1, 1, 1, 8>}, {transform_indices = @transform_5, window_bounds = array<i64: 1, 1, 1, 8>}]} {
    %c0_i32 = arith.constant 0 : i32
    %0 = arith.cmpi eq, %arg1, %c0_i32 : i32
    %1 = arith.extui %0 : i1 to i32
    %c0_i32_0 = arith.constant 0 : i32
    %2 = arith.cmpi ne, %1, %c0_i32_0 : i32
    scf.if %2 {
      %c0_41 = arith.constant 0 : index
      %c0_42 = arith.constant 0 : index
      %c0_43 = arith.constant 0 : index
      %c0_44 = arith.constant 0 : index
      %56 = vector.load %arg2[%c0_41, %c0_42, %c0_43, %c0_44] : memref<1x18x18x4xf32, #tpu.memory_space<vmem>>, vector<1x18x18x4xf32>
      %57 = vector.shape_cast %56 : vector<1x18x18x4xf32> to vector<18x18x4xf32>
      %c0_45 = arith.constant 0 : index
      %c0_46 = arith.constant 0 : index
      %c0_47 = arith.constant 0 : index
      %58 = vector.load %arg8[%c0_45, %c0_46, %c0_47] : memref<18x18x4xf32, #tpu.memory_space<vmem>>, vector<18x18x4xf32>
      tpu.vector_store %arg8[%c0_45, %c0_46, %c0_47], %57 {strides = array<i32>} : memref<18x18x4xf32, #tpu.memory_space<vmem>>, vector<18x18x4xf32>,
      %cst_48 = arith.constant 0.000000e+00 : bf16
      %59 = vector.broadcast %cst_48 : bf16 to vector<1x18x18x8xbf16>
      %c0_49 = arith.constant 0 : index
      %c0_50 = arith.constant 0 : index
      %c0_51 = arith.constant 0 : index
      %c0_52 = arith.constant 0 : index
      %60 = vector.load %arg5[%c0_49, %c0_50, %c0_51, %c0_52] : memref<1x18x18x8xbf16, #tpu.memory_space<vmem>>, vector<1x18x18x8xbf16>
      tpu.vector_store %arg5[%c0_49, %c0_50, %c0_51, %c0_52], %59 {strides = array<i32>} : memref<1x18x18x8xbf16, #tpu.memory_space<vmem>>, vector<1x18x18x8xbf16>,
    } else {
    }
    %c8_i32 = arith.constant 8 : i32
    %3 = arith.muli %arg1, %c8_i32 : i32
    %4 = tpu.assume_multiple %3, 8 : i32
    %c0_i32_1 = arith.constant 0 : i32
    %5 = arith.addi %4, %c0_i32_1 : i32
    %6 = arith.index_cast %5 : i32 to index
    %c0 = arith.constant 0 : index
    %c0_2 = arith.constant 0 : index
    %7 = vector.load %arg8[%6, %c0, %c0_2] : memref<18x18x4xf32, #tpu.memory_space<vmem>>, vector<8x16x4xf32>
    %c0_i32_3 = arith.constant 0 : i32
    %8 = arith.addi %4, %c0_i32_3 : i32
    %9 = arith.index_cast %8 : i32 to index
    %c1 = arith.constant 1 : index
    %c0_4 = arith.constant 0 : index
    %10 = vector.load %arg8[%9, %c1, %c0_4] : memref<18x18x4xf32, #tpu.memory_space<vmem>>, vector<8x16x4xf32>
    %c0_i32_5 = arith.constant 0 : i32
    %11 = arith.addi %4, %c0_i32_5 : i32
    %12 = arith.index_cast %11 : i32 to index
    %c2 = arith.constant 2 : index
    %c0_6 = arith.constant 0 : index
    %13 = vector.load %arg8[%12, %c2, %c0_6] : memref<18x18x4xf32, #tpu.memory_space<vmem>>, vector<8x16x4xf32>
    %c1_i32 = arith.constant 1 : i32
    %14 = arith.addi %4, %c1_i32 : i32
    %15 = arith.index_cast %14 : i32 to index
    %c0_7 = arith.constant 0 : index
    %c0_8 = arith.constant 0 : index
    %16 = vector.load %arg8[%15, %c0_7, %c0_8] : memref<18x18x4xf32, #tpu.memory_space<vmem>>, vector<8x16x4xf32>
    %c1_i32_9 = arith.constant 1 : i32
    %17 = arith.addi %4, %c1_i32_9 : i32
    %18 = arith.index_cast %17 : i32 to index
    %c1_10 = arith.constant 1 : index
    %c0_11 = arith.constant 0 : index
    %19 = vector.load %arg8[%18, %c1_10, %c0_11] : memref<18x18x4xf32, #tpu.memory_space<vmem>>, vector<8x16x4xf32>
    %c1_i32_12 = arith.constant 1 : i32
    %20 = arith.addi %4, %c1_i32_12 : i32
    %21 = arith.index_cast %20 : i32 to index
    %c2_13 = arith.constant 2 : index
    %c0_14 = arith.constant 0 : index
    %22 = vector.load %arg8[%21, %c2_13, %c0_14] : memref<18x18x4xf32, #tpu.memory_space<vmem>>, vector<8x16x4xf32>
    %c2_i32 = arith.constant 2 : i32
    %23 = arith.addi %4, %c2_i32 : i32
    %24 = arith.index_cast %23 : i32 to index
    %c0_15 = arith.constant 0 : index
    %c0_16 = arith.constant 0 : index
    %25 = vector.load %arg8[%24, %c0_15, %c0_16] : memref<18x18x4xf32, #tpu.memory_space<vmem>>, vector<8x16x4xf32>
    %c2_i32_17 = arith.constant 2 : i32
    %26 = arith.addi %4, %c2_i32_17 : i32
    %27 = arith.index_cast %26 : i32 to index
    %c1_18 = arith.constant 1 : index
    %c0_19 = arith.constant 0 : index
    %28 = vector.load %arg8[%27, %c1_18, %c0_19] : memref<18x18x4xf32, #tpu.memory_space<vmem>>, vector<8x16x4xf32>
    %c2_i32_20 = arith.constant 2 : i32
    %29 = arith.addi %4, %c2_i32_20 : i32
    %30 = arith.index_cast %29 : i32 to index
    %c2_21 = arith.constant 2 : index
    %c0_22 = arith.constant 0 : index
    %31 = vector.load %arg8[%30, %c2_21, %c0_22] : memref<18x18x4xf32, #tpu.memory_space<vmem>>, vector<8x16x4xf32>
    %32 = tpu.concatenate %7, %10, %13, %16, %19, %22, %25, %28, %31 in 2 : vector<8x16x4xf32>, vector<8x16x4xf32>, vector<8x16x4xf32>, vector<8x16x4xf32>, vector<8x16x4xf32>, vector<8x16x4xf32>, vector<8x16x4xf32>, vector<8x16x4xf32>, vector<8x16x4xf32> -> vector<8x16x36xf32>
    %33 = vector.shape_cast %32 : vector<8x16x36xf32> to vector<128x36xf32>
    %34 = arith.truncf %33 : vector<128x36xf32> to vector<128x36xbf16>
    %c0_23 = arith.constant 0 : index
    %c0_24 = arith.constant 0 : index
    %35 = vector.load %arg3[%c0_23, %c0_24] : memref<36x8xbf16, #tpu.memory_space<vmem>>, vector<36x8xbf16>
    %cst = arith.constant dense<0.000000e+00> : vector<128x8xf32>
    %36 = tpu.matmul %34, %35, %cst {dimension_numbers = #tpu.dot_dimension_numbers<[1], [0], [0], [1], [0, 0, 1, 1], [], []>} : vector<128x36xbf16>, vector<36x8xbf16>, vector<128x8xf32> -> vector<128x8xf32>
    %c0_25 = arith.constant 0 : index
    %c0_26 = arith.constant 0 : index
    %37 = vector.load %arg4[%c0_25, %c0_26] : memref<1x8xf32, #tpu.memory_space<vmem>>, vector<1x8xf32>
    %38 = vector.shape_cast %37 : vector<1x8xf32> to vector<8xf32>
    %39 = vector.shape_cast %38 : vector<8xf32> to vector<1x8xf32>
    %40 = vector.broadcast %39 : vector<1x8xf32> to vector<128x8xf32>
    %41 = arith.addf %36, %40 : vector<128x8xf32>
    %cst_27 = arith.constant dense<0.000000e+00> : vector<8xf32>
    %42 = vector.multi_reduction <add>, %41, %cst_27 [0] : vector<128x8xf32> to vector<8xf32>
    %43 = vector.shape_cast %42 : vector<8xf32> to vector<1x1x1x8xf32>
    %c0_28 = arith.constant 0 : index
    %c0_29 = arith.constant 0 : index
    %c0_30 = arith.constant 0 : index
    %c0_31 = arith.constant 0 : index
    %44 = vector.load %arg6[%c0_28, %c0_29, %c0_30, %c0_31] : memref<1x1x1x8xf32, #tpu.memory_space<vmem>>, vector<1x1x1x8xf32>
    tpu.vector_store %arg6[%c0_28, %c0_29, %c0_30, %c0_31], %43 {strides = array<i32>} : memref<1x1x1x8xf32, #tpu.memory_space<vmem>>, vector<1x1x1x8xf32>,
    %45 = arith.mulf %41, %41 : vector<128x8xf32>
    %cst_32 = arith.constant dense<0.000000e+00> : vector<8xf32>
    %46 = vector.multi_reduction <add>, %45, %cst_32 [0] : vector<128x8xf32> to vector<8xf32>
    %47 = vector.shape_cast %46 : vector<8xf32> to vector<1x1x1x8xf32>
    %c0_33 = arith.constant 0 : index
    %c0_34 = arith.constant 0 : index
    %c0_35 = arith.constant 0 : index
    %c0_36 = arith.constant 0 : index
    %48 = vector.load %arg7[%c0_33, %c0_34, %c0_35, %c0_36] : memref<1x1x1x8xf32, #tpu.memory_space<vmem>>, vector<1x1x1x8xf32>
    tpu.vector_store %arg7[%c0_33, %c0_34, %c0_35, %c0_36], %47 {strides = array<i32>} : memref<1x1x1x8xf32, #tpu.memory_space<vmem>>, vector<1x1x1x8xf32>,
    %49 = vector.shape_cast %41 : vector<128x8xf32> to vector<8x16x8xf32>
    %50 = arith.truncf %49 : vector<8x16x8xf32> to vector<8x16x8xbf16>
    %c1_i32_37 = arith.constant 1 : i32
    %51 = arith.addi %c1_i32_37, %4 : i32
    %c0_38 = arith.constant 0 : index
    %52 = arith.index_cast %51 : i32 to index
    %c1_39 = arith.constant 1 : index
    %c0_40 = arith.constant 0 : index
    %53 = vector.load %arg5[%c0_38, %52, %c1_39, %c0_40] : memref<1x18x18x8xbf16, #tpu.memory_space<vmem>>, vector<1x8x16x8xbf16>
    %54 = vector.shape_cast %53 : vector<1x8x16x8xbf16> to vector<8x16x8xbf16>
    %55 = vector.shape_cast %50 : vector<8x16x8xbf16> to vector<1x8x16x8xbf16>
    tpu.vector_store %arg5[%c0_38, %52, %c1_39, %c0_40], %55 {strides = array<i32>} : memref<1x18x18x8xbf16, #tpu.memory_space<vmem>>, vector<1x8x16x8xbf16>,
    return
  }
  func.func @transform_0(%arg0: i32, %arg1: i32) -> (i32, i32, i32, i32) {
    %c0_i32 = arith.constant 0 : i32
    %c0_i32_0 = arith.constant 0 : i32
    %c0_i32_1 = arith.constant 0 : i32
    %c0_i32_2 = arith.constant 0 : i32
    return %arg0, %c0_i32, %c0_i32_0, %c0_i32_1 : i32, i32, i32, i32
  }
  func.func @transform_1(%arg0: i32, %arg1: i32) -> (i32, i32) {
    %c0_i32 = arith.constant 0 : i32
    %c0_i32_0 = arith.constant 0 : i32
    %c0_i32_1 = arith.constant 0 : i32
    return %c0_i32, %c0_i32_0 : i32, i32
  }
  func.func @transform_2(%arg0: i32, %arg1: i32) -> (i32, i32) {
    %c0_i32 = arith.constant 0 : i32
    %c0_i32_0 = arith.constant 0 : i32
    %c0_i32_1 = arith.constant 0 : i32
    return %c0_i32, %c0_i32_0 : i32, i32
  }
  func.func @transform_3(%arg0: i32, %arg1: i32) -> (i32, i32, i32, i32) {
    %c0_i32 = arith.constant 0 : i32
    %c0_i32_0 = arith.constant 0 : i32
    %c0_i32_1 = arith.constant 0 : i32
    %c0_i32_2 = arith.constant 0 : i32
    return %arg0, %c0_i32, %c0_i32_0, %c0_i32_1 : i32, i32, i32, i32
  }
  func.func @transform_4(%arg0: i32, %arg1: i32) -> (i32, i32, i32, i32) {
    %c0_i32 = arith.constant 0 : i32
    %c0_i32_0 = arith.constant 0 : i32
    %c0_i32_1 = arith.constant 0 : i32
    return %arg0, %arg1, %c0_i32, %c0_i32_0 : i32, i32, i32, i32
  }
  func.func @transform_5(%arg0: i32, %arg1: i32) -> (i32, i32, i32, i32) {
    %c0_i32 = arith.constant 0 : i32
    %c0_i32_0 = arith.constant 0 : i32
    %c0_i32_1 = arith.constant 0 : i32
    return %arg0, %arg1, %c0_i32, %c0_i32_0 : i32, i32, i32, i32
  }
}

module attributes {stable_mosaic.version = 11 : i64} {
  func.func @kernel(%arg0: i32, %arg1: i32, %arg2: memref<1x18x18x8xbf16, #tpu.memory_space<vmem>>, %arg3: memref<72x8xbf16, #tpu.memory_space<vmem>>, %arg4: memref<1x8xf32, #tpu.memory_space<vmem>>, %arg5: memref<1x8xf32, #tpu.memory_space<vmem>>, %arg6: memref<1x8xf32, #tpu.memory_space<vmem>>, %arg7: memref<1x8x16x8xf32, #tpu.memory_space<vmem>>, %arg8: memref<1x1x1x8xf32, #tpu.memory_space<vmem>>, %arg9: memref<1x1x1x8xf32, #tpu.memory_space<vmem>>, %arg10: memref<18x18x8xf32, #tpu.memory_space<vmem>>) attributes {dimension_semantics = [#tpu.dimension_semantics<parallel>, #tpu.dimension_semantics<arbitrary>], iteration_bounds = array<i64: 2, 2>, scalar_prefetch = 0 : i64, scratch_operands = 1 : i64, tpu.core_type = #tpu.core_type<tc>, window_params = [{transform_indices = @transform_0, window_bounds = array<i64: 1, 18, 18, 8>}, {pipeline_mode = #tpu.pipeline_mode<synchronous>, transform_indices = @transform_1, window_bounds = array<i64: 72, 8>}, {pipeline_mode = #tpu.pipeline_mode<synchronous>, transform_indices = @transform_2, window_bounds = array<i64: 1, 8>}, {pipeline_mode = #tpu.pipeline_mode<synchronous>, transform_indices = @transform_3, window_bounds = array<i64: 1, 8>}, {pipeline_mode = #tpu.pipeline_mode<synchronous>, transform_indices = @transform_4, window_bounds = array<i64: 1, 8>}, {transform_indices = @transform_5, window_bounds = array<i64: 1, 8, 16, 8>}, {transform_indices = @transform_6, window_bounds = array<i64: 1, 1, 1, 8>}, {transform_indices = @transform_7, window_bounds = array<i64: 1, 1, 1, 8>}]} {
    %c0_i32 = arith.constant 0 : i32
    %0 = arith.cmpi eq, %arg1, %c0_i32 : i32
    %1 = arith.extui %0 : i1 to i32
    %c0_i32_0 = arith.constant 0 : i32
    %2 = arith.cmpi ne, %1, %c0_i32_0 : i32
    scf.if %2 {
      %c0_41 = arith.constant 0 : index
      %c0_42 = arith.constant 0 : index
      %c0_43 = arith.constant 0 : index
      %c0_44 = arith.constant 0 : index
      %53 = vector.load %arg2[%c0_41, %c0_42, %c0_43, %c0_44] : memref<1x18x18x8xbf16, #tpu.memory_space<vmem>>, vector<1x18x18x8xbf16>
      %54 = vector.shape_cast %53 : vector<1x18x18x8xbf16> to vector<18x18x8xbf16>
      %55 = arith.extf %54 : vector<18x18x8xbf16> to vector<18x18x8xf32>
      %c0_45 = arith.constant 0 : index
      %c0_46 = arith.constant 0 : index
      %56 = vector.load %arg5[%c0_45, %c0_46] : memref<1x8xf32, #tpu.memory_space<vmem>>, vector<1x8xf32>
      %57 = vector.shape_cast %56 : vector<1x8xf32> to vector<8xf32>
      %58 = vector.shape_cast %57 : vector<8xf32> to vector<1x1x8xf32>
      %59 = vector.broadcast %58 : vector<1x1x8xf32> to vector<18x18x8xf32>
      %60 = arith.mulf %55, %59 : vector<18x18x8xf32>
      %c0_47 = arith.constant 0 : index
      %c0_48 = arith.constant 0 : index
      %61 = vector.load %arg6[%c0_47, %c0_48] : memref<1x8xf32, #tpu.memory_space<vmem>>, vector<1x8xf32>
      %62 = vector.shape_cast %61 : vector<1x8xf32> to vector<8xf32>
      %63 = vector.shape_cast %62 : vector<8xf32> to vector<1x1x8xf32>
      %64 = vector.broadcast %63 : vector<1x1x8xf32> to vector<18x18x8xf32>
      %65 = arith.addf %60, %64 : vector<18x18x8xf32>
      %cst_49 = arith.constant 0.000000e+00 : f32
      %66 = vector.broadcast %cst_49 : f32 to vector<18x18x8xf32>
      %67 = arith.maximumf %65, %66 : vector<18x18x8xf32>
      %68 = tpu.iota {dimensions = array<i32: 0>} : vector<18x18x1xi32>
      %69 = tpu.iota {dimensions = array<i32: 1>} : vector<18x18x1xi32>
      %c1_i32_50 = arith.constant 1 : i32
      %70 = vector.broadcast %c1_i32_50 : i32 to vector<18x18x1xi32>
      %71 = arith.cmpi sge, %68, %70 : vector<18x18x1xi32>
      %c16_i32 = arith.constant 16 : i32
      %72 = vector.broadcast %c16_i32 : i32 to vector<18x18x1xi32>
      %73 = arith.cmpi sle, %68, %72 : vector<18x18x1xi32>
      %74 = arith.andi %71, %73 : vector<18x18x1xi1>
      %c1_i32_51 = arith.constant 1 : i32
      %75 = vector.broadcast %c1_i32_51 : i32 to vector<18x18x1xi32>
      %76 = arith.cmpi sge, %69, %75 : vector<18x18x1xi32>
      %77 = arith.andi %74, %76 : vector<18x18x1xi1>
      %c16_i32_52 = arith.constant 16 : i32
      %78 = vector.broadcast %c16_i32_52 : i32 to vector<18x18x1xi32>
      %79 = arith.cmpi sle, %69, %78 : vector<18x18x1xi32>
      %80 = arith.andi %77, %79 : vector<18x18x1xi1>
      %cst_53 = arith.constant 0.000000e+00 : f32
      %81 = vector.shape_cast %80 : vector<18x18x1xi1> to vector<18x18x1xi1>
      %82 = vector.broadcast %81 : vector<18x18x1xi1> to vector<18x18x8xi1>
      %83 = vector.broadcast %cst_53 : f32 to vector<18x18x8xf32>
      %84 = arith.select %82, %67, %83 : vector<18x18x8xi1>, vector<18x18x8xf32>
      %c0_54 = arith.constant 0 : index
      %c0_55 = arith.constant 0 : index
      %c0_56 = arith.constant 0 : index
      %85 = vector.load %arg10[%c0_54, %c0_55, %c0_56] : memref<18x18x8xf32, #tpu.memory_space<vmem>>, vector<18x18x8xf32>
      tpu.vector_store %arg10[%c0_54, %c0_55, %c0_56], %84 {strides = array<i32>} : memref<18x18x8xf32, #tpu.memory_space<vmem>>, vector<18x18x8xf32>,
    } else {
    }
    %c8_i32 = arith.constant 8 : i32
    %3 = arith.muli %arg1, %c8_i32 : i32
    %4 = tpu.assume_multiple %3, 8 : i32
    %c0_i32_1 = arith.constant 0 : i32
    %5 = arith.addi %4, %c0_i32_1 : i32
    %6 = arith.index_cast %5 : i32 to index
    %c0 = arith.constant 0 : index
    %c0_2 = arith.constant 0 : index
    %7 = vector.load %arg10[%6, %c0, %c0_2] : memref<18x18x8xf32, #tpu.memory_space<vmem>>, vector<8x16x8xf32>
    %c0_i32_3 = arith.constant 0 : i32
    %8 = arith.addi %4, %c0_i32_3 : i32
    %9 = arith.index_cast %8 : i32 to index
    %c1 = arith.constant 1 : index
    %c0_4 = arith.constant 0 : index
    %10 = vector.load %arg10[%9, %c1, %c0_4] : memref<18x18x8xf32, #tpu.memory_space<vmem>>, vector<8x16x8xf32>
    %c0_i32_5 = arith.constant 0 : i32
    %11 = arith.addi %4, %c0_i32_5 : i32
    %12 = arith.index_cast %11 : i32 to index
    %c2 = arith.constant 2 : index
    %c0_6 = arith.constant 0 : index
    %13 = vector.load %arg10[%12, %c2, %c0_6] : memref<18x18x8xf32, #tpu.memory_space<vmem>>, vector<8x16x8xf32>
    %c1_i32 = arith.constant 1 : i32
    %14 = arith.addi %4, %c1_i32 : i32
    %15 = arith.index_cast %14 : i32 to index
    %c0_7 = arith.constant 0 : index
    %c0_8 = arith.constant 0 : index
    %16 = vector.load %arg10[%15, %c0_7, %c0_8] : memref<18x18x8xf32, #tpu.memory_space<vmem>>, vector<8x16x8xf32>
    %c1_i32_9 = arith.constant 1 : i32
    %17 = arith.addi %4, %c1_i32_9 : i32
    %18 = arith.index_cast %17 : i32 to index
    %c1_10 = arith.constant 1 : index
    %c0_11 = arith.constant 0 : index
    %19 = vector.load %arg10[%18, %c1_10, %c0_11] : memref<18x18x8xf32, #tpu.memory_space<vmem>>, vector<8x16x8xf32>
    %c1_i32_12 = arith.constant 1 : i32
    %20 = arith.addi %4, %c1_i32_12 : i32
    %21 = arith.index_cast %20 : i32 to index
    %c2_13 = arith.constant 2 : index
    %c0_14 = arith.constant 0 : index
    %22 = vector.load %arg10[%21, %c2_13, %c0_14] : memref<18x18x8xf32, #tpu.memory_space<vmem>>, vector<8x16x8xf32>
    %c2_i32 = arith.constant 2 : i32
    %23 = arith.addi %4, %c2_i32 : i32
    %24 = arith.index_cast %23 : i32 to index
    %c0_15 = arith.constant 0 : index
    %c0_16 = arith.constant 0 : index
    %25 = vector.load %arg10[%24, %c0_15, %c0_16] : memref<18x18x8xf32, #tpu.memory_space<vmem>>, vector<8x16x8xf32>
    %c2_i32_17 = arith.constant 2 : i32
    %26 = arith.addi %4, %c2_i32_17 : i32
    %27 = arith.index_cast %26 : i32 to index
    %c1_18 = arith.constant 1 : index
    %c0_19 = arith.constant 0 : index
    %28 = vector.load %arg10[%27, %c1_18, %c0_19] : memref<18x18x8xf32, #tpu.memory_space<vmem>>, vector<8x16x8xf32>
    %c2_i32_20 = arith.constant 2 : i32
    %29 = arith.addi %4, %c2_i32_20 : i32
    %30 = arith.index_cast %29 : i32 to index
    %c2_21 = arith.constant 2 : index
    %c0_22 = arith.constant 0 : index
    %31 = vector.load %arg10[%30, %c2_21, %c0_22] : memref<18x18x8xf32, #tpu.memory_space<vmem>>, vector<8x16x8xf32>
    %32 = tpu.concatenate %7, %10, %13, %16, %19, %22, %25, %28, %31 in 2 : vector<8x16x8xf32>, vector<8x16x8xf32>, vector<8x16x8xf32>, vector<8x16x8xf32>, vector<8x16x8xf32>, vector<8x16x8xf32>, vector<8x16x8xf32>, vector<8x16x8xf32>, vector<8x16x8xf32> -> vector<8x16x72xf32>
    %33 = vector.shape_cast %32 : vector<8x16x72xf32> to vector<128x72xf32>
    %34 = arith.truncf %33 : vector<128x72xf32> to vector<128x72xbf16>
    %c0_23 = arith.constant 0 : index
    %c0_24 = arith.constant 0 : index
    %35 = vector.load %arg3[%c0_23, %c0_24] : memref<72x8xbf16, #tpu.memory_space<vmem>>, vector<72x8xbf16>
    %cst = arith.constant dense<0.000000e+00> : vector<128x8xf32>
    %36 = tpu.matmul %34, %35, %cst {dimension_numbers = #tpu.dot_dimension_numbers<[1], [0], [0], [1], [0, 0, 1, 1], [], []>} : vector<128x72xbf16>, vector<72x8xbf16>, vector<128x8xf32> -> vector<128x8xf32>
    %c0_25 = arith.constant 0 : index
    %c0_26 = arith.constant 0 : index
    %37 = vector.load %arg4[%c0_25, %c0_26] : memref<1x8xf32, #tpu.memory_space<vmem>>, vector<1x8xf32>
    %38 = vector.shape_cast %37 : vector<1x8xf32> to vector<8xf32>
    %39 = vector.shape_cast %38 : vector<8xf32> to vector<1x8xf32>
    %40 = vector.broadcast %39 : vector<1x8xf32> to vector<128x8xf32>
    %41 = arith.addf %36, %40 : vector<128x8xf32>
    %cst_27 = arith.constant dense<0.000000e+00> : vector<8xf32>
    %42 = vector.multi_reduction <add>, %41, %cst_27 [0] : vector<128x8xf32> to vector<8xf32>
    %43 = vector.shape_cast %42 : vector<8xf32> to vector<1x1x1x8xf32>
    %c0_28 = arith.constant 0 : index
    %c0_29 = arith.constant 0 : index
    %c0_30 = arith.constant 0 : index
    %c0_31 = arith.constant 0 : index
    %44 = vector.load %arg8[%c0_28, %c0_29, %c0_30, %c0_31] : memref<1x1x1x8xf32, #tpu.memory_space<vmem>>, vector<1x1x1x8xf32>
    tpu.vector_store %arg8[%c0_28, %c0_29, %c0_30, %c0_31], %43 {strides = array<i32>} : memref<1x1x1x8xf32, #tpu.memory_space<vmem>>, vector<1x1x1x8xf32>,
    %45 = arith.mulf %41, %41 : vector<128x8xf32>
    %cst_32 = arith.constant dense<0.000000e+00> : vector<8xf32>
    %46 = vector.multi_reduction <add>, %45, %cst_32 [0] : vector<128x8xf32> to vector<8xf32>
    %47 = vector.shape_cast %46 : vector<8xf32> to vector<1x1x1x8xf32>
    %c0_33 = arith.constant 0 : index
    %c0_34 = arith.constant 0 : index
    %c0_35 = arith.constant 0 : index
    %c0_36 = arith.constant 0 : index
    %48 = vector.load %arg9[%c0_33, %c0_34, %c0_35, %c0_36] : memref<1x1x1x8xf32, #tpu.memory_space<vmem>>, vector<1x1x1x8xf32>
    tpu.vector_store %arg9[%c0_33, %c0_34, %c0_35, %c0_36], %47 {strides = array<i32>} : memref<1x1x1x8xf32, #tpu.memory_space<vmem>>, vector<1x1x1x8xf32>,
    %49 = vector.shape_cast %41 : vector<128x8xf32> to vector<8x16x8xf32>
    %c0_37 = arith.constant 0 : index
    %c0_38 = arith.constant 0 : index
    %c0_39 = arith.constant 0 : index
    %c0_40 = arith.constant 0 : index
    %50 = vector.load %arg7[%c0_37, %c0_38, %c0_39, %c0_40] : memref<1x8x16x8xf32, #tpu.memory_space<vmem>>, vector<1x8x16x8xf32>
    %51 = vector.shape_cast %50 : vector<1x8x16x8xf32> to vector<8x16x8xf32>
    %52 = vector.shape_cast %49 : vector<8x16x8xf32> to vector<1x8x16x8xf32>
    tpu.vector_store %arg7[%c0_37, %c0_38, %c0_39, %c0_40], %52 {strides = array<i32>} : memref<1x8x16x8xf32, #tpu.memory_space<vmem>>, vector<1x8x16x8xf32>,
    return
  }
  func.func @transform_0(%arg0: i32, %arg1: i32) -> (i32, i32, i32, i32) {
    %c0_i32 = arith.constant 0 : i32
    %c0_i32_0 = arith.constant 0 : i32
    %c0_i32_1 = arith.constant 0 : i32
    %c0_i32_2 = arith.constant 0 : i32
    return %arg0, %c0_i32, %c0_i32_0, %c0_i32_1 : i32, i32, i32, i32
  }
  func.func @transform_1(%arg0: i32, %arg1: i32) -> (i32, i32) {
    %c0_i32 = arith.constant 0 : i32
    %c0_i32_0 = arith.constant 0 : i32
    %c0_i32_1 = arith.constant 0 : i32
    return %c0_i32, %c0_i32_0 : i32, i32
  }
  func.func @transform_2(%arg0: i32, %arg1: i32) -> (i32, i32) {
    %c0_i32 = arith.constant 0 : i32
    %c0_i32_0 = arith.constant 0 : i32
    %c0_i32_1 = arith.constant 0 : i32
    return %c0_i32, %c0_i32_0 : i32, i32
  }
  func.func @transform_3(%arg0: i32, %arg1: i32) -> (i32, i32) {
    %c0_i32 = arith.constant 0 : i32
    %c0_i32_0 = arith.constant 0 : i32
    %c0_i32_1 = arith.constant 0 : i32
    return %c0_i32, %c0_i32_0 : i32, i32
  }
  func.func @transform_4(%arg0: i32, %arg1: i32) -> (i32, i32) {
    %c0_i32 = arith.constant 0 : i32
    %c0_i32_0 = arith.constant 0 : i32
    %c0_i32_1 = arith.constant 0 : i32
    return %c0_i32, %c0_i32_0 : i32, i32
  }
  func.func @transform_5(%arg0: i32, %arg1: i32) -> (i32, i32, i32, i32) {
    %c0_i32 = arith.constant 0 : i32
    %c0_i32_0 = arith.constant 0 : i32
    %c0_i32_1 = arith.constant 0 : i32
    return %arg0, %arg1, %c0_i32, %c0_i32_0 : i32, i32, i32, i32
  }
  func.func @transform_6(%arg0: i32, %arg1: i32) -> (i32, i32, i32, i32) {
    %c0_i32 = arith.constant 0 : i32
    %c0_i32_0 = arith.constant 0 : i32
    %c0_i32_1 = arith.constant 0 : i32
    return %arg0, %arg1, %c0_i32, %c0_i32_0 : i32, i32, i32, i32
  }
  func.func @transform_7(%arg0: i32, %arg1: i32) -> (i32, i32, i32, i32) {
    %c0_i32 = arith.constant 0 : i32
    %c0_i32_0 = arith.constant 0 : i32
    %c0_i32_1 = arith.constant 0 : i32
    return %arg0, %arg1, %c0_i32, %c0_i32_0 : i32, i32, i32, i32
  }
}

module attributes {stable_mosaic.version = 11 : i64} {
  func.func @_bn_relu_kernel(%arg0: i32, %arg1: i32, %arg2: memref<1x8x128xf32, #tpu.memory_space<vmem>>, %arg3: memref<1x128xf32, #tpu.memory_space<vmem>>, %arg4: memref<1x128xf32, #tpu.memory_space<vmem>>, %arg5: memref<1x8x128xf32, #tpu.memory_space<vmem>>) attributes {dimension_semantics = [#tpu.dimension_semantics<parallel>, #tpu.dimension_semantics<parallel>], iteration_bounds = array<i64: 2, 2>, scalar_prefetch = 0 : i64, scratch_operands = 0 : i64, tpu.core_type = #tpu.core_type<tc>, window_params = [{transform_indices = @transform_0, window_bounds = array<i64: 1, 8, 128>}, {pipeline_mode = #tpu.pipeline_mode<synchronous>, transform_indices = @transform_1, window_bounds = array<i64: 1, 128>}, {pipeline_mode = #tpu.pipeline_mode<synchronous>, transform_indices = @transform_2, window_bounds = array<i64: 1, 128>}, {transform_indices = @transform_3, window_bounds = array<i64: 1, 8, 128>}]} {
    %c0 = arith.constant 0 : index
    %c0_0 = arith.constant 0 : index
    %c0_1 = arith.constant 0 : index
    %0 = vector.load %arg2[%c0, %c0_0, %c0_1] : memref<1x8x128xf32, #tpu.memory_space<vmem>>, vector<1x8x128xf32>
    %c0_2 = arith.constant 0 : index
    %c0_3 = arith.constant 0 : index
    %1 = vector.load %arg3[%c0_2, %c0_3] : memref<1x128xf32, #tpu.memory_space<vmem>>, vector<1x128xf32>
    %2 = vector.shape_cast %1 : vector<1x128xf32> to vector<128xf32>
    %3 = vector.shape_cast %2 : vector<128xf32> to vector<1x1x128xf32>
    %4 = vector.broadcast %3 : vector<1x1x128xf32> to vector<1x8x128xf32>
    %5 = arith.mulf %0, %4 : vector<1x8x128xf32>
    %c0_4 = arith.constant 0 : index
    %c0_5 = arith.constant 0 : index
    %6 = vector.load %arg4[%c0_4, %c0_5] : memref<1x128xf32, #tpu.memory_space<vmem>>, vector<1x128xf32>
    %7 = vector.shape_cast %6 : vector<1x128xf32> to vector<128xf32>
    %8 = vector.shape_cast %7 : vector<128xf32> to vector<1x1x128xf32>
    %9 = vector.broadcast %8 : vector<1x1x128xf32> to vector<1x8x128xf32>
    %10 = arith.addf %5, %9 : vector<1x8x128xf32>
    %cst = arith.constant 0.000000e+00 : f32
    %11 = vector.broadcast %cst : f32 to vector<1x8x128xf32>
    %12 = arith.maximumf %10, %11 : vector<1x8x128xf32>
    %c0_6 = arith.constant 0 : index
    %c0_7 = arith.constant 0 : index
    %c0_8 = arith.constant 0 : index
    %13 = vector.load %arg5[%c0_6, %c0_7, %c0_8] : memref<1x8x128xf32, #tpu.memory_space<vmem>>, vector<1x8x128xf32>
    tpu.vector_store %arg5[%c0_6, %c0_7, %c0_8], %12 {strides = array<i32>} : memref<1x8x128xf32, #tpu.memory_space<vmem>>, vector<1x8x128xf32>,
    return
  }
  func.func @transform_0(%arg0: i32, %arg1: i32) -> (i32, i32, i32) {
    %c0_i32 = arith.constant 0 : i32
    %c0_i32_0 = arith.constant 0 : i32
    return %arg0, %arg1, %c0_i32 : i32, i32, i32
  }
  func.func @transform_1(%arg0: i32, %arg1: i32) -> (i32, i32) {
    %c0_i32 = arith.constant 0 : i32
    %c0_i32_0 = arith.constant 0 : i32
    %c0_i32_1 = arith.constant 0 : i32
    return %c0_i32, %c0_i32_0 : i32, i32
  }
  func.func @transform_2(%arg0: i32, %arg1: i32) -> (i32, i32) {
    %c0_i32 = arith.constant 0 : i32
    %c0_i32_0 = arith.constant 0 : i32
    %c0_i32_1 = arith.constant 0 : i32
    return %c0_i32, %c0_i32_0 : i32, i32
  }
  func.func @transform_3(%arg0: i32, %arg1: i32) -> (i32, i32, i32) {
    %c0_i32 = arith.constant 0 : i32
    %c0_i32_0 = arith.constant 0 : i32
    return %arg0, %arg1, %c0_i32 : i32, i32, i32
  }
}

</mosaic_0001>

<llo_original>
// kernel: tile.13
$region0: #{tile.13}
  #allocation0 [shape = 's32[1]{0}', space=sflag, size = 0x4, scoped, tag = 'scoped memory for tile.13']
  %s0 = inlined_call_operand.vmem [shape: f32[8], index: 0, kind: input, shape index: {}]
  %s1 = inlined_call_operand.vmem [shape: f32[16,8], index: 1, kind: output, shape index: {}]
  // Predicated region
  $region2: #{tile.13} parent=0 // pred_check
    _
  $region3: #{tile.13} parent=0 // pred_check_branch
    %3 = sbr.rel (0) target = $region5
  $region4: #{tile.13} parent=0 // pred_region
    _
  $region5: #{tile.13} parent=0 // pred_fallthru
    _
  %v4 = vld [vmem:[%s0] ss:$0 sm:$0xff]
  %5 = vst [vmem:[%s1] sm:$0xff] %v4
  %s6 = scalar_lea.vmem %s1, 8
  %7 = vst [vmem:[%s6] sm:$0xff] %v4

// kernel: tile.14
$region0: #{tile.14}
  %s0 = inlined_call_operand.vmem [shape: f32[16,8], index: 0, kind: input, shape index: {}]
  %s1 = inlined_call_operand.vmem [shape: f32[1,128], index: 1, kind: output, shape index: {}]
  $region1: #{tile.14} parent=0
    #allocation0 [shape = 'u8[4096]{0}', space=vmem, size = 0x1000, scoped, tag = 'scoped mem for output reshape']
    %v2 = vld [vmem:[%s0] sm:$0x1]
    %vm3 = vcmask 64512
    %4 = vst.msk [vmem:[#allocation0] sm:$0x1] %vm3, %v2
    %s5 = scalar_lea.vmem %s0, 15
    %v6 = vld [vmem:[%s5] sm:$0x1]
    %7 = vrot.lane.b32.xlu0 %v6, 120
    %v8 = vpop.permute.xlu0 %7
    %vm9 = vcmask 1048512
    %10 = vst.msk [vmem:[#allocation0] sm:$0x1] %vm9, %v8
    %s11 = scalar_lea.vmem %s0, 14
    %v12 = vld [vmem:[%s11] sm:$0x1]
    %13 = vrot.lane.b32.xlu0 %v12, 112
    %v14 = vpop.permute.xlu0 %13
    %vm15 = vcmask 982912
    %16 = vst.msk [vmem:[#allocation0] sm:$0x1] %vm15, %v14
    %s17 = scalar_lea.vmem %s0, 13
    %v18 = vld [vmem:[%s17] sm:$0x1]
    %19 = vrot.lane.b32.xlu0 %v18, 104
    %v20 = vpop.permute.xlu0 %19
    %vm21 = vcmask 917312
    %22 = vst.msk [vmem:[#allocation0] sm:$0x1] %vm21, %v20
    %s23 = scalar_lea.vmem %s0, 12
    %v24 = vld [vmem:[%s23] sm:$0x1]
    %25 = vrot.lane.b32.xlu0 %v24, 96
    %v26 = vpop.permute.xlu0 %25
    %vm27 = vcmask 851712
    %28 = vst.msk [vmem:[#allocation0] sm:$0x1] %vm27, %v26
    %s29 = scalar_lea.vmem %s0, 11
    %v30 = vld [vmem:[%s29] sm:$0x1]
    %31 = vrot.lane.b32.xlu0 %v30, 88
    %v32 = vpop.permute.xlu0 %31
    %vm33 = vcmask 786112
    %34 = vst.msk [vmem:[#allocation0] sm:$0x1] %vm33, %v32
    %s35 = scalar_lea.vmem %s0, 10
    %v36 = vld [vmem:[%s35] sm:$0x1]
    %37 = vrot.lane.b32.xlu0 %v36, 80
    %v38 = vpop.permute.xlu0 %37
    %vm39 = vcmask 720512
    %40 = vst.msk [vmem:[#allocation0] sm:$0x1] %vm39, %v38
    %s41 = scalar_lea.vmem %s0, 9
    %v42 = vld [vmem:[%s41] sm:$0x1]
    %43 = vrot.lane.b32.xlu0 %v42, 72
    %v44 = vpop.permute.xlu0 %43
    %vm45 = vcmask 654912
    %46 = vst.msk [vmem:[#allocation0] sm:$0x1] %vm45, %v44
    %s47 = scalar_lea.vmem %s0, 8
    %v48 = vld [vmem:[%s47] sm:$0x1]
    %49 = vrot.lane.b32.xlu0 %v48, 64
    %v50 = vpop.permute.xlu0 %49
    %vm51 = vcmask 589312
    %52 = vst.msk [vmem:[#allocation0] sm:$0x1] %vm51, %v50
    %s53 = scalar_lea.vmem %s0, 7
    %v54 = vld [vmem:[%s53] sm:$0x1]
    %55 = vrot.lane.b32.xlu0 %v54, 56
    %v56 = vpop.permute.xlu0 %55
    %vm57 = vcmask 523712
    %58 = vst.msk [vmem:[#allocation0] sm:$0x1] %vm57, %v56
    %s59 = scalar_lea.vmem %s0, 6
    %v60 = vld [vmem:[%s59] sm:$0x1]
    %61 = vrot.lane.b32.xlu0 %v60, 48
    %v62 = vpop.permute.xlu0 %61
    %vm63 = vcmask 458112
    %64 = vst.msk [vmem:[#allocation0] sm:$0x1] %vm63, %v62
    %s65 = scalar_lea.vmem %s0, 5
    %v66 = vld [vmem:[%s65] sm:$0x1]
    %67 = vrot.lane.b32.xlu0 %v66, 40
    %v68 = vpop.permute.xlu0 %67
    %vm69 = vcmask 392512
    %70 = vst.msk [vmem:[#allocation0] sm:$0x1] %vm69, %v68
    %s71 = scalar_lea.vmem %s0, 4
    %v72 = vld [vmem:[%s71] sm:$0x1]
    %73 = vrot.lane.b32.xlu0 %v72, 32
    %v74 = vpop.permute.xlu0 %73
    %vm75 = vcmask 326912
    %76 = vst.msk [vmem:[#allocation0] sm:$0x1] %vm75, %v74
    %s77 = scalar_lea.vmem %s0, 3
    %v78 = vld [vmem:[%s77] sm:$0x1]
    %79 = vrot.lane.b32.xlu0 %v78, 24
    %v80 = vpop.permute.xlu0 %79
    %vm81 = vcmask 261312
    %82 = vst.msk [vmem:[#allocation0] sm:$0x1] %vm81, %v80
    %s83 = scalar_lea.vmem %s0, 2
    %v84 = vld [vmem:[%s83] sm:$0x1]
    %85 = vrot.lane.b32.xlu0 %v84, 16
    %v86 = vpop.permute.xlu0 %85
    %vm87 = vcmask 195712
    %88 = vst.msk [vmem:[#allocation0] sm:$0x1] %vm87, %v86
    %s89 = scalar_lea.vmem %s0, 1
    %v90 = vld [vmem:[%s89] sm:$0x1]
    %91 = vrot.lane.b32.xlu0 %v90, 8
    %v92 = vpop.permute.xlu0 %91
    %vm93 = vcmask 130112
    %94 = vst.msk [vmem:[#allocation0] sm:$0x1] %vm93, %v92
    %s96 = ssub.s32 2, 1
    %v97 = vld [vmem:[#allocation0] sm:%s96]
    %s99 = ssub.s32 2, 1
    %100 = vst [vmem:[%s1] sm:%s99] %v97

// kernel: double_conv_forward.5
$region0: #{double_conv_forward.5}
  #allocation0 [shape = 'u32[]', space=smem, size = 0x4, offset = 0x4, fixed_abs, tag = 'smem constant byte address 0x4 - core index']
  #allocation1 [shape = 'u32[72,128]{1,0:T(1,128)}', space=vmem, size = 0x9000, scoped, tag = 'internal scratch']
  %s0 = inlined_call_operand.vmem [shape: f32[2,16,128], index: 0, kind: input, shape index: {}]
  %s1 = inlined_call_operand.vmem [shape: f32[1,128], index: 1, kind: input, shape index: {}]
  %s2 = inlined_call_operand.vmem [shape: f32[1,128], index: 2, kind: input, shape index: {}]
  %s3 = inlined_call_operand.vmem [shape: f32[2,16,128], index: 3, kind: output, shape index: {}]
  %s4 = sld [smem:[#allocation0]]
  $region45: #{double_conv_forward.5} parent=0
    _
  %s6 = ssub.s32 1, %s4
  %s7 = scalar_select 0, %s6, %s4
  loop: start=0, step=1, limit=6
  $region2: #{double_conv_forward.5} parent=0 // loop_pre_header
    _
  $region3: #{double_conv_forward.5} parent=0 // loop_header
    %s9 = sphi 0, %s13
    %p10 = scmp.ge.s32.totalorder %s9, 6
    %s16 = sphi 0, %s28
    %s17 = sphi 0, %s24
    %s18 = sphi 0, %s16
    %s19 = sphi 0, %s17
    %s20 = sphi 0, %s18
    %s21 = sphi 0, %s19
    %s33 = sphi 0, %s35
    %s36 = sphi 0, %s33
    %s37 = sphi 0, %s36
    %s53 = sphi 0, %s37
    %s57 = sphi 0, %s57
    %s59 = sphi 0, %s57
    %s60 = sphi 0, %s59
    %s74 = sphi 0, %s60
    %s78 = sphi 0, %s78
    %s80 = sphi 0, %s78
    %s81 = sphi 0, %s80
    %s95 = sphi 0, %s81
    %s103 = sphi 0, %s105
    %s106 = sphi 0, %s103
    %s107 = sphi 0, %s106
    %s123 = sphi 0, %s107
  $region4: #{double_conv_forward.5} parent=0 // loop_header_branch
    %12 = sbr.rel (%p10) target = $region8
  $region5: #{double_conv_forward.5} parent=0 // loop_body
    %s14 = ssub.s32 %s9, 1
    %s15 = ssub.s32 %s9, 2
    %s22 = sadd.s32 1, %s17
    %p23 = scmp.ge.s32.totalorder %s22, 2
    %s24 = scalar_select %p23, 0, %s22
    %s25 = sadd.s32 1, %s16
    %s26 = scalar_select %p23, %s25, %s16
    %p27 = scmp.ge.s32.totalorder %s26, 2
    %s28 = scalar_select %p27, 0, %s26
    %s29 = ssub.s32 %s16, %s28
    %s30 = ssub.s32 %s17, %s24
    %s31 = sor.u32 %s29, %s30
    %p32 = scmp.eq.s32.totalorder %s31, 0
    %s34 = sadd.s32 %s33, 1
    %s35 = scalar_select %p32, %s33, %s34
    %p38 = pneg %p32
    %p39 = scmp.eq.s32.totalorder %s9, 3
    %p40 = por %p38, %p39
    %p41 = scmp.ne.s32.totalorder %s33, %s36
    %p42 = scmp.eq.s32.totalorder %s9, 0
    %p43 = por %p41, %p42
    %p44 = scmp.ne.s32.totalorder %s33, %s36
    %p45 = scmp.eq.s32.totalorder %s14, 3
    %p46 = por %p44, %p45
    %p47 = scmp.ne.s32.totalorder %s36, %s37
    %p48 = scmp.eq.s32.totalorder %s14, 0
    %p49 = por %p47, %p48
    %p50 = scmp.ne.s32.totalorder %s36, %s37
    %p51 = scmp.eq.s32.totalorder %s15, 3
    %p52 = por %p50, %p51
    %p54 = scmp.ne.s32.totalorder %s37, %s53
    %p55 = scmp.eq.s32.totalorder %s15, 0
    %p56 = por %p54, %p55
    %s58 = sadd.s32 %s57, 1
    %p61 = scmp.eq.s32.totalorder %s9, 3
    %p62 = scmp.ne.s32.totalorder %s57, %s59
    %p63 = scmp.eq.s32.totalorder %s9, 0
    %p64 = por %p62, %p63
    %p65 = scmp.ne.s32.totalorder %s57, %s59
    %p66 = scmp.eq.s32.totalorder %s14, 3
    %p67 = por %p65, %p66
    %p68 = scmp.ne.s32.totalorder %s59, %s60
    %p69 = scmp.eq.s32.totalorder %s14, 0
    %p70 = por %p68, %p69
    %p71 = scmp.ne.s32.totalorder %s59, %s60
    %p72 = scmp.eq.s32.totalorder %s15, 3
    %p73 = por %p71, %p72
    %p75 = scmp.ne.s32.totalorder %s60, %s74
    %p76 = scmp.eq.s32.totalorder %s15, 0
    %p77 = por %p75, %p76
    %s79 = sadd.s32 %s78, 1
    %p82 = scmp.eq.s32.totalorder %s9, 3
    %p83 = scmp.ne.s32.totalorder %s78, %s80
    %p84 = scmp.eq.s32.totalorder %s9, 0
    %p85 = por %p83, %p84
    %p86 = scmp.ne.s32.totalorder %s78, %s80
    %p87 = scmp.eq.s32.totalorder %s14, 3
    %p88 = por %p86, %p87
    %p89 = scmp.ne.s32.totalorder %s80, %s81
    %p90 = scmp.eq.s32.totalorder %s14, 0
    %p91 = por %p89, %p90
    %p92 = scmp.ne.s32.totalorder %s80, %s81
    %p93 = scmp.eq.s32.totalorder %s15, 3
    %p94 = por %p92, %p93
    %p96 = scmp.ne.s32.totalorder %s81, %s95
    %p97 = scmp.eq.s32.totalorder %s15, 0
    %p98 = por %p96, %p97
    %s99 = ssub.s32 %s16, %s28
    %s100 = ssub.s32 %s17, %s24
    %s101 = sor.u32 %s99, %s100
    %p102 = scmp.eq.s32.totalorder %s101, 0
    %s104 = sadd.s32 %s103, 1
    %s105 = scalar_select %p102, %s103, %s104
    %p108 = pneg %p102
    %p109 = scmp.eq.s32.totalorder %s9, 3
    %p110 = por %p108, %p109
    %p111 = scmp.ne.s32.totalorder %s103, %s106
    %p112 = scmp.eq.s32.totalorder %s9, 0
    %p113 = por %p111, %p112
    %p114 = scmp.ne.s32.totalorder %s103, %s106
    %p115 = scmp.eq.s32.totalorder %s14, 3
    %p116 = por %p114, %p115
    %p117 = scmp.ne.s32.totalorder %s106, %s107
    %p118 = scmp.eq.s32.totalorder %s14, 0
    %p119 = por %p117, %p118
    %p120 = scmp.ne.s32.totalorder %s106, %s107
    %p121 = scmp.eq.s32.totalorder %s15, 3
    %p122 = por %p120, %p121
    %p124 = scmp.ne.s32.totalorder %s107, %s123
    %p125 = scmp.eq.s32.totalorder %s15, 0
    %p126 = por %p124, %p125
    %p127 = scmp.le.s32.totalorder 1, %s9
    %p128 = scmp.lt.s32.totalorder %s9, 5
    %p129 = pnand %p127, %p128
    %p130 = pneg %p129
    // Predicated region
    $region9: #{double_conv_forward.5} parent=5 // pred_check
      _
    $region10: #{double_conv_forward.5} parent=5 // pred_check_branch
      %132 = sbr.rel (%p129) target = $region12
    $region11: #{double_conv_forward.5} parent=5 // pred_region
      %s133 = ssub.s32 %s9, 1
      // Predicated region
      $region13: #{double_conv_forward.5} parent=11 // pred_check
        %p134 = pneg %p70
      $region14: #{double_conv_forward.5} parent=11 // pred_check_branch
        %136 = sbr.rel (%p134) target = $region16
      $region15: #{double_conv_forward.5} parent=11 // pred_region
        _
      $region16: #{double_conv_forward.5} parent=11 // pred_fallthru
        _
      // Predicated region
      $region17: #{double_conv_forward.5} parent=11 // pred_check
        %p137 = pneg %p91
      $region18: #{double_conv_forward.5} parent=11 // pred_check_branch
        %139 = sbr.rel (%p137) target = $region20
      $region19: #{double_conv_forward.5} parent=11 // pred_region
        _
      $region20: #{double_conv_forward.5} parent=11 // pred_fallthru
        _
    $region12: #{double_conv_forward.5} parent=5 // pred_fallthru
      _
    %p140 = scmp.lt.s32.totalorder %s9, 4
    // Predicated region
    $region21: #{double_conv_forward.5} parent=5 // pred_check
      %p141 = pneg %p140
    $region22: #{double_conv_forward.5} parent=5 // pred_check_branch
      %143 = sbr.rel (%p141) target = $region24
    $region23: #{double_conv_forward.5} parent=5 // pred_region
      // Predicated region
      $region25: #{double_conv_forward.5} parent=23 // pred_check
        %p144 = pneg %p43
      $region26: #{double_conv_forward.5} parent=23 // pred_check_branch
        %146 = sbr.rel (%p144) target = $region28
      $region27: #{double_conv_forward.5} parent=23 // pred_region
        %p147 = scmp.lt.s32.totalorder %s16, 1
        %s148 = scalar_select %p147, %s16, 1
        %p149 = scmp.lt.s32.totalorder %s17, 1
        %s150 = scalar_select %p149, %s17, 1
        %s151 = smul.addr %s148, 2
        %s152 = sadd.s32 %s150, %s151
        %s153 = smul.addr %s152, 8
        %s154 = scalar_lea.vmem %s0, %s153
      $region28: #{double_conv_forward.5} parent=23 // pred_fallthru
        _
    $region24: #{double_conv_forward.5} parent=5 // pred_fallthru
      _
    %p155 = scmp.le.s32.totalorder 1, %s9
    %p156 = scmp.lt.s32.totalorder %s9, 5
    %p157 = pnand %p155, %p156
    %p158 = pneg %p157
    // Predicated region
    $region29: #{double_conv_forward.5} parent=5 // pred_check
      _
    $region30: #{double_conv_forward.5} parent=5 // pred_check_branch
      %160 = sbr.rel (%p157) target = $region32
    $region31: #{double_conv_forward.5} parent=5 // pred_region
      %s161 = ssub.s32 %s9, 1
      %p162 = scmp.lt.s32.totalorder %s18, 1
      %s163 = scalar_select %p162, %s18, 1
      %p164 = scmp.lt.s32.totalorder %s19, 1
      %s165 = scalar_select %p164, %s19, 1
      %s166 = smul.addr %s163, 2
      %s167 = sadd.s32 %s165, %s166
      %s168 = smul.addr %s167, 8
      %s169 = scalar_lea.vmem %s0, %s168
      %p170 = pneg %p49
      %p171 = pneg %p46
      %p172 = pneg %p70
      %p173 = pneg %p67
      %p174 = pneg %p91
      %p175 = pneg %p88
      %p176 = pneg %p119
      %p177 = pneg %p116
      %p178 = scmp.lt.s32.totalorder %s18, 1
      %s179 = scalar_select %p178, %s18, 1
      %p180 = scmp.lt.s32.totalorder %s19, 1
      %s181 = scalar_select %p180, %s19, 1
      %s182 = smul.addr %s179, 2
      %s183 = sadd.s32 %s181, %s182
      %s184 = smul.addr %s183, 8
      %s185 = scalar_lea.vmem %s3, %s184
      %p186 = scmp.lt.s32.totalorder %s18, 1
      %s187 = scalar_select %p186, %s18, 1
      %p188 = scmp.lt.s32.totalorder %s19, 1
      %s189 = scalar_select %p188, %s19, 1
      %s190 = smul.addr %s187, 2
      %s191 = sadd.s32 %s189, %s190
      %s192 = smul.addr %s191, 8
      %s193 = scalar_lea.vmem %s0, %s192
      %p194 = scmp.lt.s32.totalorder %s18, 1
      %s195 = scalar_select %p194, %s18, 1
      %p196 = scmp.lt.s32.totalorder %s19, 1
      %s197 = scalar_select %p196, %s19, 1
      %s198 = smul.addr %s195, 2
      %s199 = sadd.s32 %s197, %s198
      %s200 = smul.addr %s199, 8
      %s201 = scalar_lea.vmem %s3, %s200
      %v202 = vld [vmem:[%s193] sm:$0xff]
      %v203 = vld [vmem:[%s1] sm:$0x1]
      %v205 = vperm.slane %v203, 0
      %v207 = vmul.f32 %v202, %v205
      %v208 = vld [vmem:[%s2] sm:$0x1]
      %v210 = vperm.slane %v208, 0
      %v212 = vadd.f32 %v207, %v210
      %v213 = vmax.f32 %v212, 0.0
      %214 = vst [vmem:[%s201] sm:$0xff] %v213
      %p215 = scmp.lt.s32.totalorder %s18, 1
      %s216 = scalar_select %p215, %s18, 1
      %p217 = scmp.lt.s32.totalorder %s19, 1
      %s218 = scalar_select %p217, %s19, 1
      %s219 = smul.addr %s216, 2
      %s220 = sadd.s32 %s218, %s219
      %s221 = smul.addr %s220, 8
      %s222 = scalar_lea.vmem %s3, %s221
      // Predicated region
      $region33: #{double_conv_forward.5} parent=31 // pred_check
        %p223 = pneg %p116
      $region34: #{double_conv_forward.5} parent=31 // pred_check_branch
        %225 = sbr.rel (%p223) target = $region36
      $region35: #{double_conv_forward.5} parent=31 // pred_region
        _
      $region36: #{double_conv_forward.5} parent=31 // pred_fallthru
        _
    $region32: #{double_conv_forward.5} parent=5 // pred_fallthru
      _
    %p226 = scmp.le.s32.totalorder 2, %s9
    // Predicated region
    $region37: #{double_conv_forward.5} parent=5 // pred_check
      %p227 = pneg %p226
    $region38: #{double_conv_forward.5} parent=5 // pred_check_branch
      %229 = sbr.rel (%p227) target = $region40
    $region39: #{double_conv_forward.5} parent=5 // pred_region
      %s230 = ssub.s32 %s9, 2
      // Predicated region
      $region41: #{double_conv_forward.5} parent=39 // pred_check
        %p231 = pneg %p122
      $region42: #{double_conv_forward.5} parent=39 // pred_check_branch
        %233 = sbr.rel (%p231) target = $region44
      $region43: #{double_conv_forward.5} parent=39 // pred_region
        %p234 = scmp.lt.s32.totalorder %s20, 1
        %s235 = scalar_select %p234, %s20, 1
        %p236 = scmp.lt.s32.totalorder %s21, 1
        %s237 = scalar_select %p236, %s21, 1
        %s238 = smul.addr %s235, 2
        %s239 = sadd.s32 %s237, %s238
        %s240 = smul.addr %s239, 8
        %s241 = scalar_lea.vmem %s3, %s240
      $region44: #{double_conv_forward.5} parent=39 // pred_fallthru
        _
    $region40: #{double_conv_forward.5} parent=5 // pred_fallthru
      _
  $region6: #{double_conv_forward.5} parent=0 // loop_footer
    %s13 = sadd.s32 1, %s9
  $region7: #{double_conv_forward.5} parent=0 // loop_footer_branch
    %8 = sbr.rel target = $region3
  $region8: #{double_conv_forward.5} parent=0 // loop_exit
    _

// kernel: double_conv_forward.3
$region0: #{double_conv_forward.3}
  #allocation0 [shape = 'u32[]', space=smem, size = 0x4, offset = 0x4, fixed_abs, tag = 'smem constant byte address 0x4 - core index']
  #allocation1 [shape = 'u32[72,128]{1,0:T(1,128)}', space=vmem, size = 0x9000, scoped, tag = 'internal scratch']
  #allocation2 [shape = 'f32[18,18,4]{2,1,0:T(8,128)}', space=vmem, size = 0x36000, scoped, tag = 'scratch operand']
  %s0 = inlined_call_operand.vmem [shape: f32[2,18,18,4], index: 0, kind: input, shape index: {}]
  %s1 = inlined_call_operand.vmem [shape: bf16[36,8], index: 1, kind: input, shape index: {}]
  %s2 = inlined_call_operand.vmem [shape: f32[1,8], index: 2, kind: input, shape index: {}]
  %s3 = inlined_call_operand.vmem [shape: bf16[2,18,18,8], index: 3, kind: output, shape index: {0}]
  %s4 = inlined_call_operand.vmem [shape: f32[2,2,1,8], index: 4, kind: output, shape index: {1}]
  %s5 = inlined_call_operand.vmem [shape: f32[2,2,1,8], index: 5, kind: output, shape index: {2}]
  %6 = xla_tuple %s3, %s4, %s5
  %s7 = sld [smem:[#allocation0]]
  $region65: #{double_conv_forward.3} parent=0
    _
  %s9 = ssub.s32 1, %s7
  %s10 = scalar_select 0, %s9, %s7
  loop: start=0, step=1, limit=6
  $region2: #{double_conv_forward.3} parent=0 // loop_pre_header
    _
  $region3: #{double_conv_forward.3} parent=0 // loop_header
    %s12 = sphi 0, %s16
    %p13 = scmp.ge.s32.totalorder %s12, 6
    %s19 = sphi 0, %s31
    %s20 = sphi 0, %s27
    %s21 = sphi 0, %s19
    %s22 = sphi 0, %s20
    %s23 = sphi 0, %s21
    %s24 = sphi 0, %s22
    %s34 = sphi 0, %s36
    %s37 = sphi 0, %s34
    %s38 = sphi 0, %s37
    %s54 = sphi 0, %s38
    %s58 = sphi 0, %s58
    %s60 = sphi 0, %s58
    %s61 = sphi 0, %s60
    %s75 = sphi 0, %s61
    %s79 = sphi 0, %s79
    %s81 = sphi 0, %s79
    %s82 = sphi 0, %s81
    %s96 = sphi 0, %s82
    %s102 = sphi 0, %s104
    %s105 = sphi 0, %s102
    %s106 = sphi 0, %s105
    %s122 = sphi 0, %s106
    %s130 = sphi 0, %s132
    %s133 = sphi 0, %s130
    %s134 = sphi 0, %s133
    %s150 = sphi 0, %s134
    %s158 = sphi 0, %s160
    %s161 = sphi 0, %s158
    %s162 = sphi 0, %s161
    %s178 = sphi 0, %s162
  $region4: #{double_conv_forward.3} parent=0 // loop_header_branch
    %15 = sbr.rel (%p13) target = $region8
  $region5: #{double_conv_forward.3} parent=0 // loop_body
    %s17 = ssub.s32 %s12, 1
    %s18 = ssub.s32 %s12, 2
    %s25 = sadd.s32 1, %s20
    %p26 = scmp.ge.s32.totalorder %s25, 2
    %s27 = scalar_select %p26, 0, %s25
    %s28 = sadd.s32 1, %s19
    %s29 = scalar_select %p26, %s28, %s19
    %p30 = scmp.ge.s32.totalorder %s29, 2
    %s31 = scalar_select %p30, 0, %s29
    %s32 = ssub.s32 %s19, %s31
    %p33 = scmp.eq.s32.totalorder %s32, 0
    %s35 = sadd.s32 %s34, 1
    %s36 = scalar_select %p33, %s34, %s35
    %p39 = pneg %p33
    %p40 = scmp.eq.s32.totalorder %s12, 3
    %p41 = por %p39, %p40
    %p42 = scmp.ne.s32.totalorder %s34, %s37
    %p43 = scmp.eq.s32.totalorder %s12, 0
    %p44 = por %p42, %p43
    %p45 = scmp.ne.s32.totalorder %s34, %s37
    %p46 = scmp.eq.s32.totalorder %s17, 3
    %p47 = por %p45, %p46
    %p48 = scmp.ne.s32.totalorder %s37, %s38
    %p49 = scmp.eq.s32.totalorder %s17, 0
    %p50 = por %p48, %p49
    %p51 = scmp.ne.s32.totalorder %s37, %s38
    %p52 = scmp.eq.s32.totalorder %s18, 3
    %p53 = por %p51, %p52
    %p55 = scmp.ne.s32.totalorder %s38, %s54
    %p56 = scmp.eq.s32.totalorder %s18, 0
    %p57 = por %p55, %p56
    %s59 = sadd.s32 %s58, 1
    %p62 = scmp.eq.s32.totalorder %s12, 3
    %p63 = scmp.ne.s32.totalorder %s58, %s60
    %p64 = scmp.eq.s32.totalorder %s12, 0
    %p65 = por %p63, %p64
    %p66 = scmp.ne.s32.totalorder %s58, %s60
    %p67 = scmp.eq.s32.totalorder %s17, 3
    %p68 = por %p66, %p67
    %p69 = scmp.ne.s32.totalorder %s60, %s61
    %p70 = scmp.eq.s32.totalorder %s17, 0
    %p71 = por %p69, %p70
    %p72 = scmp.ne.s32.totalorder %s60, %s61
    %p73 = scmp.eq.s32.totalorder %s18, 3
    %p74 = por %p72, %p73
    %p76 = scmp.ne.s32.totalorder %s61, %s75
    %p77 = scmp.eq.s32.totalorder %s18, 0
    %p78 = por %p76, %p77
    %s80 = sadd.s32 %s79, 1
    %p83 = scmp.eq.s32.totalorder %s12, 3
    %p84 = scmp.ne.s32.totalorder %s79, %s81
    %p85 = scmp.eq.s32.totalorder %s12, 0
    %p86 = por %p84, %p85
    %p87 = scmp.ne.s32.totalorder %s79, %s81
    %p88 = scmp.eq.s32.totalorder %s17, 3
    %p89 = por %p87, %p88
    %p90 = scmp.ne.s32.totalorder %s81, %s82
    %p91 = scmp.eq.s32.totalorder %s17, 0
    %p92 = por %p90, %p91
    %p93 = scmp.ne.s32.totalorder %s81, %s82
    %p94 = scmp.eq.s32.totalorder %s18, 3
    %p95 = por %p93, %p94
    %p97 = scmp.ne.s32.totalorder %s82, %s96
    %p98 = scmp.eq.s32.totalorder %s18, 0
    %p99 = por %p97, %p98
    %s100 = ssub.s32 %s19, %s31
    %p101 = scmp.eq.s32.totalorder %s100, 0
    %s103 = sadd.s32 %s102, 1
    %s104 = scalar_select %p101, %s102, %s103
    %p107 = pneg %p101
    %p108 = scmp.eq.s32.totalorder %s12, 3
    %p109 = por %p107, %p108
    %p110 = scmp.ne.s32.totalorder %s102, %s105
    %p111 = scmp.eq.s32.totalorder %s12, 0
    %p112 = por %p110, %p111
    %p113 = scmp.ne.s32.totalorder %s102, %s105
    %p114 = scmp.eq.s32.totalorder %s17, 3
    %p115 = por %p113, %p114
    %p116 = scmp.ne.s32.totalorder %s105, %s106
    %p117 = scmp.eq.s32.totalorder %s17, 0
    %p118 = por %p116, %p117
    %p119 = scmp.ne.s32.totalorder %s105, %s106
    %p120 = scmp.eq.s32.totalorder %s18, 3
    %p121 = por %p119, %p120
    %p123 = scmp.ne.s32.totalorder %s106, %s122
    %p124 = scmp.eq.s32.totalorder %s18, 0
    %p125 = por %p123, %p124
    %s126 = ssub.s32 %s19, %s31
    %s127 = ssub.s32 %s20, %s27
    %s128 = sor.u32 %s126, %s127
    %p129 = scmp.eq.s32.totalorder %s128, 0
    %s131 = sadd.s32 %s130, 1
    %s132 = scalar_select %p129, %s130, %s131
    %p135 = pneg %p129
    %p136 = scmp.eq.s32.totalorder %s12, 3
    %p137 = por %p135, %p136
    %p138 = scmp.ne.s32.totalorder %s130, %s133
    %p139 = scmp.eq.s32.totalorder %s12, 0
    %p140 = por %p138, %p139
    %p141 = scmp.ne.s32.totalorder %s130, %s133
    %p142 = scmp.eq.s32.totalorder %s17, 3
    %p143 = por %p141, %p142
    %p144 = scmp.ne.s32.totalorder %s133, %s134
    %p145 = scmp.eq.s32.totalorder %s17, 0
    %p146 = por %p144, %p145
    %p147 = scmp.ne.s32.totalorder %s133, %s134
    %p148 = scmp.eq.s32.totalorder %s18, 3
    %p149 = por %p147, %p148
    %p151 = scmp.ne.s32.totalorder %s134, %s150
    %p152 = scmp.eq.s32.totalorder %s18, 0
    %p153 = por %p151, %p152
    %s154 = ssub.s32 %s19, %s31
    %s155 = ssub.s32 %s20, %s27
    %s156 = sor.u32 %s154, %s155
    %p157 = scmp.eq.s32.totalorder %s156, 0
    %s159 = sadd.s32 %s158, 1
    %s160 = scalar_select %p157, %s158, %s159
    %p163 = pneg %p157
    %p164 = scmp.eq.s32.totalorder %s12, 3
    %p165 = por %p163, %p164
    %p166 = scmp.ne.s32.totalorder %s158, %s161
    %p167 = scmp.eq.s32.totalorder %s12, 0
    %p168 = por %p166, %p167
    %p169 = scmp.ne.s32.totalorder %s158, %s161
    %p170 = scmp.eq.s32.totalorder %s17, 3
    %p171 = por %p169, %p170
    %p172 = scmp.ne.s32.totalorder %s161, %s162
    %p173 = scmp.eq.s32.totalorder %s17, 0
    %p174 = por %p172, %p173
    %p175 = scmp.ne.s32.totalorder %s161, %s162
    %p176 = scmp.eq.s32.totalorder %s18, 3
    %p177 = por %p175, %p176
    %p179 = scmp.ne.s32.totalorder %s162, %s178
    %p180 = scmp.eq.s32.totalorder %s18, 0
    %p181 = por %p179, %p180
    %p182 = scmp.le.s32.totalorder 1, %s12
    %p183 = scmp.lt.s32.totalorder %s12, 5
    %p184 = pnand %p182, %p183
    %p185 = pneg %p184
    // Predicated region
    $region9: #{double_conv_forward.3} parent=5 // pred_check
      _
    $region10: #{double_conv_forward.3} parent=5 // pred_check_branch
      %187 = sbr.rel (%p184) target = $region12
    $region11: #{double_conv_forward.3} parent=5 // pred_region
      %s188 = ssub.s32 %s12, 1
      // Predicated region
      $region13: #{double_conv_forward.3} parent=11 // pred_check
        %p189 = pneg %p71
      $region14: #{double_conv_forward.3} parent=11 // pred_check_branch
        %191 = sbr.rel (%p189) target = $region16
      $region15: #{double_conv_forward.3} parent=11 // pred_region
        _
      $region16: #{double_conv_forward.3} parent=11 // pred_fallthru
        _
      // Predicated region
      $region17: #{double_conv_forward.3} parent=11 // pred_check
        %p192 = pneg %p92
      $region18: #{double_conv_forward.3} parent=11 // pred_check_branch
        %194 = sbr.rel (%p192) target = $region20
      $region19: #{double_conv_forward.3} parent=11 // pred_region
        _
      $region20: #{double_conv_forward.3} parent=11 // pred_fallthru
        _
    $region12: #{double_conv_forward.3} parent=5 // pred_fallthru
      _
    %p195 = scmp.lt.s32.totalorder %s12, 4
    // Predicated region
    $region21: #{double_conv_forward.3} parent=5 // pred_check
      %p196 = pneg %p195
    $region22: #{double_conv_forward.3} parent=5 // pred_check_branch
      %198 = sbr.rel (%p196) target = $region24
    $region23: #{double_conv_forward.3} parent=5 // pred_region
      // Predicated region
      $region25: #{double_conv_forward.3} parent=23 // pred_check
        %p199 = pneg %p44
      $region26: #{double_conv_forward.3} parent=23 // pred_check_branch
        %201 = sbr.rel (%p199) target = $region28
      $region27: #{double_conv_forward.3} parent=23 // pred_region
        %p202 = scmp.lt.s32.totalorder %s19, 1
        %s203 = scalar_select %p202, %s19, 1
        %s204 = smul.addr %s203, 54
        %s205 = smul.addr %s204, 8
        %s206 = scalar_lea.vmem %s0, %s205
      $region28: #{double_conv_forward.3} parent=23 // pred_fallthru
        _
    $region24: #{double_conv_forward.3} parent=5 // pred_fallthru
      _
    %p207 = scmp.le.s32.totalorder 1, %s12
    %p208 = scmp.lt.s32.totalorder %s12, 5
    %p209 = pnand %p207, %p208
    %p210 = pneg %p209
    // Predicated region
    $region29: #{double_conv_forward.3} parent=5 // pred_check
      _
    $region30: #{double_conv_forward.3} parent=5 // pred_check_branch
      %212 = sbr.rel (%p209) target = $region32
    $region31: #{double_conv_forward.3} parent=5 // pred_region
      %s213 = ssub.s32 %s12, 1
      %p214 = scmp.lt.s32.totalorder %s21, 1
      %s215 = scalar_select %p214, %s21, 1
      %s216 = smul.addr %s215, 54
      %s217 = smul.addr %s216, 8
      %s218 = scalar_lea.vmem %s0, %s217
      %p219 = pneg %p50
      %p220 = pneg %p47
      %p221 = pneg %p71
      %p222 = pneg %p68
      %p223 = pneg %p92
      %p224 = pneg %p89
      %p225 = pneg %p118
      %p226 = pneg %p115
      %p227 = scmp.lt.s32.totalorder %s21, 1
      %s228 = scalar_select %p227, %s21, 1
      %s229 = smul.addr %s228, 54
      %s230 = smul.addr %s229, 4
      %s231 = scalar_lea.vmem %s3, %s230
      %p232 = pneg %p146
      %p233 = pneg %p143
      %p234 = scmp.lt.s32.totalorder %s21, 1
      %s235 = scalar_select %p234, %s21, 1
      %p236 = scmp.lt.s32.totalorder %s22, 1
      %s237 = scalar_select %p236, %s22, 1
      %s238 = smul.addr %s235, 2
      %s239 = sadd.s32 %s237, %s238
      %s240 = scalar_lea.vmem %s4, %s239
      %p241 = pneg %p174
      %p242 = pneg %p171
      %p243 = scmp.lt.s32.totalorder %s21, 1
      %s244 = scalar_select %p243, %s21, 1
      %p245 = scmp.lt.s32.totalorder %s22, 1
      %s246 = scalar_select %p245, %s22, 1
      %s247 = smul.addr %s244, 2
      %s248 = sadd.s32 %s246, %s247
      %s249 = scalar_lea.vmem %s5, %s248
      %p250 = scmp.lt.s32.totalorder %s21, 1
      %s251 = scalar_select %p250, %s21, 1
      %s252 = smul.addr %s251, 54
      %s253 = smul.addr %s252, 8
      %s254 = scalar_lea.vmem %s0, %s253
      %p255 = scmp.lt.s32.totalorder %s21, 1
      %s256 = scalar_select %p255, %s21, 1
      %s257 = smul.addr %s256, 54
      %s258 = smul.addr %s257, 4
      %s259 = scalar_lea.vmem %s3, %s258
      %p260 = scmp.lt.s32.totalorder %s21, 1
      %s261 = scalar_select %p260, %s21, 1
      %p262 = scmp.lt.s32.totalorder %s22, 1
      %s263 = scalar_select %p262, %s22, 1
      %s264 = smul.addr %s261, 2
      %s265 = sadd.s32 %s263, %s264
      %s266 = scalar_lea.vmem %s4, %s265
      %p267 = scmp.lt.s32.totalorder %s21, 1
      %s268 = scalar_select %p267, %s21, 1
      %p269 = scmp.lt.s32.totalorder %s22, 1
      %s270 = scalar_select %p269, %s22, 1
      %s271 = smul.addr %s268, 2
      %s272 = sadd.s32 %s270, %s271
      %s273 = scalar_lea.vmem %s5, %s272
      %p275 = scmp.eq.s32.totalorder %s22, 0
      // Predicated region
      $region33: #{double_conv_forward.3} parent=31 // pred_check
        %p276 = pneg %p275
      $region34: #{double_conv_forward.3} parent=31 // pred_check_branch
        %278 = sbr.rel (%p276) target = $region36
      $region35: #{double_conv_forward.3} parent=31 // pred_region
        %v279 = vld [vmem:[%s254] sm:$0xff]
        %v280 = vld [vmem:[%s254 + $0x8] sm:$0xff]
        %v281 = vld [vmem:[%s254 + $0x10] sm:$0x3]
        %v282 = vld [vmem:[%s254 + $0x18] sm:$0xff]
        %v283 = vld [vmem:[%s254 + $0x20] sm:$0xff]
        %v284 = vld [vmem:[%s254 + $0x28] sm:$0x3]
        %v285 = vld [vmem:[%s254 + $0x30] sm:$0xff]
        %v286 = vld [vmem:[%s254 + $0x38] sm:$0xff]
        %v287 = vld [vmem:[%s254 + $0x40] sm:$0x3]
        %v288 = vld [vmem:[%s254 + $0x48] sm:$0xff]
        %v289 = vld [vmem:[%s254 + $0x50] sm:$0xff]
        %v290 = vld [vmem:[%s254 + $0x58] sm:$0x3]
        %v291 = vld [vmem:[%s254 + $0x60] sm:$0xff]
        %v292 = vld [vmem:[%s254 + $0x68] sm:$0xff]
        %v293 = vld [vmem:[%s254 + $0x70] sm:$0x3]
        %v294 = vld [vmem:[%s254 + $0x78] sm:$0xff]
        %v295 = vld [vmem:[%s254 + $0x80] sm:$0xff]
        %v296 = vld [vmem:[%s254 + $0x88] sm:$0x3]
        %v297 = vld [vmem:[%s254 + $0x90] sm:$0xff]
        %v298 = vld [vmem:[%s254 + $0x98] sm:$0xff]
        %v299 = vld [vmem:[%s254 + $0xa0] sm:$0x3]
        %v300 = vld [vmem:[%s254 + $0xa8] sm:$0xff]
        %v301 = vld [vmem:[%s254 + $0xb0] sm:$0xff]
        %v302 = vld [vmem:[%s254 + $0xb8] sm:$0x3]
        %v303 = vld [vmem:[%s254 + $0xc0] sm:$0xff]
        %v304 = vld [vmem:[%s254 + $0xc8] sm:$0xff]
        %v305 = vld [vmem:[%s254 + $0xd0] sm:$0x3]
        %v306 = vld [vmem:[%s254 + $0xd8] sm:$0xff]
        %v307 = vld [vmem:[%s254 + $0xe0] sm:$0xff]
        %v308 = vld [vmem:[%s254 + $0xe8] sm:$0x3]
        %v309 = vld [vmem:[%s254 + $0xf0] sm:$0xff]
        %v310 = vld [vmem:[%s254 + $0xf8] sm:$0xff]
        %v311 = vld [vmem:[%s254 + $0x100] sm:$0x3]
        %v312 = vld [vmem:[%s254 + $0x108] sm:$0xff]
        %v313 = vld [vmem:[%s254 + $0x110] sm:$0xff]
        %v314 = vld [vmem:[%s254 + $0x118] sm:$0x3]
        %v315 = vld [vmem:[%s254 + $0x120] sm:$0xff]
        %v316 = vld [vmem:[%s254 + $0x128] sm:$0xff]
        %v317 = vld [vmem:[%s254 + $0x130] sm:$0x3]
        %v318 = vld [vmem:[%s254 + $0x138] sm:$0xff]
        %v319 = vld [vmem:[%s254 + $0x140] sm:$0xff]
        %v320 = vld [vmem:[%s254 + $0x148] sm:$0x3]
        %v321 = vld [vmem:[%s254 + $0x150] sm:$0xff]
        %v322 = vld [vmem:[%s254 + $0x158] sm:$0xff]
        %v323 = vld [vmem:[%s254 + $0x160] sm:$0x3]
        %v324 = vld [vmem:[%s254 + $0x168] sm:$0xff]
        %v325 = vld [vmem:[%s254 + $0x170] sm:$0xff]
        %v326 = vld [vmem:[%s254 + $0x178] sm:$0x3]
        %v327 = vld [vmem:[%s254 + $0x180] sm:$0xff]
        %v328 = vld [vmem:[%s254 + $0x188] sm:$0xff]
        %v329 = vld [vmem:[%s254 + $0x190] sm:$0x3]
        %v330 = vld [vmem:[%s254 + $0x198] sm:$0xff]
        %v331 = vld [vmem:[%s254 + $0x1a0] sm:$0xff]
        %v332 = vld [vmem:[%s254 + $0x1a8] sm:$0x3]
        %vm333 = vcmask 31744
        %334 = vst.msk [vmem:[#allocation2] sm:$0xff] %vm333, %v279
        %335 = vst.msk [vmem:[#allocation2 + $0x8] sm:$0xff] %vm333, %v280
        %vm336 = vcmask 25600
        %337 = vst.msk [vmem:[#allocation2 + $0x10] sm:$0x3] %vm336, %v281
        %338 = vst.msk [vmem:[#allocation2 + $0x18] sm:$0xff] %vm333, %v282
        %339 = vst.msk [vmem:[#allocation2 + $0x20] sm:$0xff] %vm333, %v283
        %340 = vst.msk [vmem:[#allocation2 + $0x28] sm:$0x3] %vm336, %v284
        %341 = vst.msk [vmem:[#allocation2 + $0x30] sm:$0xff] %vm333, %v285
        %342 = vst.msk [vmem:[#allocation2 + $0x38] sm:$0xff] %vm333, %v286
        %343 = vst.msk [vmem:[#allocation2 + $0x40] sm:$0x3] %vm336, %v287
        %344 = vst.msk [vmem:[#allocation2 + $0x48] sm:$0xff] %vm333, %v288
        %345 = vst.msk [vmem:[#allocation2 + $0x50] sm:$0xff] %vm333, %v289
        %346 = vst.msk [vmem:[#allocation2 + $0x58] sm:$0x3] %vm336, %v290
        %347 = vst.msk [vmem:[#allocation2 + $0x60] sm:$0xff] %vm333, %v291
        %348 = vst.msk [vmem:[#allocation2 + $0x68] sm:$0xff] %vm333, %v292
        %349 = vst.msk [vmem:[#allocation2 + $0x70] sm:$0x3] %vm336, %v293
        %350 = vst.msk [vmem:[#allocation2 + $0x78] sm:$0xff] %vm333, %v294
        %351 = vst.msk [vmem:[#allocation2 + $0x80] sm:$0xff] %vm333, %v295
        %352 = vst.msk [vmem:[#allocation2 + $0x88] sm:$0x3] %vm336, %v296
        %353 = vst.msk [vmem:[#allocation2 + $0x90] sm:$0xff] %vm333, %v297
        %354 = vst.msk [vmem:[#allocation2 + $0x98] sm:$0xff] %vm333, %v298
        %355 = vst.msk [vmem:[#allocation2 + $0xa0] sm:$0x3] %vm336, %v299
        %356 = vst.msk [vmem:[#allocation2 + $0xa8] sm:$0xff] %vm333, %v300
        %357 = vst.msk [vmem:[#allocation2 + $0xb0] sm:$0xff] %vm333, %v301
        %358 = vst.msk [vmem:[#allocation2 + $0xb8] sm:$0x3] %vm336, %v302
        %359 = vst.msk [vmem:[#allocation2 + $0xc0] sm:$0xff] %vm333, %v303
        %360 = vst.msk [vmem:[#allocation2 + $0xc8] sm:$0xff] %vm333, %v304
        %361 = vst.msk [vmem:[#allocation2 + $0xd0] sm:$0x3] %vm336, %v305
        %362 = vst.msk [vmem:[#allocation2 + $0xd8] sm:$0xff] %vm333, %v306
        %363 = vst.msk [vmem:[#allocation2 + $0xe0] sm:$0xff] %vm333, %v307
        %364 = vst.msk [vmem:[#allocation2 + $0xe8] sm:$0x3] %vm336, %v308
        %365 = vst.msk [vmem:[#allocation2 + $0xf0] sm:$0xff] %vm333, %v309
        %366 = vst.msk [vmem:[#allocation2 + $0xf8] sm:$0xff] %vm333, %v310
        %367 = vst.msk [vmem:[#allocation2 + $0x100] sm:$0x3] %vm336, %v311
        %368 = vst.msk [vmem:[#allocation2 + $0x108] sm:$0xff] %vm333, %v312
        %369 = vst.msk [vmem:[#allocation2 + $0x110] sm:$0xff] %vm333, %v313
        %370 = vst.msk [vmem:[#allocation2 + $0x118] sm:$0x3] %vm336, %v314
        %371 = vst.msk [vmem:[#allocation2 + $0x120] sm:$0xff] %vm333, %v315
        %372 = vst.msk [vmem:[#allocation2 + $0x128] sm:$0xff] %vm333, %v316
        %373 = vst.msk [vmem:[#allocation2 + $0x130] sm:$0x3] %vm336, %v317
        %374 = vst.msk [vmem:[#allocation2 + $0x138] sm:$0xff] %vm333, %v318
        %375 = vst.msk [vmem:[#allocation2 + $0x140] sm:$0xff] %vm333, %v319
        %376 = vst.msk [vmem:[#allocation2 + $0x148] sm:$0x3] %vm336, %v320
        %377 = vst.msk [vmem:[#allocation2 + $0x150] sm:$0xff] %vm333, %v321
        %378 = vst.msk [vmem:[#allocation2 + $0x158] sm:$0xff] %vm333, %v322
        %379 = vst.msk [vmem:[#allocation2 + $0x160] sm:$0x3] %vm336, %v323
        %380 = vst.msk [vmem:[#allocation2 + $0x168] sm:$0xff] %vm333, %v324
        %381 = vst.msk [vmem:[#allocation2 + $0x170] sm:$0xff] %vm333, %v325
        %382 = vst.msk [vmem:[#allocation2 + $0x178] sm:$0x3] %vm336, %v326
        %383 = vst.msk [vmem:[#allocation2 + $0x180] sm:$0xff] %vm333, %v327
        %384 = vst.msk [vmem:[#allocation2 + $0x188] sm:$0xff] %vm333, %v328
        %385 = vst.msk [vmem:[#allocation2 + $0x190] sm:$0x3] %vm336, %v329
        %386 = vst.msk [vmem:[#allocation2 + $0x198] sm:$0xff] %vm333, %v330
        %387 = vst.msk [vmem:[#allocation2 + $0x1a0] sm:$0xff] %vm333, %v331
        %388 = vst.msk [vmem:[#allocation2 + $0x1a8] sm:$0x3] %vm336, %v332
        %vm389 = vcmask 60416
        %390 = vst.msk [vmem:[%s259] sm:$0xf] %vm389, 0
        %391 = vst.msk [vmem:[%s259 + $0x4] sm:$0xf] %vm389, 0
        %vm392 = vcmask 57344
        %393 = vst.msk [vmem:[%s259 + $0x8] sm:$0x1] %vm392, 0
        %394 = vst.msk [vmem:[%s259 + $0xc] sm:$0xf] %vm389, 0
        %395 = vst.msk [vmem:[%s259 + $0x10] sm:$0xf] %vm389, 0
        %396 = vst.msk [vmem:[%s259 + $0x14] sm:$0x1] %vm392, 0
        %397 = vst.msk [vmem:[%s259 + $0x18] sm:$0xf] %vm389, 0
        %398 = vst.msk [vmem:[%s259 + $0x1c] sm:$0xf] %vm389, 0
        %399 = vst.msk [vmem:[%s259 + $0x20] sm:$0x1] %vm392, 0
        %400 = vst.msk [vmem:[%s259 + $0x24] sm:$0xf] %vm389, 0
        %401 = vst.msk [vmem:[%s259 + $0x28] sm:$0xf] %vm389, 0
        %402 = vst.msk [vmem:[%s259 + $0x2c] sm:$0x1] %vm392, 0
        %403 = vst.msk [vmem:[%s259 + $0x30] sm:$0xf] %vm389, 0
        %404 = vst.msk [vmem:[%s259 + $0x34] sm:$0xf] %vm389, 0
        %405 = vst.msk [vmem:[%s259 + $0x38] sm:$0x1] %vm392, 0
        %406 = vst.msk [vmem:[%s259 + $0x3c] sm:$0xf] %vm389, 0
        %407 = vst.msk [vmem:[%s259 + $0x40] sm:$0xf] %vm389, 0
        %408 = vst.msk [vmem:[%s259 + $0x44] sm:$0x1] %vm392, 0
        %409 = vst.msk [vmem:[%s259 + $0x48] sm:$0xf] %vm389, 0
        %410 = vst.msk [vmem:[%s259 + $0x4c] sm:$0xf] %vm389, 0
        %411 = vst.msk [vmem:[%s259 + $0x50] sm:$0x1] %vm392, 0
        %412 = vst.msk [vmem:[%s259 + $0x54] sm:$0xf] %vm389, 0
        %413 = vst.msk [vmem:[%s259 + $0x58] sm:$0xf] %vm389, 0
        %414 = vst.msk [vmem:[%s259 + $0x5c] sm:$0x1] %vm392, 0
        %415 = vst.msk [vmem:[%s259 + $0x60] sm:$0xf] %vm389, 0
        %416 = vst.msk [vmem:[%s259 + $0x64] sm:$0xf] %vm389, 0
        %417 = vst.msk [vmem:[%s259 + $0x68] sm:$0x1] %vm392, 0
        %418 = vst.msk [vmem:[%s259 + $0x6c] sm:$0xf] %vm389, 0
        %419 = vst.msk [vmem:[%s259 + $0x70] sm:$0xf] %vm389, 0
        %420 = vst.msk [vmem:[%s259 + $0x74] sm:$0x1] %vm392, 0
        %421 = vst.msk [vmem:[%s259 + $0x78] sm:$0xf] %vm389, 0
        %422 = vst.msk [vmem:[%s259 + $0x7c] sm:$0xf] %vm389, 0
        %423 = vst.msk [vmem:[%s259 + $0x80] sm:$0x1] %vm392, 0
        %424 = vst.msk [vmem:[%s259 + $0x84] sm:$0xf] %vm389, 0
        %425 = vst.msk [vmem:[%s259 + $0x88] sm:$0xf] %vm389, 0
        %426 = vst.msk [vmem:[%s259 + $0x8c] sm:$0x1] %vm392, 0
        %427 = vst.msk [vmem:[%s259 + $0x90] sm:$0xf] %vm389, 0
        %428 = vst.msk [vmem:[%s259 + $0x94] sm:$0xf] %vm389, 0
        %429 = vst.msk [vmem:[%s259 + $0x98] sm:$0x1] %vm392, 0
        %430 = vst.msk [vmem:[%s259 + $0x9c] sm:$0xf] %vm389, 0
        %431 = vst.msk [vmem:[%s259 + $0xa0] sm:$0xf] %vm389, 0
        %432 = vst.msk [vmem:[%s259 + $0xa4] sm:$0x1] %vm392, 0
        %433 = vst.msk [vmem:[%s259 + $0xa8] sm:$0xf] %vm389, 0
        %434 = vst.msk [vmem:[%s259 + $0xac] sm:$0xf] %vm389, 0
        %435 = vst.msk [vmem:[%s259 + $0xb0] sm:$0x1] %vm392, 0
        %436 = vst.msk [vmem:[%s259 + $0xb4] sm:$0xf] %vm389, 0
        %437 = vst.msk [vmem:[%s259 + $0xb8] sm:$0xf] %vm389, 0
        %438 = vst.msk [vmem:[%s259 + $0xbc] sm:$0x1] %vm392, 0
        %439 = vst.msk [vmem:[%s259 + $0xc0] sm:$0xf] %vm389, 0
        %440 = vst.msk [vmem:[%s259 + $0xc4] sm:$0xf] %vm389, 0
        %441 = vst.msk [vmem:[%s259 + $0xc8] sm:$0x1] %vm392, 0
        %442 = vst.msk [vmem:[%s259 + $0xcc] sm:$0xf] %vm389, 0
        %443 = vst.msk [vmem:[%s259 + $0xd0] sm:$0xf] %vm389, 0
        %444 = vst.msk [vmem:[%s259 + $0xd4] sm:$0x1] %vm392, 0
      $region36: #{double_conv_forward.3} parent=31 // pred_fallthru
        _
      %s445 = smul.u32 %s22, 8
      %s446 = smul.u32 %s445, 24
      %s447 = scalar_lea.vmem [#allocation2], %s446
      %v448 = vld [vmem:[%s447] sm:$0xff]
      %v449 = vld [vmem:[%s447 + $0x8] sm:$0xff]
      %v450 = vld [vmem:[%s447 + $0x18] sm:$0xff]
      %v451 = vld [vmem:[%s447 + $0x20] sm:$0xff]
      %v452 = vld [vmem:[%s447 + $0x30] sm:$0xff]
      %v453 = vld [vmem:[%s447 + $0x38] sm:$0xff]
      %v454 = vld [vmem:[%s447 + $0x48] sm:$0xff]
      %v455 = vld [vmem:[%s447 + $0x50] sm:$0xff]
      %v456 = vld [vmem:[%s447 + $0x60] sm:$0xff]
      %v457 = vld [vmem:[%s447 + $0x68] sm:$0xff]
      %v458 = vld [vmem:[%s447 + $0x78] sm:$0xff]
      %v459 = vld [vmem:[%s447 + $0x80] sm:$0xff]
      %v460 = vld [vmem:[%s447 + $0x90] sm:$0xff]
      %v461 = vld [vmem:[%s447 + $0x98] sm:$0xff]
      %v462 = vld [vmem:[%s447 + $0xa8] sm:$0xff]
      %v463 = vld [vmem:[%s447 + $0xb0] sm:$0xff]
      %v464 = vld [vmem:[%s447 + $0x1] sm:$0xff]
      %v465 = vld [vmem:[%s447 + $0x9] sm:$0xff]
      %v466 = vld [vmem:[%s447 + $0x19] sm:$0xff]
      %v467 = vld [vmem:[%s447 + $0x21] sm:$0xff]
      %v468 = vld [vmem:[%s447 + $0x31] sm:$0xff]
      %v469 = vld [vmem:[%s447 + $0x39] sm:$0xff]
      %v470 = vld [vmem:[%s447 + $0x49] sm:$0xff]
      %v471 = vld [vmem:[%s447 + $0x51] sm:$0xff]
      %v472 = vld [vmem:[%s447 + $0x61] sm:$0xff]
      %v473 = vld [vmem:[%s447 + $0x69] sm:$0xff]
      %v474 = vld [vmem:[%s447 + $0x79] sm:$0xff]
      %v475 = vld [vmem:[%s447 + $0x81] sm:$0xff]
      %v476 = vld [vmem:[%s447 + $0x91] sm:$0xff]
      %v477 = vld [vmem:[%s447 + $0x99] sm:$0xff]
      %v478 = vld [vmem:[%s447 + $0xa9] sm:$0xff]
      %v479 = vld [vmem:[%s447 + $0xb1] sm:$0xff]
      %v480 = vld [vmem:[%s447 + $0x2] sm:$0xff]
      %v481 = vld [vmem:[%s447 + $0xa] sm:$0xff]
      %v482 = vld [vmem:[%s447 + $0x1a] sm:$0xff]
      %v483 = vld [vmem:[%s447 + $0x22] sm:$0xff]
      %v484 = vld [vmem:[%s447 + $0x32] sm:$0xff]
      %v485 = vld [vmem:[%s447 + $0x3a] sm:$0xff]
      %v486 = vld [vmem:[%s447 + $0x4a] sm:$0xff]
      %v487 = vld [vmem:[%s447 + $0x52] sm:$0xff]
      %v488 = vld [vmem:[%s447 + $0x62] sm:$0xff]
      %v489 = vld [vmem:[%s447 + $0x6a] sm:$0xff]
      %v490 = vld [vmem:[%s447 + $0x7a] sm:$0xff]
      %v491 = vld [vmem:[%s447 + $0x82] sm:$0xff]
      %v492 = vld [vmem:[%s447 + $0x92] sm:$0xff]
      %v493 = vld [vmem:[%s447 + $0x9a] sm:$0xff]
      %v494 = vld [vmem:[%s447 + $0xaa] sm:$0xff]
      %v495 = vld [vmem:[%s447 + $0xb2] sm:$0xff]
      %s496 = sadd.s32 %s445, 1
      %s497 = smul.u32 %s496, 24
      %s498 = scalar_lea.vmem [#allocation2], %s497
      %v499 = vld [vmem:[%s498] sm:$0xff]
      %v500 = vld [vmem:[%s498 + $0x8] sm:$0xff]
      %v501 = vld [vmem:[%s498 + $0x18] sm:$0xff]
      %v502 = vld [vmem:[%s498 + $0x20] sm:$0xff]
      %v503 = vld [vmem:[%s498 + $0x30] sm:$0xff]
      %v504 = vld [vmem:[%s498 + $0x38] sm:$0xff]
      %v505 = vld [vmem:[%s498 + $0x48] sm:$0xff]
      %v506 = vld [vmem:[%s498 + $0x50] sm:$0xff]
      %v507 = vld [vmem:[%s498 + $0x60] sm:$0xff]
      %v508 = vld [vmem:[%s498 + $0x68] sm:$0xff]
      %v509 = vld [vmem:[%s498 + $0x78] sm:$0xff]
      %v510 = vld [vmem:[%s498 + $0x80] sm:$0xff]
      %v511 = vld [vmem:[%s498 + $0x90] sm:$0xff]
      %v512 = vld [vmem:[%s498 + $0x98] sm:$0xff]
      %v513 = vld [vmem:[%s498 + $0xa8] sm:$0xff]
      %v514 = vld [vmem:[%s498 + $0xb0] sm:$0xff]
      %v515 = vld [vmem:[%s498 + $0x1] sm:$0xff]
      %v516 = vld [vmem:[%s498 + $0x9] sm:$0xff]
      %v517 = vld [vmem:[%s498 + $0x19] sm:$0xff]
      %v518 = vld [vmem:[%s498 + $0x21] sm:$0xff]
      %v519 = vld [vmem:[%s498 + $0x31] sm:$0xff]
      %v520 = vld [vmem:[%s498 + $0x39] sm:$0xff]
      %v521 = vld [vmem:[%s498 + $0x49] sm:$0xff]
      %v522 = vld [vmem:[%s498 + $0x51] sm:$0xff]
      %v523 = vld [vmem:[%s498 + $0x61] sm:$0xff]
      %v524 = vld [vmem:[%s498 + $0x69] sm:$0xff]
      %v525 = vld [vmem:[%s498 + $0x79] sm:$0xff]
      %v526 = vld [vmem:[%s498 + $0x81] sm:$0xff]
      %v527 = vld [vmem:[%s498 + $0x91] sm:$0xff]
      %v528 = vld [vmem:[%s498 + $0x99] sm:$0xff]
      %v529 = vld [vmem:[%s498 + $0xa9] sm:$0xff]
      %v530 = vld [vmem:[%s498 + $0xb1] sm:$0xff]
      %v531 = vld [vmem:[%s498 + $0x2] sm:$0xff]
      %v532 = vld [vmem:[%s498 + $0xa] sm:$0xff]
      %v533 = vld [vmem:[%s498 + $0x1a] sm:$0xff]
      %v534 = vld [vmem:[%s498 + $0x22] sm:$0xff]
      %v535 = vld [vmem:[%s498 + $0x32] sm:$0xff]
      %v536 = vld [vmem:[%s498 + $0x3a] sm:$0xff]
      %v537 = vld [vmem:[%s498 + $0x4a] sm:$0xff]
      %v538 = vld [vmem:[%s498 + $0x52] sm:$0xff]
      %v539 = vld [vmem:[%s498 + $0x62] sm:$0xff]
      %v540 = vld [vmem:[%s498 + $0x6a] sm:$0xff]
      %v541 = vld [vmem:[%s498 + $0x7a] sm:$0xff]
      %v542 = vld [vmem:[%s498 + $0x82] sm:$0xff]
      %v543 = vld [vmem:[%s498 + $0x92] sm:$0xff]
      %v544 = vld [vmem:[%s498 + $0x9a] sm:$0xff]
      %v545 = vld [vmem:[%s498 + $0xaa] sm:$0xff]
      %v546 = vld [vmem:[%s498 + $0xb2] sm:$0xff]
      %s547 = sadd.s32 %s445, 2
      %s548 = smul.u32 %s547, 24
      %s549 = scalar_lea.vmem [#allocation2], %s548
      %v550 = vld [vmem:[%s549] sm:$0xff]
      %v551 = vld [vmem:[%s549 + $0x8] sm:$0xff]
      %v552 = vld [vmem:[%s549 + $0x18] sm:$0xff]
      %v553 = vld [vmem:[%s549 + $0x20] sm:$0xff]
      %v554 = vld [vmem:[%s549 + $0x30] sm:$0xff]
      %v555 = vld [vmem:[%s549 + $0x38] sm:$0xff]
      %v556 = vld [vmem:[%s549 + $0x48] sm:$0xff]
      %v557 = vld [vmem:[%s549 + $0x50] sm:$0xff]
      %v558 = vld [vmem:[%s549 + $0x60] sm:$0xff]
      %v559 = vld [vmem:[%s549 + $0x68] sm:$0xff]
      %v560 = vld [vmem:[%s549 + $0x78] sm:$0xff]
      %v561 = vld [vmem:[%s549 + $0x80] sm:$0xff]
      %v562 = vld [vmem:[%s549 + $0x90] sm:$0xff]
      %v563 = vld [vmem:[%s549 + $0x98] sm:$0xff]
      %v564 = vld [vmem:[%s549 + $0xa8] sm:$0xff]
      %v565 = vld [vmem:[%s549 + $0xb0] sm:$0xff]
      %v566 = vld [vmem:[%s549 + $0x1] sm:$0xff]
      %v567 = vld [vmem:[%s549 + $0x9] sm:$0xff]
      %v568 = vld [vmem:[%s549 + $0x19] sm:$0xff]
      %v569 = vld [vmem:[%s549 + $0x21] sm:$0xff]
      %v570 = vld [vmem:[%s549 + $0x31] sm:$0xff]
      %v571 = vld [vmem:[%s549 + $0x39] sm:$0xff]
      %v572 = vld [vmem:[%s549 + $0x49] sm:$0xff]
      %v573 = vld [vmem:[%s549 + $0x51] sm:$0xff]
      %v574 = vld [vmem:[%s549 + $0x61] sm:$0xff]
      %v575 = vld [vmem:[%s549 + $0x69] sm:$0xff]
      %v576 = vld [vmem:[%s549 + $0x79] sm:$0xff]
      %v577 = vld [vmem:[%s549 + $0x81] sm:$0xff]
      %v578 = vld [vmem:[%s549 + $0x91] sm:$0xff]
      %v579 = vld [vmem:[%s549 + $0x99] sm:$0xff]
      %v580 = vld [vmem:[%s549 + $0xa9] sm:$0xff]
      %v581 = vld [vmem:[%s549 + $0xb1] sm:$0xff]
      %v582 = vld [vmem:[%s549 + $0x2] sm:$0xff]
      %v583 = vld [vmem:[%s549 + $0xa] sm:$0xff]
      %v584 = vld [vmem:[%s549 + $0x1a] sm:$0xff]
      %v585 = vld [vmem:[%s549 + $0x22] sm:$0xff]
      %v586 = vld [vmem:[%s549 + $0x32] sm:$0xff]
      %v587 = vld [vmem:[%s549 + $0x3a] sm:$0xff]
      %v588 = vld [vmem:[%s549 + $0x4a] sm:$0xff]
      %v589 = vld [vmem:[%s549 + $0x52] sm:$0xff]
      %v590 = vld [vmem:[%s549 + $0x62] sm:$0xff]
      %v591 = vld [vmem:[%s549 + $0x6a] sm:$0xff]
      %v592 = vld [vmem:[%s549 + $0x7a] sm:$0xff]
      %v593 = vld [vmem:[%s549 + $0x82] sm:$0xff]
      %v594 = vld [vmem:[%s549 + $0x92] sm:$0xff]
      %v595 = vld [vmem:[%s549 + $0x9a] sm:$0xff]
      %v596 = vld [vmem:[%s549 + $0xaa] sm:$0xff]
      %v597 = vld [vmem:[%s549 + $0xb2] sm:$0xff]
      %614 = vrot.lane.b32.xlu0 %v464, 4
      %v615 = vpop.permute.xlu0 %614
      %616 = vrot.lane.b32.xlu0 %v465, 4
      %v617 = vpop.permute.xlu0 %616
      %618 = vrot.lane.b32.xlu0 %v466, 4
      %v619 = vpop.permute.xlu0 %618
      %620 = vrot.lane.b32.xlu0 %v467, 4
      %v621 = vpop.permute.xlu0 %620
      %622 = vrot.lane.b32.xlu0 %v468, 4
      %v623 = vpop.permute.xlu0 %622
      %624 = vrot.lane.b32.xlu0 %v469, 4
      %v625 = vpop.permute.xlu0 %624
      %626 = vrot.lane.b32.xlu0 %v470, 4
      %v627 = vpop.permute.xlu0 %626
      %628 = vrot.lane.b32.xlu0 %v471, 4
      %v629 = vpop.permute.xlu0 %628
      %630 = vrot.lane.b32.xlu0 %v472, 4
      %v631 = vpop.permute.xlu0 %630
      %632 = vrot.lane.b32.xlu0 %v473, 4
      %v633 = vpop.permute.xlu0 %632
      %634 = vrot.lane.b32.xlu0 %v474, 4
      %v635 = vpop.permute.xlu0 %634
      %636 = vrot.lane.b32.xlu0 %v475, 4
      %v637 = vpop.permute.xlu0 %636
      %638 = vrot.lane.b32.xlu0 %v476, 4
      %v639 = vpop.permute.xlu0 %638
      %640 = vrot.lane.b32.xlu0 %v477, 4
      %v641 = vpop.permute.xlu0 %640
      %642 = vrot.lane.b32.xlu0 %v478, 4
      %v643 = vpop.permute.xlu0 %642
      %644 = vrot.lane.b32.xlu0 %v479, 4
      %v645 = vpop.permute.xlu0 %644
      %678 = vrot.lane.b32.xlu0 %v480, 8
      %v679 = vpop.permute.xlu0 %678
      %680 = vrot.lane.b32.xlu0 %v481, 8
      %v681 = vpop.permute.xlu0 %680
      %682 = vrot.lane.b32.xlu0 %v482, 8
      %v683 = vpop.permute.xlu0 %682
      %684 = vrot.lane.b32.xlu0 %v483, 8
      %v685 = vpop.permute.xlu0 %684
      %686 = vrot.lane.b32.xlu0 %v484, 8
      %v687 = vpop.permute.xlu0 %686
      %688 = vrot.lane.b32.xlu0 %v485, 8
      %v689 = vpop.permute.xlu0 %688
      %690 = vrot.lane.b32.xlu0 %v486, 8
      %v691 = vpop.permute.xlu0 %690
      %692 = vrot.lane.b32.xlu0 %v487, 8
      %v693 = vpop.permute.xlu0 %692
      %694 = vrot.lane.b32.xlu0 %v488, 8
      %v695 = vpop.permute.xlu0 %694
      %696 = vrot.lane.b32.xlu0 %v489, 8
      %v697 = vpop.permute.xlu0 %696
      %698 = vrot.lane.b32.xlu0 %v490, 8
      %v699 = vpop.permute.xlu0 %698
      %700 = vrot.lane.b32.xlu0 %v491, 8
      %v701 = vpop.permute.xlu0 %700
      %702 = vrot.lane.b32.xlu0 %v492, 8
      %v703 = vpop.permute.xlu0 %702
      %704 = vrot.lane.b32.xlu0 %v493, 8
      %v705 = vpop.permute.xlu0 %704
      %706 = vrot.lane.b32.xlu0 %v494, 8
      %v707 = vpop.permute.xlu0 %706
      %708 = vrot.lane.b32.xlu0 %v495, 8
      %v709 = vpop.permute.xlu0 %708
      %742 = vrot.lane.b32.xlu0 %v499, 12
      %v743 = vpop.permute.xlu0 %742
      %744 = vrot.lane.b32.xlu0 %v500, 12
      %v745 = vpop.permute.xlu0 %744
      %746 = vrot.lane.b32.xlu0 %v501, 12
      %v747 = vpop.permute.xlu0 %746
      %748 = vrot.lane.b32.xlu0 %v502, 12
      %v749 = vpop.permute.xlu0 %748
      %750 = vrot.lane.b32.xlu0 %v503, 12
      %v751 = vpop.permute.xlu0 %750
      %752 = vrot.lane.b32.xlu0 %v504, 12
      %v753 = vpop.permute.xlu0 %752
      %754 = vrot.lane.b32.xlu0 %v505, 12
      %v755 = vpop.permute.xlu0 %754
      %756 = vrot.lane.b32.xlu0 %v506, 12
      %v757 = vpop.permute.xlu0 %756
      %758 = vrot.lane.b32.xlu0 %v507, 12
      %v759 = vpop.permute.xlu0 %758
      %760 = vrot.lane.b32.xlu0 %v508, 12
      %v761 = vpop.permute.xlu0 %760
      %762 = vrot.lane.b32.xlu0 %v509, 12
      %v763 = vpop.permute.xlu0 %762
      %764 = vrot.lane.b32.xlu0 %v510, 12
      %v765 = vpop.permute.xlu0 %764
      %766 = vrot.lane.b32.xlu0 %v511, 12
      %v767 = vpop.permute.xlu0 %766
      %768 = vrot.lane.b32.xlu0 %v512, 12
      %v769 = vpop.permute.xlu0 %768
      %770 = vrot.lane.b32.xlu0 %v513, 12
      %v771 = vpop.permute.xlu0 %770
      %772 = vrot.lane.b32.xlu0 %v514, 12
      %v773 = vpop.permute.xlu0 %772
      %806 = vrot.lane.b32.xlu0 %v515, 16
      %v807 = vpop.permute.xlu0 %806
      %808 = vrot.lane.b32.xlu0 %v516, 16
      %v809 = vpop.permute.xlu0 %808
      %810 = vrot.lane.b32.xlu0 %v517, 16
      %v811 = vpop.permute.xlu0 %810
      %812 = vrot.lane.b32.xlu0 %v518, 16
      %v813 = vpop.permute.xlu0 %812
      %814 = vrot.lane.b32.xlu0 %v519, 16
      %v815 = vpop.permute.xlu0 %814
      %816 = vrot.lane.b32.xlu0 %v520, 16
      %v817 = vpop.permute.xlu0 %816
      %818 = vrot.lane.b32.xlu0 %v521, 16
      %v819 = vpop.permute.xlu0 %818
      %820 = vrot.lane.b32.xlu0 %v522, 16
      %v821 = vpop.permute.xlu0 %820
      %822 = vrot.lane.b32.xlu0 %v523, 16
      %v823 = vpop.permute.xlu0 %822
      %824 = vrot.lane.b32.xlu0 %v524, 16
      %v825 = vpop.permute.xlu0 %824
      %826 = vrot.lane.b32.xlu0 %v525, 16
      %v827 = vpop.permute.xlu0 %826
      %828 = vrot.lane.b32.xlu0 %v526, 16
      %v829 = vpop.permute.xlu0 %828
      %830 = vrot.lane.b32.xlu0 %v527, 16
      %v831 = vpop.permute.xlu0 %830
      %832 = vrot.lane.b32.xlu0 %v528, 16
      %v833 = vpop.permute.xlu0 %832
      %834 = vrot.lane.b32.xlu0 %v529, 16
      %v835 = vpop.permute.xlu0 %834
      %836 = vrot.lane.b32.xlu0 %v530, 16
      %v837 = vpop.permute.xlu0 %836
      %870 = vrot.lane.b32.xlu0 %v531, 20
      %v871 = vpop.permute.xlu0 %870
      %872 = vrot.lane.b32.xlu0 %v532, 20
      %v873 = vpop.permute.xlu0 %872
      %874 = vrot.lane.b32.xlu0 %v533, 20
      %v875 = vpop.permute.xlu0 %874
      %876 = vrot.lane.b32.xlu0 %v534, 20
      %v877 = vpop.permute.xlu0 %876
      %878 = vrot.lane.b32.xlu0 %v535, 20
      %v879 = vpop.permute.xlu0 %878
      %880 = vrot.lane.b32.xlu0 %v536, 20
      %v881 = vpop.permute.xlu0 %880
      %882 = vrot.lane.b32.xlu0 %v537, 20
      %v883 = vpop.permute.xlu0 %882
      %884 = vrot.lane.b32.xlu0 %v538, 20
      %v885 = vpop.permute.xlu0 %884
      %886 = vrot.lane.b32.xlu0 %v539, 20
      %v887 = vpop.permute.xlu0 %886
      %888 = vrot.lane.b32.xlu0 %v540, 20
      %v889 = vpop.permute.xlu0 %888
      %890 = vrot.lane.b32.xlu0 %v541, 20
      %v891 = vpop.permute.xlu0 %890
      %892 = vrot.lane.b32.xlu0 %v542, 20
      %v893 = vpop.permute.xlu0 %892
      %894 = vrot.lane.b32.xlu0 %v543, 20
      %v895 = vpop.permute.xlu0 %894
      %896 = vrot.lane.b32.xlu0 %v544, 20
      %v897 = vpop.permute.xlu0 %896
      %898 = vrot.lane.b32.xlu0 %v545, 20
      %v899 = vpop.permute.xlu0 %898
      %900 = vrot.lane.b32.xlu0 %v546, 20
      %v901 = vpop.permute.xlu0 %900
      %934 = vrot.lane.b32.xlu0 %v550, 24
      %v935 = vpop.permute.xlu0 %934
      %936 = vrot.lane.b32.xlu0 %v551, 24
      %v937 = vpop.permute.xlu0 %936
      %938 = vrot.lane.b32.xlu0 %v552, 24
      %v939 = vpop.permute.xlu0 %938
      %940 = vrot.lane.b32.xlu0 %v553, 24
      %v941 = vpop.permute.xlu0 %940
      %942 = vrot.lane.b32.xlu0 %v554, 24
      %v943 = vpop.permute.xlu0 %942
      %944 = vrot.lane.b32.xlu0 %v555, 24
      %v945 = vpop.permute.xlu0 %944
      %946 = vrot.lane.b32.xlu0 %v556, 24
      %v947 = vpop.permute.xlu0 %946
      %948 = vrot.lane.b32.xlu0 %v557, 24
      %v949 = vpop.permute.xlu0 %948
      %950 = vrot.lane.b32.xlu0 %v558, 24
      %v951 = vpop.permute.xlu0 %950
      %952 = vrot.lane.b32.xlu0 %v559, 24
      %v953 = vpop.permute.xlu0 %952
      %954 = vrot.lane.b32.xlu0 %v560, 24
      %v955 = vpop.permute.xlu0 %954
      %956 = vrot.lane.b32.xlu0 %v561, 24
      %v957 = vpop.permute.xlu0 %956
      %958 = vrot.lane.b32.xlu0 %v562, 24
      %v959 = vpop.permute.xlu0 %958
      %960 = vrot.lane.b32.xlu0 %v563, 24
      %v961 = vpop.permute.xlu0 %960
      %962 = vrot.lane.b32.xlu0 %v564, 24
      %v963 = vpop.permute.xlu0 %962
      %964 = vrot.lane.b32.xlu0 %v565, 24
      %v965 = vpop.permute.xlu0 %964
      %998 = vrot.lane.b32.xlu0 %v566, 28
      %v999 = vpop.permute.xlu0 %998
      %1000 = vrot.lane.b32.xlu0 %v567, 28
      %v1001 = vpop.permute.xlu0 %1000
      %1002 = vrot.lane.b32.xlu0 %v568, 28
      %v1003 = vpop.permute.xlu0 %1002
      %1004 = vrot.lane.b32.xlu0 %v569, 28
      %v1005 = vpop.permute.xlu0 %1004
      %1006 = vrot.lane.b32.xlu0 %v570, 28
      %v1007 = vpop.permute.xlu0 %1006
      %1008 = vrot.lane.b32.xlu0 %v571, 28
      %v1009 = vpop.permute.xlu0 %1008
      %1010 = vrot.lane.b32.xlu0 %v572, 28
      %v1011 = vpop.permute.xlu0 %1010
      %1012 = vrot.lane.b32.xlu0 %v573, 28
      %v1013 = vpop.permute.xlu0 %1012
      %1014 = vrot.lane.b32.xlu0 %v574, 28
      %v1015 = vpop.permute.xlu0 %1014
      %1016 = vrot.lane.b32.xlu0 %v575, 28
      %v1017 = vpop.permute.xlu0 %1016
      %1018 = vrot.lane.b32.xlu0 %v576, 28
      %v1019 = vpop.permute.xlu0 %1018
      %1020 = vrot.lane.b32.xlu0 %v577, 28
      %v1021 = vpop.permute.xlu0 %1020
      %1022 = vrot.lane.b32.xlu0 %v578, 28
      %v1023 = vpop.permute.xlu0 %1022
      %1024 = vrot.lane.b32.xlu0 %v579, 28
      %v1025 = vpop.permute.xlu0 %1024
      %1026 = vrot.lane.b32.xlu0 %v580, 28
      %v1027 = vpop.permute.xlu0 %1026
      %1028 = vrot.lane.b32.xlu0 %v581, 28
      %v1029 = vpop.permute.xlu0 %1028
      %1062 = vrot.lane.b32.xlu0 %v582, 32
      %v1063 = vpop.permute.xlu0 %1062
      %1064 = vrot.lane.b32.xlu0 %v583, 32
      %v1065 = vpop.permute.xlu0 %1064
      %1066 = vrot.lane.b32.xlu0 %v584, 32
      %v1067 = vpop.permute.xlu0 %1066
      %1068 = vrot.lane.b32.xlu0 %v585, 32
      %v1069 = vpop.permute.xlu0 %1068
      %1070 = vrot.lane.b32.xlu0 %v586, 32
      %v1071 = vpop.permute.xlu0 %1070
      %1072 = vrot.lane.b32.xlu0 %v587, 32
      %v1073 = vpop.permute.xlu0 %1072
      %1074 = vrot.lane.b32.xlu0 %v588, 32
      %v1075 = vpop.permute.xlu0 %1074
      %1076 = vrot.lane.b32.xlu0 %v589, 32
      %v1077 = vpop.permute.xlu0 %1076
      %1078 = vrot.lane.b32.xlu0 %v590, 32
      %v1079 = vpop.permute.xlu0 %1078
      %1080 = vrot.lane.b32.xlu0 %v591, 32
      %v1081 = vpop.permute.xlu0 %1080
      %1082 = vrot.lane.b32.xlu0 %v592, 32
      %v1083 = vpop.permute.xlu0 %1082
      %1084 = vrot.lane.b32.xlu0 %v593, 32
      %v1085 = vpop.permute.xlu0 %1084
      %1086 = vrot.lane.b32.xlu0 %v594, 32
      %v1087 = vpop.permute.xlu0 %1086
      %1088 = vrot.lane.b32.xlu0 %v595, 32
      %v1089 = vpop.permute.xlu0 %1088
      %1090 = vrot.lane.b32.xlu0 %v596, 32
      %v1091 = vpop.permute.xlu0 %1090
      %1092 = vrot.lane.b32.xlu0 %v597, 32
      %v1093 = vpop.permute.xlu0 %1092
      %vm1110 = vcmask 31744
      %v1111 = vsel %vm1110, %v448, %v615
      %v1112 = vsel %vm1110, %v449, %v617
      %v1113 = vsel %vm1110, %v450, %v619
      %v1114 = vsel %vm1110, %v451, %v621
      %v1115 = vsel %vm1110, %v452, %v623
      %v1116 = vsel %vm1110, %v453, %v625
      %v1117 = vsel %vm1110, %v454, %v627
      %v1118 = vsel %vm1110, %v455, %v629
      %v1119 = vsel %vm1110, %v456, %v631
      %v1120 = vsel %vm1110, %v457, %v633
      %v1121 = vsel %vm1110, %v458, %v635
      %v1122 = vsel %vm1110, %v459, %v637
      %v1123 = vsel %vm1110, %v460, %v639
      %v1124 = vsel %vm1110, %v461, %v641
      %v1125 = vsel %vm1110, %v462, %v643
      %v1126 = vsel %vm1110, %v463, %v645
      %vm1127 = vcmask 64512
      %v1128 = vsel %vm1127, %v1111, %v679
      %v1129 = vsel %vm1127, %v1112, %v681
      %v1130 = vsel %vm1127, %v1113, %v683
      %v1131 = vsel %vm1127, %v1114, %v685
      %v1132 = vsel %vm1127, %v1115, %v687
      %v1133 = vsel %vm1127, %v1116, %v689
      %v1134 = vsel %vm1127, %v1117, %v691
      %v1135 = vsel %vm1127, %v1118, %v693
      %v1136 = vsel %vm1127, %v1119, %v695
      %v1137 = vsel %vm1127, %v1120, %v697
      %v1138 = vsel %vm1127, %v1121, %v699
      %v1139 = vsel %vm1127, %v1122, %v701
      %v1140 = vsel %vm1127, %v1123, %v703
      %v1141 = vsel %vm1127, %v1124, %v705
      %v1142 = vsel %vm1127, %v1125, %v707
      %v1143 = vsel %vm1127, %v1126, %v709
      %vm1144 = vcmask 97280
      %v1145 = vsel %vm1144, %v1128, %v743
      %v1146 = vsel %vm1144, %v1129, %v745
      %v1147 = vsel %vm1144, %v1130, %v747
      %v1148 = vsel %vm1144, %v1131, %v749
      %v1149 = vsel %vm1144, %v1132, %v751
      %v1150 = vsel %vm1144, %v1133, %v753
      %v1151 = vsel %vm1144, %v1134, %v755
      %v1152 = vsel %vm1144, %v1135, %v757
      %v1153 = vsel %vm1144, %v1136, %v759
      %v1154 = vsel %vm1144, %v1137, %v761
      %v1155 = vsel %vm1144, %v1138, %v763
      %v1156 = vsel %vm1144, %v1139, %v765
      %v1157 = vsel %vm1144, %v1140, %v767
      %v1158 = vsel %vm1144, %v1141, %v769
      %v1159 = vsel %vm1144, %v1142, %v771
      %v1160 = vsel %vm1144, %v1143, %v773
      %vm1161 = vcmask 130048
      %v1162 = vsel %vm1161, %v1145, %v807
      %v1163 = vsel %vm1161, %v1146, %v809
      %v1164 = vsel %vm1161, %v1147, %v811
      %v1165 = vsel %vm1161, %v1148, %v813
      %v1166 = vsel %vm1161, %v1149, %v815
      %v1167 = vsel %vm1161, %v1150, %v817
      %v1168 = vsel %vm1161, %v1151, %v819
      %v1169 = vsel %vm1161, %v1152, %v821
      %v1170 = vsel %vm1161, %v1153, %v823
      %v1171 = vsel %vm1161, %v1154, %v825
      %v1172 = vsel %vm1161, %v1155, %v827
      %v1173 = vsel %vm1161, %v1156, %v829
      %v1174 = vsel %vm1161, %v1157, %v831
      %v1175 = vsel %vm1161, %v1158, %v833
      %v1176 = vsel %vm1161, %v1159, %v835
      %v1177 = vsel %vm1161, %v1160, %v837
      %vm1178 = vcmask 162816
      %v1179 = vsel %vm1178, %v1162, %v871
      %v1180 = vsel %vm1178, %v1163, %v873
      %v1181 = vsel %vm1178, %v1164, %v875
      %v1182 = vsel %vm1178, %v1165, %v877
      %v1183 = vsel %vm1178, %v1166, %v879
      %v1184 = vsel %vm1178, %v1167, %v881
      %v1185 = vsel %vm1178, %v1168, %v883
      %v1186 = vsel %vm1178, %v1169, %v885
      %v1187 = vsel %vm1178, %v1170, %v887
      %v1188 = vsel %vm1178, %v1171, %v889
      %v1189 = vsel %vm1178, %v1172, %v891
      %v1190 = vsel %vm1178, %v1173, %v893
      %v1191 = vsel %vm1178, %v1174, %v895
      %v1192 = vsel %vm1178, %v1175, %v897
      %v1193 = vsel %vm1178, %v1176, %v899
      %v1194 = vsel %vm1178, %v1177, %v901
      %vm1195 = vcmask 195584
      %v1196 = vsel %vm1195, %v1179, %v935
      %v1197 = vsel %vm1195, %v1180, %v937
      %v1198 = vsel %vm1195, %v1181, %v939
      %v1199 = vsel %vm1195, %v1182, %v941
      %v1200 = vsel %vm1195, %v1183, %v943
      %v1201 = vsel %vm1195, %v1184, %v945
      %v1202 = vsel %vm1195, %v1185, %v947
      %v1203 = vsel %vm1195, %v1186, %v949
      %v1204 = vsel %vm1195, %v1187, %v951
      %v1205 = vsel %vm1195, %v1188, %v953
      %v1206 = vsel %vm1195, %v1189, %v955
      %v1207 = vsel %vm1195, %v1190, %v957
      %v1208 = vsel %vm1195, %v1191, %v959
      %v1209 = vsel %vm1195, %v1192, %v961
      %v1210 = vsel %vm1195, %v1193, %v963
      %v1211 = vsel %vm1195, %v1194, %v965
      %vm1212 = vcmask 228352
      %v1213 = vsel %vm1212, %v1196, %v999
      %v1214 = vsel %vm1212, %v1197, %v1001
      %v1215 = vsel %vm1212, %v1198, %v1003
      %v1216 = vsel %vm1212, %v1199, %v1005
      %v1217 = vsel %vm1212, %v1200, %v1007
      %v1218 = vsel %vm1212, %v1201, %v1009
      %v1219 = vsel %vm1212, %v1202, %v1011
      %v1220 = vsel %vm1212, %v1203, %v1013
      %v1221 = vsel %vm1212, %v1204, %v1015
      %v1222 = vsel %vm1212, %v1205, %v1017
      %v1223 = vsel %vm1212, %v1206, %v1019
      %v1224 = vsel %vm1212, %v1207, %v1021
      %v1225 = vsel %vm1212, %v1208, %v1023
      %v1226 = vsel %vm1212, %v1209, %v1025
      %v1227 = vsel %vm1212, %v1210, %v1027
      %v1228 = vsel %vm1212, %v1211, %v1029
      %vm1229 = vcmask 261120
      %v1230 = vsel %vm1229, %v1213, %v1063
      %v1231 = vsel %vm1229, %v1214, %v1065
      %v1232 = vsel %vm1229, %v1215, %v1067
      %v1233 = vsel %vm1229, %v1216, %v1069
      %v1234 = vsel %vm1229, %v1217, %v1071
      %v1235 = vsel %vm1229, %v1218, %v1073
      %v1236 = vsel %vm1229, %v1219, %v1075
      %v1237 = vsel %vm1229, %v1220, %v1077
      %v1238 = vsel %vm1229, %v1221, %v1079
      %v1239 = vsel %vm1229, %v1222, %v1081
      %v1240 = vsel %vm1229, %v1223, %v1083
      %v1241 = vsel %vm1229, %v1224, %v1085
      %v1242 = vsel %vm1229, %v1225, %v1087
      %v1243 = vsel %vm1229, %v1226, %v1089
      %v1244 = vsel %vm1229, %v1227, %v1091
      %v1245 = vsel %vm1229, %v1228, %v1093
      %v1246 = vpack.c.bf16 %v1231, %v1230
      %v1247 = vpack.c.bf16 %v1233, %v1232
      %v1248 = vpack.c.bf16 %v1235, %v1234
      %v1249 = vpack.c.bf16 %v1237, %v1236
      %v1250 = vpack.c.bf16 %v1239, %v1238
      %v1251 = vpack.c.bf16 %v1241, %v1240
      %v1252 = vpack.c.bf16 %v1243, %v1242
      %v1253 = vpack.c.bf16 %v1245, %v1244
      %v1254 = vld [vmem:[%s1] sm:$0xf]
      %v1255 = vld [vmem:[%s1 + $0x4] sm:$0xf]
      %v1256 = vld [vmem:[%s1 + $0x8] sm:$0xf]
      %v1257 = vld [vmem:[%s1 + $0xc] sm:$0xf]
      %v1258 = vld [vmem:[%s1 + $0x10] sm:$0x3]
      %v1259 = vld [vmem:[%s2] sm:$0x1]
      %v1261 = vperm.slane %v1259, 0
      %v1268 = vunpack.c.l.b16 %v1254
      %v1269 = vunpack.c.l.b16 %v1255
      %v1270 = vunpack.c.l.b16 %v1256
      %v1271 = vunpack.c.l.b16 %v1257
      %v1272 = vunpack.c.l.b16 %v1258
      %v1273 = vpack.c.b16 %v1269, %v1268
      %v1274 = vpack.c.b16 %v1271, %v1270
      %v1275 = vpack.c.b16 %v1272, %v1272
      %vm1278 = vcmask 293888
      %v1280 = vsel %vm1278, %v1246, 0
      %v1283 = vsel %vm1278, %v1247, 0
      %v1286 = vsel %vm1278, %v1248, 0
      %v1289 = vsel %vm1278, %v1249, 0
      %v1292 = vsel %vm1278, %v1250, 0
      %v1295 = vsel %vm1278, %v1251, 0
      %v1298 = vsel %vm1278, %v1252, 0
      %v1301 = vsel %vm1278, %v1253, 0
      %vm1303 = vcmask 1041408
      %v1305 = vsel %vm1303, %v1275, 0
      %1307 = vmatpush.bf16.msra.mxu0 0
      %1308 = vmatpush.bf16.msra.mxu0 0
      %1309 = vmatpush.bf16.msra.mxu0 0
      %1310 = vmatpush.bf16.msra.mxu0 0
      %1311 = vmatpush.bf16.msra.mxu0 0
      %1312 = vmatpush.bf16.msra.mxu0 %v1305
      %1313 = vmatpush.bf16.msra.mxu0 %v1274
      %1314 = vmatpush.bf16.msra.mxu0 %v1273
      %1315 = vmatmul.bf16.gmra.mxu0 %v1280
      %v1316 = vpop.f32.mrf.mxu0
      %v1317 = vadd.f32 %v1261, %v1316
      %v1318 = vpop.f32.mrf.mxu0
      %v1319 = vadd.f32 %v1261, %v1318
      %1320 = vmatmul.bf16.gmra.mxu0 %v1283
      %v1321 = vpop.f32.mrf.mxu0
      %v1322 = vadd.f32 %v1261, %v1321
      %v1323 = vpop.f32.mrf.mxu0
      %v1324 = vadd.f32 %v1261, %v1323
      %1325 = vmatmul.bf16.gmra.mxu0 %v1286
      %v1326 = vpop.f32.mrf.mxu0
      %v1327 = vadd.f32 %v1261, %v1326
      %v1328 = vpop.f32.mrf.mxu0
      %v1329 = vadd.f32 %v1261, %v1328
      %1330 = vmatmul.bf16.gmra.mxu0 %v1289
      %v1331 = vpop.f32.mrf.mxu0
      %v1332 = vadd.f32 %v1261, %v1331
      %v1333 = vpop.f32.mrf.mxu0
      %v1334 = vadd.f32 %v1261, %v1333
      %1335 = vmatmul.bf16.gmra.mxu0 %v1292
      %v1336 = vpop.f32.mrf.mxu0
      %v1337 = vadd.f32 %v1261, %v1336
      %v1338 = vpop.f32.mrf.mxu0
      %v1339 = vadd.f32 %v1261, %v1338
      %1340 = vmatmul.bf16.gmra.mxu0 %v1295
      %v1341 = vpop.f32.mrf.mxu0
      %v1342 = vadd.f32 %v1261, %v1341
      %v1343 = vpop.f32.mrf.mxu0
      %v1344 = vadd.f32 %v1261, %v1343
      %1345 = vmatmul.bf16.gmra.mxu0 %v1298
      %v1346 = vpop.f32.mrf.mxu0
      %v1347 = vadd.f32 %v1261, %v1346
      %v1348 = vpop.f32.mrf.mxu0
      %v1349 = vadd.f32 %v1261, %v1348
      %1350 = vmatmul.bf16.gmra.mxu0 %v1301
      %v1351 = vpop.f32.mrf.mxu0
      %v1352 = vadd.f32 %v1261, %v1351
      %v1353 = vpop.f32.mrf.mxu0
      %v1354 = vadd.f32 %v1261, %v1353
      %1355 = vdwg.mxu0
      %v1356 = vsel %vm1127, %v1317, 0.0
      %v1357 = vsel %vm1127, %v1319, 0.0
      %v1358 = vadd.f32 %v1356, %v1357
      %v1359 = vsel %vm1127, %v1322, 0.0
      %v1360 = vadd.f32 %v1358, %v1359
      %v1361 = vsel %vm1127, %v1324, 0.0
      %v1362 = vadd.f32 %v1360, %v1361
      %v1363 = vsel %vm1127, %v1327, 0.0
      %v1364 = vadd.f32 %v1362, %v1363
      %v1365 = vsel %vm1127, %v1329, 0.0
      %v1366 = vadd.f32 %v1364, %v1365
      %v1367 = vsel %vm1127, %v1332, 0.0
      %v1368 = vadd.f32 %v1366, %v1367
      %v1369 = vsel %vm1127, %v1334, 0.0
      %v1370 = vadd.f32 %v1368, %v1369
      %v1371 = vsel %vm1127, %v1337, 0.0
      %v1372 = vadd.f32 %v1370, %v1371
      %v1373 = vsel %vm1127, %v1339, 0.0
      %v1374 = vadd.f32 %v1372, %v1373
      %v1375 = vsel %vm1127, %v1342, 0.0
      %v1376 = vadd.f32 %v1374, %v1375
      %v1377 = vsel %vm1127, %v1344, 0.0
      %v1378 = vadd.f32 %v1376, %v1377
      %v1379 = vsel %vm1127, %v1347, 0.0
      %v1380 = vadd.f32 %v1378, %v1379
      %v1381 = vsel %vm1127, %v1349, 0.0
      %v1382 = vadd.f32 %v1380, %v1381
      %v1383 = vsel %vm1127, %v1352, 0.0
      %v1384 = vadd.f32 %v1382, %v1383
      %v1385 = vsel %vm1127, %v1354, 0.0
      %v1386 = vadd.f32 %v1384, %v1385
      %v1387 = vrot.slane %v1386, 4
      %v1388 = vadd.f32 %v1386, %v1387
      %v1389 = vrot.slane %v1388, 2
      %v1390 = vadd.f32 %v1388, %v1389
      %v1391 = vrot.slane %v1390, 1
      %v1392 = vadd.f32 %v1390, %v1391
      %vm1393 = vcmask 57344
      %1394 = vst.msk [vmem:[%s266] sm:$0x1] %vm1393, %v1392
      %v1395 = vmul.f32 %v1317, %v1317
      %v1396 = vmul.f32 %v1319, %v1319
      %v1397 = vmul.f32 %v1322, %v1322
      %v1398 = vmul.f32 %v1324, %v1324
      %v1399 = vmul.f32 %v1327, %v1327
      %v1400 = vmul.f32 %v1329, %v1329
      %v1401 = vmul.f32 %v1332, %v1332
      %v1402 = vmul.f32 %v1334, %v1334
      %v1403 = vmul.f32 %v1337, %v1337
      %v1404 = vmul.f32 %v1339, %v1339
      %v1405 = vmul.f32 %v1342, %v1342
      %v1406 = vmul.f32 %v1344, %v1344
      %v1407 = vmul.f32 %v1347, %v1347
      %v1408 = vmul.f32 %v1349, %v1349
      %v1409 = vmul.f32 %v1352, %v1352
      %v1410 = vmul.f32 %v1354, %v1354
      %v1411 = vsel %vm1127, %v1395, 0.0
      %v1412 = vsel %vm1127, %v1396, 0.0
      %v1413 = vadd.f32 %v1411, %v1412
      %v1414 = vsel %vm1127, %v1397, 0.0
      %v1415 = vadd.f32 %v1413, %v1414
      %v1416 = vsel %vm1127, %v1398, 0.0
      %v1417 = vadd.f32 %v1415, %v1416
      %v1418 = vsel %vm1127, %v1399, 0.0
      %v1419 = vadd.f32 %v1417, %v1418
      %v1420 = vsel %vm1127, %v1400, 0.0
      %v1421 = vadd.f32 %v1419, %v1420
      %v1422 = vsel %vm1127, %v1401, 0.0
      %v1423 = vadd.f32 %v1421, %v1422
      %v1424 = vsel %vm1127, %v1402, 0.0
      %v1425 = vadd.f32 %v1423, %v1424
      %v1426 = vsel %vm1127, %v1403, 0.0
      %v1427 = vadd.f32 %v1425, %v1426
      %v1428 = vsel %vm1127, %v1404, 0.0
      %v1429 = vadd.f32 %v1427, %v1428
      %v1430 = vsel %vm1127, %v1405, 0.0
      %v1431 = vadd.f32 %v1429, %v1430
      %v1432 = vsel %vm1127, %v1406, 0.0
      %v1433 = vadd.f32 %v1431, %v1432
      %v1434 = vsel %vm1127, %v1407, 0.0
      %v1435 = vadd.f32 %v1433, %v1434
      %v1436 = vsel %vm1127, %v1408, 0.0
      %v1437 = vadd.f32 %v1435, %v1436
      %v1438 = vsel %vm1127, %v1409, 0.0
      %v1439 = vadd.f32 %v1437, %v1438
      %v1440 = vsel %vm1127, %v1410, 0.0
      %v1441 = vadd.f32 %v1439, %v1440
      %v1442 = vrot.slane %v1441, 4
      %v1443 = vadd.f32 %v1441, %v1442
      %v1444 = vrot.slane %v1443, 2
      %v1445 = vadd.f32 %v1443, %v1444
      %v1446 = vrot.slane %v1445, 1
      %v1447 = vadd.f32 %v1445, %v1446
      %1448 = vst.msk [vmem:[%s273] sm:$0x1] %vm1393, %v1447
      %v1449 = vpack.c.bf16 %v1317, %v1317
      %v1450 = vpack.c.bf16 %v1319, %v1319
      %v1451 = vpack.c.bf16 %v1322, %v1322
      %v1452 = vpack.c.bf16 %v1324, %v1324
      %v1453 = vpack.c.bf16 %v1327, %v1327
      %v1454 = vpack.c.bf16 %v1329, %v1329
      %v1455 = vpack.c.bf16 %v1332, %v1332
      %v1456 = vpack.c.bf16 %v1334, %v1334
      %v1457 = vpack.c.bf16 %v1337, %v1337
      %v1458 = vpack.c.bf16 %v1339, %v1339
      %v1459 = vpack.c.bf16 %v1342, %v1342
      %v1460 = vpack.c.bf16 %v1344, %v1344
      %v1461 = vpack.c.bf16 %v1347, %v1347
      %v1462 = vpack.c.bf16 %v1349, %v1349
      %v1463 = vpack.c.bf16 %v1352, %v1352
      %v1464 = vpack.c.bf16 %v1354, %v1354
      %vm1465 = vsmask.f32 256
      %vm1466 = vsmask.f32 4368
      %vm1467 = vmor %vm1465, %vm1466
      %v1469 = vshrl.u32 %v1449, 16
      %v1471 = vrot.slane %v1469, 7
      %v1472 = vshll.u32 %v1449, 16
      %v1474 = vor.u32 %v1471, %v1472
      %v1475 = vrot.slane %v1471, 4
      %v1477 = vshrl.u32 %v1450, 16
      %v1479 = vrot.slane %v1477, 7
      %v1480 = vshll.u32 %v1450, 16
      %v1482 = vor.u32 %v1479, %v1480
      %v1483 = vsel %vm1467, %v1475, %v1482
      %v1484 = vrot.slane %v1479, 4
      %v1486 = vshrl.u32 %v1451, 16
      %v1488 = vrot.slane %v1486, 7
      %v1489 = vshll.u32 %v1451, 16
      %v1491 = vor.u32 %v1488, %v1489
      %v1492 = vrot.slane %v1488, 4
      %v1494 = vshrl.u32 %v1452, 16
      %v1496 = vrot.slane %v1494, 7
      %v1497 = vshll.u32 %v1452, 16
      %v1499 = vor.u32 %v1496, %v1497
      %v1500 = vsel %vm1467, %v1492, %v1499
      %v1501 = vrot.slane %v1496, 4
      %v1503 = vshrl.u32 %v1453, 16
      %v1505 = vrot.slane %v1503, 7
      %v1506 = vshll.u32 %v1453, 16
      %v1508 = vor.u32 %v1505, %v1506
      %v1509 = vrot.slane %v1505, 4
      %v1511 = vshrl.u32 %v1454, 16
      %v1513 = vrot.slane %v1511, 7
      %v1514 = vshll.u32 %v1454, 16
      %v1516 = vor.u32 %v1513, %v1514
      %v1517 = vsel %vm1467, %v1509, %v1516
      %v1518 = vrot.slane %v1513, 4
      %v1520 = vshrl.u32 %v1455, 16
      %v1522 = vrot.slane %v1520, 7
      %v1523 = vshll.u32 %v1455, 16
      %v1525 = vor.u32 %v1522, %v1523
      %v1526 = vrot.slane %v1522, 4
      %v1528 = vshrl.u32 %v1456, 16
      %v1530 = vrot.slane %v1528, 7
      %v1531 = vshll.u32 %v1456, 16
      %v1533 = vor.u32 %v1530, %v1531
      %v1534 = vsel %vm1467, %v1526, %v1533
      %v1535 = vrot.slane %v1530, 4
      %v1537 = vshrl.u32 %v1457, 16
      %v1539 = vrot.slane %v1537, 7
      %v1540 = vshll.u32 %v1457, 16
      %v1542 = vor.u32 %v1539, %v1540
      %v1543 = vrot.slane %v1539, 4
      %v1545 = vshrl.u32 %v1458, 16
      %v1547 = vrot.slane %v1545, 7
      %v1548 = vshll.u32 %v1458, 16
      %v1550 = vor.u32 %v1547, %v1548
      %v1551 = vsel %vm1467, %v1543, %v1550
      %v1552 = vrot.slane %v1547, 4
      %v1554 = vshrl.u32 %v1459, 16
      %v1556 = vrot.slane %v1554, 7
      %v1557 = vshll.u32 %v1459, 16
      %v1559 = vor.u32 %v1556, %v1557
      %v1560 = vrot.slane %v1556, 4
      %v1562 = vshrl.u32 %v1460, 16
      %v1564 = vrot.slane %v1562, 7
      %v1565 = vshll.u32 %v1460, 16
      %v1567 = vor.u32 %v1564, %v1565
      %v1568 = vsel %vm1467, %v1560, %v1567
      %v1569 = vrot.slane %v1564, 4
      %v1571 = vshrl.u32 %v1461, 16
      %v1573 = vrot.slane %v1571, 7
      %v1574 = vshll.u32 %v1461, 16
      %v1576 = vor.u32 %v1573, %v1574
      %v1577 = vrot.slane %v1573, 4
      %v1579 = vshrl.u32 %v1462, 16
      %v1581 = vrot.slane %v1579, 7
      %v1582 = vshll.u32 %v1462, 16
      %v1584 = vor.u32 %v1581, %v1582
      %v1585 = vsel %vm1467, %v1577, %v1584
      %v1586 = vrot.slane %v1581, 4
      %v1588 = vshrl.u32 %v1463, 16
      %v1590 = vrot.slane %v1588, 7
      %v1591 = vshll.u32 %v1463, 16
      %v1593 = vor.u32 %v1590, %v1591
      %v1594 = vrot.slane %v1590, 4
      %v1596 = vshrl.u32 %v1464, 16
      %v1598 = vrot.slane %v1596, 7
      %v1599 = vshll.u32 %v1464, 16
      %v1601 = vor.u32 %v1598, %v1599
      %v1602 = vsel %vm1467, %v1594, %v1601
      %v1603 = vrot.slane %v1598, 4
      %s1628 = smul.u32 %s496, 3
      %s1629 = smul.addr %s1628, 4
      %s1630 = scalar_lea.vmem %s259, %s1629
      %vm1631 = vcmask 60416
      %vm1632 = vsmask.f32 7938
      %vm1633 = vmand %vm1631, %vm1632
      %v1634 = vld [vmem:[%s1630] sm:$0xf]
      %v1635 = vsel %vm1633, %v1474, %v1634
      %1636 = vst [vmem:[%s1630] sm:$0xf] %v1635
      %vm1637 = vcmask 60416
      %1638 = vst.msk [vmem:[%s1630 + $0x4] sm:$0xf] %vm1637, %v1483
      %vm1639 = vcmask 57344
      %vm1640 = vmand %vm1639, %vm1465
      %v1641 = vld [vmem:[%s1630 + $0x8] sm:$0x1]
      %v1642 = vsel %vm1640, %v1484, %v1641
      %1643 = vst [vmem:[%s1630 + $0x8] sm:$0x1] %v1642
      %v1644 = vld [vmem:[%s1630 + $0xc] sm:$0xf]
      %v1645 = vsel %vm1633, %v1491, %v1644
      %1646 = vst [vmem:[%s1630 + $0xc] sm:$0xf] %v1645
      %1647 = vst.msk [vmem:[%s1630 + $0x10] sm:$0xf] %vm1637, %v1500
      %v1648 = vld [vmem:[%s1630 + $0x14] sm:$0x1]
      %v1649 = vsel %vm1640, %v1501, %v1648
      %1650 = vst [vmem:[%s1630 + $0x14] sm:$0x1] %v1649
      %v1651 = vld [vmem:[%s1630 + $0x18] sm:$0xf]
      %v1652 = vsel %vm1633, %v1508, %v1651
      %1653 = vst [vmem:[%s1630 + $0x18] sm:$0xf] %v1652
      %1654 = vst.msk [vmem:[%s1630 + $0x1c] sm:$0xf] %vm1637, %v1517
      %v1655 = vld [vmem:[%s1630 + $0x20] sm:$0x1]
      %v1656 = vsel %vm1640, %v1518, %v1655
      %1657 = vst [vmem:[%s1630 + $0x20] sm:$0x1] %v1656
      %v1658 = vld [vmem:[%s1630 + $0x24] sm:$0xf]
      %v1659 = vsel %vm1633, %v1525, %v1658
      %1660 = vst [vmem:[%s1630 + $0x24] sm:$0xf] %v1659
      %1661 = vst.msk [vmem:[%s1630 + $0x28] sm:$0xf] %vm1637, %v1534
      %v1662 = vld [vmem:[%s1630 + $0x2c] sm:$0x1]
      %v1663 = vsel %vm1640, %v1535, %v1662
      %1664 = vst [vmem:[%s1630 + $0x2c] sm:$0x1] %v1663
      %v1665 = vld [vmem:[%s1630 + $0x30] sm:$0xf]
      %v1666 = vsel %vm1633, %v1542, %v1665
      %1667 = vst [vmem:[%s1630 + $0x30] sm:$0xf] %v1666
      %1668 = vst.msk [vmem:[%s1630 + $0x34] sm:$0xf] %vm1637, %v1551
      %v1669 = vld [vmem:[%s1630 + $0x38] sm:$0x1]
      %v1670 = vsel %vm1640, %v1552, %v1669
      %1671 = vst [vmem:[%s1630 + $0x38] sm:$0x1] %v1670
      %v1672 = vld [vmem:[%s1630 + $0x3c] sm:$0xf]
      %v1673 = vsel %vm1633, %v1559, %v1672
      %1674 = vst [vmem:[%s1630 + $0x3c] sm:$0xf] %v1673
      %1675 = vst.msk [vmem:[%s1630 + $0x40] sm:$0xf] %vm1637, %v1568
      %v1676 = vld [vmem:[%s1630 + $0x44] sm:$0x1]
      %v1677 = vsel %vm1640, %v1569, %v1676
      %1678 = vst [vmem:[%s1630 + $0x44] sm:$0x1] %v1677
      %v1679 = vld [vmem:[%s1630 + $0x48] sm:$0xf]
      %v1680 = vsel %vm1633, %v1576, %v1679
      %1681 = vst [vmem:[%s1630 + $0x48] sm:$0xf] %v1680
      %1682 = vst.msk [vmem:[%s1630 + $0x4c] sm:$0xf] %vm1637, %v1585
      %v1683 = vld [vmem:[%s1630 + $0x50] sm:$0x1]
      %v1684 = vsel %vm1640, %v1586, %v1683
      %1685 = vst [vmem:[%s1630 + $0x50] sm:$0x1] %v1684
      %v1686 = vld [vmem:[%s1630 + $0x54] sm:$0xf]
      %v1687 = vsel %vm1633, %v1593, %v1686
      %1688 = vst [vmem:[%s1630 + $0x54] sm:$0xf] %v1687
      %1689 = vst.msk [vmem:[%s1630 + $0x58] sm:$0xf] %vm1637, %v1602
      %v1690 = vld [vmem:[%s1630 + $0x5c] sm:$0x1]
      %v1691 = vsel %vm1640, %v1603, %v1690
      %1692 = vst [vmem:[%s1630 + $0x5c] sm:$0x1] %v1691
      %p1693 = scmp.lt.s32.totalorder %s21, 1
      %s1694 = scalar_select %p1693, %s21, 1
      %s1695 = smul.addr %s1694, 54
      %s1696 = smul.addr %s1695, 4
      %s1697 = scalar_lea.vmem %s3, %s1696
      %p1698 = scmp.lt.s32.totalorder %s21, 1
      %s1699 = scalar_select %p1698, %s21, 1
      %p1700 = scmp.lt.s32.totalorder %s22, 1
      %s1701 = scalar_select %p1700, %s22, 1
      %s1702 = smul.addr %s1699, 2
      %s1703 = sadd.s32 %s1701, %s1702
      %s1704 = scalar_lea.vmem %s4, %s1703
      %p1705 = scmp.lt.s32.totalorder %s21, 1
      %s1706 = scalar_select %p1705, %s21, 1
      %p1707 = scmp.lt.s32.totalorder %s22, 1
      %s1708 = scalar_select %p1707, %s22, 1
      %s1709 = smul.addr %s1706, 2
      %s1710 = sadd.s32 %s1708, %s1709
      %s1711 = scalar_lea.vmem %s5, %s1710
      // Predicated region
      $region37: #{double_conv_forward.3} parent=31 // pred_check
        %p1712 = pneg %p115
      $region38: #{double_conv_forward.3} parent=31 // pred_check_branch
        %1714 = sbr.rel (%p1712) target = $region40
      $region39: #{double_conv_forward.3} parent=31 // pred_region
        _
      $region40: #{double_conv_forward.3} parent=31 // pred_fallthru
        _
      // Predicated region
      $region41: #{double_conv_forward.3} parent=31 // pred_check
        %p1715 = pneg %p143
      $region42: #{double_conv_forward.3} parent=31 // pred_check_branch
        %1717 = sbr.rel (%p1715) target = $region44
      $region43: #{double_conv_forward.3} parent=31 // pred_region
        _
      $region44: #{double_conv_forward.3} parent=31 // pred_fallthru
        _
      // Predicated region
      $region45: #{double_conv_forward.3} parent=31 // pred_check
        %p1718 = pneg %p171
      $region46: #{double_conv_forward.3} parent=31 // pred_check_branch
        %1720 = sbr.rel (%p1718) target = $region48
      $region47: #{double_conv_forward.3} parent=31 // pred_region
        _
      $region48: #{double_conv_forward.3} parent=31 // pred_fallthru
        _
    $region32: #{double_conv_forward.3} parent=5 // pred_fallthru
      _
    %p1721 = scmp.le.s32.totalorder 2, %s12
    // Predicated region
    $region49: #{double_conv_forward.3} parent=5 // pred_check
      %p1722 = pneg %p1721
    $region50: #{double_conv_forward.3} parent=5 // pred_check_branch
      %1724 = sbr.rel (%p1722) target = $region52
    $region51: #{double_conv_forward.3} parent=5 // pred_region
      %s1725 = ssub.s32 %s12, 2
      // Predicated region
      $region53: #{double_conv_forward.3} parent=51 // pred_check
        %p1726 = pneg %p121
      $region54: #{double_conv_forward.3} parent=51 // pred_check_branch
        %1728 = sbr.rel (%p1726) target = $region56
      $region55: #{double_conv_forward.3} parent=51 // pred_region
        %p1729 = scmp.lt.s32.totalorder %s23, 1
        %s1730 = scalar_select %p1729, %s23, 1
        %s1731 = smul.addr %s1730, 54
        %s1732 = smul.addr %s1731, 4
        %s1733 = scalar_lea.vmem %s3, %s1732
      $region56: #{double_conv_forward.3} parent=51 // pred_fallthru
        _
      // Predicated region
      $region57: #{double_conv_forward.3} parent=51 // pred_check
        %p1734 = pneg %p149
      $region58: #{double_conv_forward.3} parent=51 // pred_check_branch
        %1736 = sbr.rel (%p1734) target = $region60
      $region59: #{double_conv_forward.3} parent=51 // pred_region
        %p1737 = scmp.lt.s32.totalorder %s23, 1
        %s1738 = scalar_select %p1737, %s23, 1
        %p1739 = scmp.lt.s32.totalorder %s24, 1
        %s1740 = scalar_select %p1739, %s24, 1
        %s1741 = smul.addr %s1738, 2
        %s1742 = sadd.s32 %s1740, %s1741
        %s1743 = scalar_lea.vmem %s4, %s1742
      $region60: #{double_conv_forward.3} parent=51 // pred_fallthru
        _
      // Predicated region
      $region61: #{double_conv_forward.3} parent=51 // pred_check
        %p1744 = pneg %p177
      $region62: #{double_conv_forward.3} parent=51 // pred_check_branch
        %1746 = sbr.rel (%p1744) target = $region64
      $region63: #{double_conv_forward.3} parent=51 // pred_region
        %p1747 = scmp.lt.s32.totalorder %s23, 1
        %s1748 = scalar_select %p1747, %s23, 1
        %p1749 = scmp.lt.s32.totalorder %s24, 1
        %s1750 = scalar_select %p1749, %s24, 1
        %s1751 = smul.addr %s1748, 2
        %s1752 = sadd.s32 %s1750, %s1751
        %s1753 = scalar_lea.vmem %s5, %s1752
      $region64: #{double_conv_forward.3} parent=51 // pred_fallthru
        _
    $region52: #{double_conv_forward.3} parent=5 // pred_fallthru
      _
  $region6: #{double_conv_forward.3} parent=0 // loop_footer
    %s16 = sadd.s32 1, %s12
  $region7: #{double_conv_forward.3} parent=0 // loop_footer_branch
    %11 = sbr.rel target = $region3
  $region8: #{double_conv_forward.3} parent=0 // loop_exit
    _

// kernel: double_conv_forward.4
$region0: #{double_conv_forward.4}
  #allocation0 [shape = 'u32[]', space=smem, size = 0x4, offset = 0x4, fixed_abs, tag = 'smem constant byte address 0x4 - core index']
  #allocation1 [shape = 'u32[72,128]{1,0:T(1,128)}', space=vmem, size = 0x9000, scoped, tag = 'internal scratch']
  #allocation2 [shape = 'f32[18,18,8]{2,1,0:T(8,128)}', space=vmem, size = 0x36000, scoped, tag = 'scratch operand']
  %s0 = inlined_call_operand.vmem [shape: bf16[2,18,18,8], index: 0, kind: input, shape index: {}]
  %s1 = inlined_call_operand.vmem [shape: bf16[72,8], index: 1, kind: input, shape index: {}]
  %s2 = inlined_call_operand.vmem [shape: f32[1,8], index: 2, kind: input, shape index: {}]
  %s3 = inlined_call_operand.vmem [shape: f32[1,8], index: 3, kind: input, shape index: {}]
  %s4 = inlined_call_operand.vmem [shape: f32[1,8], index: 4, kind: input, shape index: {}]
  %s5 = inlined_call_operand.vmem [shape: f32[2,16,16,8], index: 5, kind: output, shape index: {0}]
  %s6 = inlined_call_operand.vmem [shape: f32[2,2,1,8], index: 6, kind: output, shape index: {1}]
  %s7 = inlined_call_operand.vmem [shape: f32[2,2,1,8], index: 7, kind: output, shape index: {2}]
  %8 = xla_tuple %s5, %s6, %s7
  %s9 = sld [smem:[#allocation0]]
  $region73: #{double_conv_forward.4} parent=0
    _
  %s11 = ssub.s32 1, %s9
  %s12 = scalar_select 0, %s11, %s9
  loop: start=0, step=1, limit=6
  $region2: #{double_conv_forward.4} parent=0 // loop_pre_header
    _
  $region3: #{double_conv_forward.4} parent=0 // loop_header
    %s14 = sphi 0, %s18
    %p15 = scmp.ge.s32.totalorder %s14, 6
    %s21 = sphi 0, %s33
    %s22 = sphi 0, %s29
    %s23 = sphi 0, %s21
    %s24 = sphi 0, %s22
    %s25 = sphi 0, %s23
    %s26 = sphi 0, %s24
    %s36 = sphi 0, %s38
    %s39 = sphi 0, %s36
    %s40 = sphi 0, %s39
    %s56 = sphi 0, %s40
    %s60 = sphi 0, %s60
    %s62 = sphi 0, %s60
    %s63 = sphi 0, %s62
    %s77 = sphi 0, %s63
    %s81 = sphi 0, %s81
    %s83 = sphi 0, %s81
    %s84 = sphi 0, %s83
    %s98 = sphi 0, %s84
    %s102 = sphi 0, %s102
    %s104 = sphi 0, %s102
    %s105 = sphi 0, %s104
    %s119 = sphi 0, %s105
    %s123 = sphi 0, %s123
    %s125 = sphi 0, %s123
    %s126 = sphi 0, %s125
    %s140 = sphi 0, %s126
    %s148 = sphi 0, %s150
    %s151 = sphi 0, %s148
    %s152 = sphi 0, %s151
    %s168 = sphi 0, %s152
    %s176 = sphi 0, %s178
    %s179 = sphi 0, %s176
    %s180 = sphi 0, %s179
    %s196 = sphi 0, %s180
    %s204 = sphi 0, %s206
    %s207 = sphi 0, %s204
    %s208 = sphi 0, %s207
    %s224 = sphi 0, %s208
  $region4: #{double_conv_forward.4} parent=0 // loop_header_branch
    %17 = sbr.rel (%p15) target = $region8
  $region5: #{double_conv_forward.4} parent=0 // loop_body
    %s19 = ssub.s32 %s14, 1
    %s20 = ssub.s32 %s14, 2
    %s27 = sadd.s32 1, %s22
    %p28 = scmp.ge.s32.totalorder %s27, 2
    %s29 = scalar_select %p28, 0, %s27
    %s30 = sadd.s32 1, %s21
    %s31 = scalar_select %p28, %s30, %s21
    %p32 = scmp.ge.s32.totalorder %s31, 2
    %s33 = scalar_select %p32, 0, %s31
    %s34 = ssub.s32 %s21, %s33
    %p35 = scmp.eq.s32.totalorder %s34, 0
    %s37 = sadd.s32 %s36, 1
    %s38 = scalar_select %p35, %s36, %s37
    %p41 = pneg %p35
    %p42 = scmp.eq.s32.totalorder %s14, 3
    %p43 = por %p41, %p42
    %p44 = scmp.ne.s32.totalorder %s36, %s39
    %p45 = scmp.eq.s32.totalorder %s14, 0
    %p46 = por %p44, %p45
    %p47 = scmp.ne.s32.totalorder %s36, %s39
    %p48 = scmp.eq.s32.totalorder %s19, 3
    %p49 = por %p47, %p48
    %p50 = scmp.ne.s32.totalorder %s39, %s40
    %p51 = scmp.eq.s32.totalorder %s19, 0
    %p52 = por %p50, %p51
    %p53 = scmp.ne.s32.totalorder %s39, %s40
    %p54 = scmp.eq.s32.totalorder %s20, 3
    %p55 = por %p53, %p54
    %p57 = scmp.ne.s32.totalorder %s40, %s56
    %p58 = scmp.eq.s32.totalorder %s20, 0
    %p59 = por %p57, %p58
    %s61 = sadd.s32 %s60, 1
    %p64 = scmp.eq.s32.totalorder %s14, 3
    %p65 = scmp.ne.s32.totalorder %s60, %s62
    %p66 = scmp.eq.s32.totalorder %s14, 0
    %p67 = por %p65, %p66
    %p68 = scmp.ne.s32.totalorder %s60, %s62
    %p69 = scmp.eq.s32.totalorder %s19, 3
    %p70 = por %p68, %p69
    %p71 = scmp.ne.s32.totalorder %s62, %s63
    %p72 = scmp.eq.s32.totalorder %s19, 0
    %p73 = por %p71, %p72
    %p74 = scmp.ne.s32.totalorder %s62, %s63
    %p75 = scmp.eq.s32.totalorder %s20, 3
    %p76 = por %p74, %p75
    %p78 = scmp.ne.s32.totalorder %s63, %s77
    %p79 = scmp.eq.s32.totalorder %s20, 0
    %p80 = por %p78, %p79
    %s82 = sadd.s32 %s81, 1
    %p85 = scmp.eq.s32.totalorder %s14, 3
    %p86 = scmp.ne.s32.totalorder %s81, %s83
    %p87 = scmp.eq.s32.totalorder %s14, 0
    %p88 = por %p86, %p87
    %p89 = scmp.ne.s32.totalorder %s81, %s83
    %p90 = scmp.eq.s32.totalorder %s19, 3
    %p91 = por %p89, %p90
    %p92 = scmp.ne.s32.totalorder %s83, %s84
    %p93 = scmp.eq.s32.totalorder %s19, 0
    %p94 = por %p92, %p93
    %p95 = scmp.ne.s32.totalorder %s83, %s84
    %p96 = scmp.eq.s32.totalorder %s20, 3
    %p97 = por %p95, %p96
    %p99 = scmp.ne.s32.totalorder %s84, %s98
    %p100 = scmp.eq.s32.totalorder %s20, 0
    %p101 = por %p99, %p100
    %s103 = sadd.s32 %s102, 1
    %p106 = scmp.eq.s32.totalorder %s14, 3
    %p107 = scmp.ne.s32.totalorder %s102, %s104
    %p108 = scmp.eq.s32.totalorder %s14, 0
    %p109 = por %p107, %p108
    %p110 = scmp.ne.s32.totalorder %s102, %s104
    %p111 = scmp.eq.s32.totalorder %s19, 3
    %p112 = por %p110, %p111
    %p113 = scmp.ne.s32.totalorder %s104, %s105
    %p114 = scmp.eq.s32.totalorder %s19, 0
    %p115 = por %p113, %p114
    %p116 = scmp.ne.s32.totalorder %s104, %s105
    %p117 = scmp.eq.s32.totalorder %s20, 3
    %p118 = por %p116, %p117
    %p120 = scmp.ne.s32.totalorder %s105, %s119
    %p121 = scmp.eq.s32.totalorder %s20, 0
    %p122 = por %p120, %p121
    %s124 = sadd.s32 %s123, 1
    %p127 = scmp.eq.s32.totalorder %s14, 3
    %p128 = scmp.ne.s32.totalorder %s123, %s125
    %p129 = scmp.eq.s32.totalorder %s14, 0
    %p130 = por %p128, %p129
    %p131 = scmp.ne.s32.totalorder %s123, %s125
    %p132 = scmp.eq.s32.totalorder %s19, 3
    %p133 = por %p131, %p132
    %p134 = scmp.ne.s32.totalorder %s125, %s126
    %p135 = scmp.eq.s32.totalorder %s19, 0
    %p136 = por %p134, %p135
    %p137 = scmp.ne.s32.totalorder %s125, %s126
    %p138 = scmp.eq.s32.totalorder %s20, 3
    %p139 = por %p137, %p138
    %p141 = scmp.ne.s32.totalorder %s126, %s140
    %p142 = scmp.eq.s32.totalorder %s20, 0
    %p143 = por %p141, %p142
    %s144 = ssub.s32 %s21, %s33
    %s145 = ssub.s32 %s22, %s29
    %s146 = sor.u32 %s144, %s145
    %p147 = scmp.eq.s32.totalorder %s146, 0
    %s149 = sadd.s32 %s148, 1
    %s150 = scalar_select %p147, %s148, %s149
    %p153 = pneg %p147
    %p154 = scmp.eq.s32.totalorder %s14, 3
    %p155 = por %p153, %p154
    %p156 = scmp.ne.s32.totalorder %s148, %s151
    %p157 = scmp.eq.s32.totalorder %s14, 0
    %p158 = por %p156, %p157
    %p159 = scmp.ne.s32.totalorder %s148, %s151
    %p160 = scmp.eq.s32.totalorder %s19, 3
    %p161 = por %p159, %p160
    %p162 = scmp.ne.s32.totalorder %s151, %s152
    %p163 = scmp.eq.s32.totalorder %s19, 0
    %p164 = por %p162, %p163
    %p165 = scmp.ne.s32.totalorder %s151, %s152
    %p166 = scmp.eq.s32.totalorder %s20, 3
    %p167 = por %p165, %p166
    %p169 = scmp.ne.s32.totalorder %s152, %s168
    %p170 = scmp.eq.s32.totalorder %s20, 0
    %p171 = por %p169, %p170
    %s172 = ssub.s32 %s21, %s33
    %s173 = ssub.s32 %s22, %s29
    %s174 = sor.u32 %s172, %s173
    %p175 = scmp.eq.s32.totalorder %s174, 0
    %s177 = sadd.s32 %s176, 1
    %s178 = scalar_select %p175, %s176, %s177
    %p181 = pneg %p175
    %p182 = scmp.eq.s32.totalorder %s14, 3
    %p183 = por %p181, %p182
    %p184 = scmp.ne.s32.totalorder %s176, %s179
    %p185 = scmp.eq.s32.totalorder %s14, 0
    %p186 = por %p184, %p185
    %p187 = scmp.ne.s32.totalorder %s176, %s179
    %p188 = scmp.eq.s32.totalorder %s19, 3
    %p189 = por %p187, %p188
    %p190 = scmp.ne.s32.totalorder %s179, %s180
    %p191 = scmp.eq.s32.totalorder %s19, 0
    %p192 = por %p190, %p191
    %p193 = scmp.ne.s32.totalorder %s179, %s180
    %p194 = scmp.eq.s32.totalorder %s20, 3
    %p195 = por %p193, %p194
    %p197 = scmp.ne.s32.totalorder %s180, %s196
    %p198 = scmp.eq.s32.totalorder %s20, 0
    %p199 = por %p197, %p198
    %s200 = ssub.s32 %s21, %s33
    %s201 = ssub.s32 %s22, %s29
    %s202 = sor.u32 %s200, %s201
    %p203 = scmp.eq.s32.totalorder %s202, 0
    %s205 = sadd.s32 %s204, 1
    %s206 = scalar_select %p203, %s204, %s205
    %p209 = pneg %p203
    %p210 = scmp.eq.s32.totalorder %s14, 3
    %p211 = por %p209, %p210
    %p212 = scmp.ne.s32.totalorder %s204, %s207
    %p213 = scmp.eq.s32.totalorder %s14, 0
    %p214 = por %p212, %p213
    %p215 = scmp.ne.s32.totalorder %s204, %s207
    %p216 = scmp.eq.s32.totalorder %s19, 3
    %p217 = por %p215, %p216
    %p218 = scmp.ne.s32.totalorder %s207, %s208
    %p219 = scmp.eq.s32.totalorder %s19, 0
    %p220 = por %p218, %p219
    %p221 = scmp.ne.s32.totalorder %s207, %s208
    %p222 = scmp.eq.s32.totalorder %s20, 3
    %p223 = por %p221, %p222
    %p225 = scmp.ne.s32.totalorder %s208, %s224
    %p226 = scmp.eq.s32.totalorder %s20, 0
    %p227 = por %p225, %p226
    %p228 = scmp.le.s32.totalorder 1, %s14
    %p229 = scmp.lt.s32.totalorder %s14, 5
    %p230 = pnand %p228, %p229
    %p231 = pneg %p230
    // Predicated region
    $region9: #{double_conv_forward.4} parent=5 // pred_check
      _
    $region10: #{double_conv_forward.4} parent=5 // pred_check_branch
      %233 = sbr.rel (%p230) target = $region12
    $region11: #{double_conv_forward.4} parent=5 // pred_region
      %s234 = ssub.s32 %s14, 1
      // Predicated region
      $region13: #{double_conv_forward.4} parent=11 // pred_check
        %p235 = pneg %p73
      $region14: #{double_conv_forward.4} parent=11 // pred_check_branch
        %237 = sbr.rel (%p235) target = $region16
      $region15: #{double_conv_forward.4} parent=11 // pred_region
        _
      $region16: #{double_conv_forward.4} parent=11 // pred_fallthru
        _
      // Predicated region
      $region17: #{double_conv_forward.4} parent=11 // pred_check
        %p238 = pneg %p94
      $region18: #{double_conv_forward.4} parent=11 // pred_check_branch
        %240 = sbr.rel (%p238) target = $region20
      $region19: #{double_conv_forward.4} parent=11 // pred_region
        _
      $region20: #{double_conv_forward.4} parent=11 // pred_fallthru
        _
      // Predicated region
      $region21: #{double_conv_forward.4} parent=11 // pred_check
        %p241 = pneg %p115
      $region22: #{double_conv_forward.4} parent=11 // pred_check_branch
        %243 = sbr.rel (%p241) target = $region24
      $region23: #{double_conv_forward.4} parent=11 // pred_region
        _
      $region24: #{double_conv_forward.4} parent=11 // pred_fallthru
        _
      // Predicated region
      $region25: #{double_conv_forward.4} parent=11 // pred_check
        %p244 = pneg %p136
      $region26: #{double_conv_forward.4} parent=11 // pred_check_branch
        %246 = sbr.rel (%p244) target = $region28
      $region27: #{double_conv_forward.4} parent=11 // pred_region
        _
      $region28: #{double_conv_forward.4} parent=11 // pred_fallthru
        _
    $region12: #{double_conv_forward.4} parent=5 // pred_fallthru
      _
    %p247 = scmp.lt.s32.totalorder %s14, 4
    // Predicated region
    $region29: #{double_conv_forward.4} parent=5 // pred_check
      %p248 = pneg %p247
    $region30: #{double_conv_forward.4} parent=5 // pred_check_branch
      %250 = sbr.rel (%p248) target = $region32
    $region31: #{double_conv_forward.4} parent=5 // pred_region
      // Predicated region
      $region33: #{double_conv_forward.4} parent=31 // pred_check
        %p251 = pneg %p46
      $region34: #{double_conv_forward.4} parent=31 // pred_check_branch
        %253 = sbr.rel (%p251) target = $region36
      $region35: #{double_conv_forward.4} parent=31 // pred_region
        %p254 = scmp.lt.s32.totalorder %s21, 1
        %s255 = scalar_select %p254, %s21, 1
        %s256 = smul.addr %s255, 54
        %s257 = smul.addr %s256, 4
        %s258 = scalar_lea.vmem %s0, %s257
      $region36: #{double_conv_forward.4} parent=31 // pred_fallthru
        _
    $region32: #{double_conv_forward.4} parent=5 // pred_fallthru
      _
    %p259 = scmp.le.s32.totalorder 1, %s14
    %p260 = scmp.lt.s32.totalorder %s14, 5
    %p261 = pnand %p259, %p260
    %p262 = pneg %p261
    // Predicated region
    $region37: #{double_conv_forward.4} parent=5 // pred_check
      _
    $region38: #{double_conv_forward.4} parent=5 // pred_check_branch
      %264 = sbr.rel (%p261) target = $region40
    $region39: #{double_conv_forward.4} parent=5 // pred_region
      %s265 = ssub.s32 %s14, 1
      %p266 = scmp.lt.s32.totalorder %s23, 1
      %s267 = scalar_select %p266, %s23, 1
      %s268 = smul.addr %s267, 54
      %s269 = smul.addr %s268, 4
      %s270 = scalar_lea.vmem %s0, %s269
      %p271 = pneg %p52
      %p272 = pneg %p49
      %p273 = pneg %p73
      %p274 = pneg %p70
      %p275 = pneg %p94
      %p276 = pneg %p91
      %p277 = pneg %p115
      %p278 = pneg %p112
      %p279 = pneg %p136
      %p280 = pneg %p133
      %p281 = pneg %p164
      %p282 = pneg %p161
      %s283 = smul.u32 8, %s24
      %p284 = scmp.lt.s32.totalorder %s23, 1
      %s285 = scalar_select %p284, %s23, 1
      %p286 = scmp.lt.s32.totalorder %s283, 15
      %s287 = scalar_select %p286, %s283, 15
      %s288 = smul.addr %s287, 2
      %s289 = smul.addr %s285, 32
      %s290 = sadd.s32 %s288, %s289
      %s291 = smul.addr %s290, 8
      %s292 = scalar_lea.vmem %s5, %s291
      %p293 = pneg %p192
      %p294 = pneg %p189
      %p295 = scmp.lt.s32.totalorder %s23, 1
      %s296 = scalar_select %p295, %s23, 1
      %p297 = scmp.lt.s32.totalorder %s24, 1
      %s298 = scalar_select %p297, %s24, 1
      %s299 = smul.addr %s296, 2
      %s300 = sadd.s32 %s298, %s299
      %s301 = scalar_lea.vmem %s6, %s300
      %p302 = pneg %p220
      %p303 = pneg %p217
      %p304 = scmp.lt.s32.totalorder %s23, 1
      %s305 = scalar_select %p304, %s23, 1
      %p306 = scmp.lt.s32.totalorder %s24, 1
      %s307 = scalar_select %p306, %s24, 1
      %s308 = smul.addr %s305, 2
      %s309 = sadd.s32 %s307, %s308
      %s310 = scalar_lea.vmem %s7, %s309
      %p311 = scmp.lt.s32.totalorder %s23, 1
      %s312 = scalar_select %p311, %s23, 1
      %s313 = smul.addr %s312, 54
      %s314 = smul.addr %s313, 4
      %s315 = scalar_lea.vmem %s0, %s314
      %s316 = smul.u32 8, %s24
      %p317 = scmp.lt.s32.totalorder %s23, 1
      %s318 = scalar_select %p317, %s23, 1
      %p319 = scmp.lt.s32.totalorder %s316, 15
      %s320 = scalar_select %p319, %s316, 15
      %s321 = smul.addr %s320, 2
      %s322 = smul.addr %s318, 32
      %s323 = sadd.s32 %s321, %s322
      %s324 = smul.addr %s323, 8
      %s325 = scalar_lea.vmem %s5, %s324
      %s326 = smul.u32 8, %s24
      %p327 = scmp.lt.s32.totalorder %s23, 1
      %s328 = scalar_select %p327, %s23, 1
      %p329 = scmp.lt.s32.totalorder %s24, 1
      %s330 = scalar_select %p329, %s24, 1
      %s331 = smul.addr %s328, 2
      %s332 = sadd.s32 %s330, %s331
      %s333 = scalar_lea.vmem %s6, %s332
      %p334 = scmp.lt.s32.totalorder %s23, 1
      %s335 = scalar_select %p334, %s23, 1
      %p336 = scmp.lt.s32.totalorder %s24, 1
      %s337 = scalar_select %p336, %s24, 1
      %s338 = smul.addr %s335, 2
      %s339 = sadd.s32 %s337, %s338
      %s340 = scalar_lea.vmem %s7, %s339
      %p342 = scmp.eq.s32.totalorder %s24, 0
      // Predicated region
      $region41: #{double_conv_forward.4} parent=39 // pred_check
        %p343 = pneg %p342
      $region42: #{double_conv_forward.4} parent=39 // pred_check_branch
        %345 = sbr.rel (%p343) target = $region44
      $region43: #{double_conv_forward.4} parent=39 // pred_region
        %v346 = vld [vmem:[%s315] sm:$0xf]
        %v347 = vld [vmem:[%s315 + $0x4] sm:$0xf]
        %v348 = vld [vmem:[%s315 + $0x8] sm:$0x1]
        %v349 = vld [vmem:[%s315 + $0xc] sm:$0xf]
        %v350 = vld [vmem:[%s315 + $0x10] sm:$0xf]
        %v351 = vld [vmem:[%s315 + $0x14] sm:$0x1]
        %v352 = vld [vmem:[%s315 + $0x18] sm:$0xf]
        %v353 = vld [vmem:[%s315 + $0x1c] sm:$0xf]
        %v354 = vld [vmem:[%s315 + $0x20] sm:$0x1]
        %v355 = vld [vmem:[%s315 + $0x24] sm:$0xf]
        %v356 = vld [vmem:[%s315 + $0x28] sm:$0xf]
        %v357 = vld [vmem:[%s315 + $0x2c] sm:$0x1]
        %v358 = vld [vmem:[%s315 + $0x30] sm:$0xf]
        %v359 = vld [vmem:[%s315 + $0x34] sm:$0xf]
        %v360 = vld [vmem:[%s315 + $0x38] sm:$0x1]
        %v361 = vld [vmem:[%s315 + $0x3c] sm:$0xf]
        %v362 = vld [vmem:[%s315 + $0x40] sm:$0xf]
        %v363 = vld [vmem:[%s315 + $0x44] sm:$0x1]
        %v364 = vld [vmem:[%s315 + $0x48] sm:$0xf]
        %v365 = vld [vmem:[%s315 + $0x4c] sm:$0xf]
        %v366 = vld [vmem:[%s315 + $0x50] sm:$0x1]
        %v367 = vld [vmem:[%s315 + $0x54] sm:$0xf]
        %v368 = vld [vmem:[%s315 + $0x58] sm:$0xf]
        %v369 = vld [vmem:[%s315 + $0x5c] sm:$0x1]
        %v370 = vld [vmem:[%s315 + $0x60] sm:$0xf]
        %v371 = vld [vmem:[%s315 + $0x64] sm:$0xf]
        %v372 = vld [vmem:[%s315 + $0x68] sm:$0x1]
        %v373 = vld [vmem:[%s315 + $0x6c] sm:$0xf]
        %v374 = vld [vmem:[%s315 + $0x70] sm:$0xf]
        %v375 = vld [vmem:[%s315 + $0x74] sm:$0x1]
        %v376 = vld [vmem:[%s315 + $0x78] sm:$0xf]
        %v377 = vld [vmem:[%s315 + $0x7c] sm:$0xf]
        %v378 = vld [vmem:[%s315 + $0x80] sm:$0x1]
        %v379 = vld [vmem:[%s315 + $0x84] sm:$0xf]
        %v380 = vld [vmem:[%s315 + $0x88] sm:$0xf]
        %v381 = vld [vmem:[%s315 + $0x8c] sm:$0x1]
        %v382 = vld [vmem:[%s315 + $0x90] sm:$0xf]
        %v383 = vld [vmem:[%s315 + $0x94] sm:$0xf]
        %v384 = vld [vmem:[%s315 + $0x98] sm:$0x1]
        %v385 = vld [vmem:[%s315 + $0x9c] sm:$0xf]
        %v386 = vld [vmem:[%s315 + $0xa0] sm:$0xf]
        %v387 = vld [vmem:[%s315 + $0xa4] sm:$0x1]
        %v388 = vld [vmem:[%s315 + $0xa8] sm:$0xf]
        %v389 = vld [vmem:[%s315 + $0xac] sm:$0xf]
        %v390 = vld [vmem:[%s315 + $0xb0] sm:$0x1]
        %v391 = vld [vmem:[%s315 + $0xb4] sm:$0xf]
        %v392 = vld [vmem:[%s315 + $0xb8] sm:$0xf]
        %v393 = vld [vmem:[%s315 + $0xbc] sm:$0x1]
        %v394 = vld [vmem:[%s315 + $0xc0] sm:$0xf]
        %v395 = vld [vmem:[%s315 + $0xc4] sm:$0xf]
        %v396 = vld [vmem:[%s315 + $0xc8] sm:$0x1]
        %v397 = vld [vmem:[%s315 + $0xcc] sm:$0xf]
        %v398 = vld [vmem:[%s315 + $0xd0] sm:$0xf]
        %v399 = vld [vmem:[%s315 + $0xd4] sm:$0x1]
        %v400 = vunpack.c.l.bf16 %v346
        %v401 = vunpack.c.l.bf16 %v347
        %v402 = vunpack.c.l.bf16 %v348
        %v403 = vunpack.c.l.bf16 %v349
        %v404 = vunpack.c.l.bf16 %v350
        %v405 = vunpack.c.l.bf16 %v351
        %v406 = vunpack.c.l.bf16 %v352
        %v407 = vunpack.c.l.bf16 %v353
        %v408 = vunpack.c.l.bf16 %v354
        %v409 = vunpack.c.l.bf16 %v355
        %v410 = vunpack.c.l.bf16 %v356
        %v411 = vunpack.c.l.bf16 %v357
        %v412 = vunpack.c.l.bf16 %v358
        %v413 = vunpack.c.l.bf16 %v359
        %v414 = vunpack.c.l.bf16 %v360
        %v415 = vunpack.c.l.bf16 %v361
        %v416 = vunpack.c.l.bf16 %v362
        %v417 = vunpack.c.l.bf16 %v363
        %v418 = vunpack.c.l.bf16 %v364
        %v419 = vunpack.c.l.bf16 %v365
        %v420 = vunpack.c.l.bf16 %v366
        %v421 = vunpack.c.l.bf16 %v367
        %v422 = vunpack.c.l.bf16 %v368
        %v423 = vunpack.c.l.bf16 %v369
        %v424 = vunpack.c.l.bf16 %v370
        %v425 = vunpack.c.l.bf16 %v371
        %v426 = vunpack.c.l.bf16 %v372
        %v427 = vunpack.c.l.bf16 %v373
        %v428 = vunpack.c.l.bf16 %v374
        %v429 = vunpack.c.l.bf16 %v375
        %v430 = vunpack.c.l.bf16 %v376
        %v431 = vunpack.c.l.bf16 %v377
        %v432 = vunpack.c.l.bf16 %v378
        %v433 = vunpack.c.l.bf16 %v379
        %v434 = vunpack.c.l.bf16 %v380
        %v435 = vunpack.c.l.bf16 %v381
        %v436 = vunpack.c.l.bf16 %v382
        %v437 = vunpack.c.l.bf16 %v383
        %v438 = vunpack.c.l.bf16 %v384
        %v439 = vunpack.c.l.bf16 %v385
        %v440 = vunpack.c.l.bf16 %v386
        %v441 = vunpack.c.l.bf16 %v387
        %v442 = vunpack.c.l.bf16 %v388
        %v443 = vunpack.c.l.bf16 %v389
        %v444 = vunpack.c.l.bf16 %v390
        %v445 = vunpack.c.l.bf16 %v391
        %v446 = vunpack.c.l.bf16 %v392
        %v447 = vunpack.c.l.bf16 %v393
        %v448 = vunpack.c.l.bf16 %v394
        %v449 = vunpack.c.l.bf16 %v395
        %v450 = vunpack.c.l.bf16 %v396
        %v451 = vunpack.c.l.bf16 %v397
        %v452 = vunpack.c.l.bf16 %v398
        %v453 = vunpack.c.l.bf16 %v399
        %v454 = vld [vmem:[%s3] sm:$0x1]
        %v456 = vperm.slane %v454, 0
        %v458 = vmul.f32 %v400, %v456
        %v459 = vmul.f32 %v401, %v456
        %v460 = vmul.f32 %v402, %v456
        %v461 = vmul.f32 %v403, %v456
        %v462 = vmul.f32 %v404, %v456
        %v463 = vmul.f32 %v405, %v456
        %v464 = vmul.f32 %v406, %v456
        %v465 = vmul.f32 %v407, %v456
        %v466 = vmul.f32 %v408, %v456
        %v467 = vmul.f32 %v409, %v456
        %v468 = vmul.f32 %v410, %v456
        %v469 = vmul.f32 %v411, %v456
        %v470 = vmul.f32 %v412, %v456
        %v471 = vmul.f32 %v413, %v456
        %v472 = vmul.f32 %v414, %v456
        %v473 = vmul.f32 %v415, %v456
        %v474 = vmul.f32 %v416, %v456
        %v475 = vmul.f32 %v417, %v456
        %v476 = vmul.f32 %v418, %v456
        %v477 = vmul.f32 %v419, %v456
        %v478 = vmul.f32 %v420, %v456
        %v479 = vmul.f32 %v421, %v456
        %v480 = vmul.f32 %v422, %v456
        %v481 = vmul.f32 %v423, %v456
        %v482 = vmul.f32 %v424, %v456
        %v483 = vmul.f32 %v425, %v456
        %v484 = vmul.f32 %v426, %v456
        %v485 = vmul.f32 %v427, %v456
        %v486 = vmul.f32 %v428, %v456
        %v487 = vmul.f32 %v429, %v456
        %v488 = vmul.f32 %v430, %v456
        %v489 = vmul.f32 %v431, %v456
        %v490 = vmul.f32 %v432, %v456
        %v491 = vmul.f32 %v433, %v456
        %v492 = vmul.f32 %v434, %v456
        %v493 = vmul.f32 %v435, %v456
        %v494 = vmul.f32 %v436, %v456
        %v495 = vmul.f32 %v437, %v456
        %v496 = vmul.f32 %v438, %v456
        %v497 = vmul.f32 %v439, %v456
        %v498 = vmul.f32 %v440, %v456
        %v499 = vmul.f32 %v441, %v456
        %v500 = vmul.f32 %v442, %v456
        %v501 = vmul.f32 %v443, %v456
        %v502 = vmul.f32 %v444, %v456
        %v503 = vmul.f32 %v445, %v456
        %v504 = vmul.f32 %v446, %v456
        %v505 = vmul.f32 %v447, %v456
        %v506 = vmul.f32 %v448, %v456
        %v507 = vmul.f32 %v449, %v456
        %v508 = vmul.f32 %v450, %v456
        %v509 = vmul.f32 %v451, %v456
        %v510 = vmul.f32 %v452, %v456
        %v511 = vmul.f32 %v453, %v456
        %v512 = vld [vmem:[%s4] sm:$0x1]
        %v514 = vperm.slane %v512, 0
        %v516 = vadd.f32 %v458, %v514
        %v517 = vadd.f32 %v459, %v514
        %v518 = vadd.f32 %v460, %v514
        %v519 = vadd.f32 %v461, %v514
        %v520 = vadd.f32 %v462, %v514
        %v521 = vadd.f32 %v463, %v514
        %v522 = vadd.f32 %v464, %v514
        %v523 = vadd.f32 %v465, %v514
        %v524 = vadd.f32 %v466, %v514
        %v525 = vadd.f32 %v467, %v514
        %v526 = vadd.f32 %v468, %v514
        %v527 = vadd.f32 %v469, %v514
        %v528 = vadd.f32 %v470, %v514
        %v529 = vadd.f32 %v471, %v514
        %v530 = vadd.f32 %v472, %v514
        %v531 = vadd.f32 %v473, %v514
        %v532 = vadd.f32 %v474, %v514
        %v533 = vadd.f32 %v475, %v514
        %v534 = vadd.f32 %v476, %v514
        %v535 = vadd.f32 %v477, %v514
        %v536 = vadd.f32 %v478, %v514
        %v537 = vadd.f32 %v479, %v514
        %v538 = vadd.f32 %v480, %v514
        %v539 = vadd.f32 %v481, %v514
        %v540 = vadd.f32 %v482, %v514
        %v541 = vadd.f32 %v483, %v514
        %v542 = vadd.f32 %v484, %v514
        %v543 = vadd.f32 %v485, %v514
        %v544 = vadd.f32 %v486, %v514
        %v545 = vadd.f32 %v487, %v514
        %v546 = vadd.f32 %v488, %v514
        %v547 = vadd.f32 %v489, %v514
        %v548 = vadd.f32 %v490, %v514
        %v549 = vadd.f32 %v491, %v514
        %v550 = vadd.f32 %v492, %v514
        %v551 = vadd.f32 %v493, %v514
        %v552 = vadd.f32 %v494, %v514
        %v553 = vadd.f32 %v495, %v514
        %v554 = vadd.f32 %v496, %v514
        %v555 = vadd.f32 %v497, %v514
        %v556 = vadd.f32 %v498, %v514
        %v557 = vadd.f32 %v499, %v514
        %v558 = vadd.f32 %v500, %v514
        %v559 = vadd.f32 %v501, %v514
        %v560 = vadd.f32 %v502, %v514
        %v561 = vadd.f32 %v503, %v514
        %v562 = vadd.f32 %v504, %v514
        %v563 = vadd.f32 %v505, %v514
        %v564 = vadd.f32 %v506, %v514
        %v565 = vadd.f32 %v507, %v514
        %v566 = vadd.f32 %v508, %v514
        %v567 = vadd.f32 %v509, %v514
        %v568 = vadd.f32 %v510, %v514
        %v569 = vadd.f32 %v511, %v514
        %v570 = vmax.f32 %v516, 0.0
        %v571 = vmax.f32 %v517, 0.0
        %v572 = vmax.f32 %v518, 0.0
        %v573 = vmax.f32 %v519, 0.0
        %v574 = vmax.f32 %v520, 0.0
        %v575 = vmax.f32 %v521, 0.0
        %v576 = vmax.f32 %v522, 0.0
        %v577 = vmax.f32 %v523, 0.0
        %v578 = vmax.f32 %v524, 0.0
        %v579 = vmax.f32 %v525, 0.0
        %v580 = vmax.f32 %v526, 0.0
        %v581 = vmax.f32 %v527, 0.0
        %v582 = vmax.f32 %v528, 0.0
        %v583 = vmax.f32 %v529, 0.0
        %v584 = vmax.f32 %v530, 0.0
        %v585 = vmax.f32 %v531, 0.0
        %v586 = vmax.f32 %v532, 0.0
        %v587 = vmax.f32 %v533, 0.0
        %v588 = vmax.f32 %v534, 0.0
        %v589 = vmax.f32 %v535, 0.0
        %v590 = vmax.f32 %v536, 0.0
        %v591 = vmax.f32 %v537, 0.0
        %v592 = vmax.f32 %v538, 0.0
        %v593 = vmax.f32 %v539, 0.0
        %v594 = vmax.f32 %v540, 0.0
        %v595 = vmax.f32 %v541, 0.0
        %v596 = vmax.f32 %v542, 0.0
        %v597 = vmax.f32 %v543, 0.0
        %v598 = vmax.f32 %v544, 0.0
        %v599 = vmax.f32 %v545, 0.0
        %v600 = vmax.f32 %v546, 0.0
        %v601 = vmax.f32 %v547, 0.0
        %v602 = vmax.f32 %v548, 0.0
        %v603 = vmax.f32 %v549, 0.0
        %v604 = vmax.f32 %v550, 0.0
        %v605 = vmax.f32 %v551, 0.0
        %v606 = vmax.f32 %v552, 0.0
        %v607 = vmax.f32 %v553, 0.0
        %v608 = vmax.f32 %v554, 0.0
        %v609 = vmax.f32 %v555, 0.0
        %v610 = vmax.f32 %v556, 0.0
        %v611 = vmax.f32 %v557, 0.0
        %v612 = vmax.f32 %v558, 0.0
        %v613 = vmax.f32 %v559, 0.0
        %v614 = vmax.f32 %v560, 0.0
        %v615 = vmax.f32 %v561, 0.0
        %v616 = vmax.f32 %v562, 0.0
        %v617 = vmax.f32 %v563, 0.0
        %v618 = vmax.f32 %v564, 0.0
        %v619 = vmax.f32 %v565, 0.0
        %v620 = vmax.f32 %v566, 0.0
        %v621 = vmax.f32 %v567, 0.0
        %v622 = vmax.f32 %v568, 0.0
        %v623 = vmax.f32 %v569, 0.0
        %v624 = vlaneseq
        %v625 = vshrl.u32 %v624, 7
        %v626 = vadd.s32 %v625, 8
        %v627 = vadd.s32 %v625, 16
        %vm628 = vcmp.ge.s32.totalorder %v625, 1
        %vm629 = vcmp.ge.s32.totalorder %v626, 1
        %vm630 = vcmp.ge.s32.totalorder %v627, 1
        %vm631 = vmand 0, %vm628
        %vm632 = vmand 0, %vm629
        %vm633 = vmand 0, %vm630
        %vm634 = vmand 1, %vm628
        %vm635 = vmand 1, %vm629
        %vm636 = vmand 1, %vm630
        %vm637 = vcmp.le.s32.totalorder %v625, 16
        %vm638 = vcmp.le.s32.totalorder %v626, 16
        %vm639 = vcmp.le.s32.totalorder %v627, 16
        %vm640 = vmand %vm631, %vm637
        %vm641 = vmand %vm632, %vm638
        %vm642 = vmand %vm633, %vm639
        %vm643 = vmand %vm634, %vm637
        %vm644 = vmand %vm635, %vm638
        %vm645 = vmand %vm636, %vm639
        %v646 = vsel %vm640, 1, 0
        %v647 = vsel %vm641, 1, 0
        %v648 = vsel %vm642, 1, 0
        %v649 = vsel %vm643, 1, 0
        %v650 = vsel %vm644, 1, 0
        %v651 = vsel %vm645, 1, 0
        %vm652 = vcmp.eq.s32.totalorder %v646, 1
        %vm653 = vcmp.eq.s32.totalorder %v647, 1
        %vm654 = vcmp.eq.s32.totalorder %v648, 1
        %vm655 = vcmp.eq.s32.totalorder %v649, 1
        %vm656 = vcmp.eq.s32.totalorder %v650, 1
        %vm657 = vcmp.eq.s32.totalorder %v651, 1
        %v658 = vsel %vm652, %v570, 0.0
        %v659 = vsel %vm653, %v571, 0.0
        %v660 = vsel %vm654, %v572, 0.0
        %v661 = vsel %vm655, %v573, 0.0
        %v662 = vsel %vm656, %v574, 0.0
        %v663 = vsel %vm657, %v575, 0.0
        %v664 = vsel %vm655, %v576, 0.0
        %v665 = vsel %vm656, %v577, 0.0
        %v666 = vsel %vm657, %v578, 0.0
        %v667 = vsel %vm655, %v579, 0.0
        %v668 = vsel %vm656, %v580, 0.0
        %v669 = vsel %vm657, %v581, 0.0
        %v670 = vsel %vm655, %v582, 0.0
        %v671 = vsel %vm656, %v583, 0.0
        %v672 = vsel %vm657, %v584, 0.0
        %v673 = vsel %vm655, %v585, 0.0
        %v674 = vsel %vm656, %v586, 0.0
        %v675 = vsel %vm657, %v587, 0.0
        %v676 = vsel %vm655, %v588, 0.0
        %v677 = vsel %vm656, %v589, 0.0
        %v678 = vsel %vm657, %v590, 0.0
        %v679 = vsel %vm655, %v591, 0.0
        %v680 = vsel %vm656, %v592, 0.0
        %v681 = vsel %vm657, %v593, 0.0
        %v682 = vsel %vm655, %v594, 0.0
        %v683 = vsel %vm656, %v595, 0.0
        %v684 = vsel %vm657, %v596, 0.0
        %v685 = vsel %vm655, %v597, 0.0
        %v686 = vsel %vm656, %v598, 0.0
        %v687 = vsel %vm657, %v599, 0.0
        %v688 = vsel %vm655, %v600, 0.0
        %v689 = vsel %vm656, %v601, 0.0
        %v690 = vsel %vm657, %v602, 0.0
        %v691 = vsel %vm655, %v603, 0.0
        %v692 = vsel %vm656, %v604, 0.0
        %v693 = vsel %vm657, %v605, 0.0
        %v694 = vsel %vm655, %v606, 0.0
        %v695 = vsel %vm656, %v607, 0.0
        %v696 = vsel %vm657, %v608, 0.0
        %v697 = vsel %vm655, %v609, 0.0
        %v698 = vsel %vm656, %v610, 0.0
        %v699 = vsel %vm657, %v611, 0.0
        %v700 = vsel %vm655, %v612, 0.0
        %v701 = vsel %vm656, %v613, 0.0
        %v702 = vsel %vm657, %v614, 0.0
        %v703 = vsel %vm655, %v615, 0.0
        %v704 = vsel %vm656, %v616, 0.0
        %v705 = vsel %vm657, %v617, 0.0
        %v706 = vsel %vm655, %v618, 0.0
        %v707 = vsel %vm656, %v619, 0.0
        %v708 = vsel %vm657, %v620, 0.0
        %v709 = vsel %vm652, %v621, 0.0
        %v710 = vsel %vm653, %v622, 0.0
        %v711 = vsel %vm654, %v623, 0.0
        %vm712 = vcmask 64512
        %713 = vst.msk [vmem:[#allocation2] sm:$0xff] %vm712, %v658
        %714 = vst.msk [vmem:[#allocation2 + $0x8] sm:$0xff] %vm712, %v659
        %vm715 = vcmask 58368
        %716 = vst.msk [vmem:[#allocation2 + $0x10] sm:$0x3] %vm715, %v660
        %717 = vst.msk [vmem:[#allocation2 + $0x18] sm:$0xff] %vm712, %v661
        %718 = vst.msk [vmem:[#allocation2 + $0x20] sm:$0xff] %vm712, %v662
        %719 = vst.msk [vmem:[#allocation2 + $0x28] sm:$0x3] %vm715, %v663
        %720 = vst.msk [vmem:[#allocation2 + $0x30] sm:$0xff] %vm712, %v664
        %721 = vst.msk [vmem:[#allocation2 + $0x38] sm:$0xff] %vm712, %v665
        %722 = vst.msk [vmem:[#allocation2 + $0x40] sm:$0x3] %vm715, %v666
        %723 = vst.msk [vmem:[#allocation2 + $0x48] sm:$0xff] %vm712, %v667
        %724 = vst.msk [vmem:[#allocation2 + $0x50] sm:$0xff] %vm712, %v668
        %725 = vst.msk [vmem:[#allocation2 + $0x58] sm:$0x3] %vm715, %v669
        %726 = vst.msk [vmem:[#allocation2 + $0x60] sm:$0xff] %vm712, %v670
        %727 = vst.msk [vmem:[#allocation2 + $0x68] sm:$0xff] %vm712, %v671
        %728 = vst.msk [vmem:[#allocation2 + $0x70] sm:$0x3] %vm715, %v672
        %729 = vst.msk [vmem:[#allocation2 + $0x78] sm:$0xff] %vm712, %v673
        %730 = vst.msk [vmem:[#allocation2 + $0x80] sm:$0xff] %vm712, %v674
        %731 = vst.msk [vmem:[#allocation2 + $0x88] sm:$0x3] %vm715, %v675
        %732 = vst.msk [vmem:[#allocation2 + $0x90] sm:$0xff] %vm712, %v676
        %733 = vst.msk [vmem:[#allocation2 + $0x98] sm:$0xff] %vm712, %v677
        %734 = vst.msk [vmem:[#allocation2 + $0xa0] sm:$0x3] %vm715, %v678
        %735 = vst.msk [vmem:[#allocation2 + $0xa8] sm:$0xff] %vm712, %v679
        %736 = vst.msk [vmem:[#allocation2 + $0xb0] sm:$0xff] %vm712, %v680
        %737 = vst.msk [vmem:[#allocation2 + $0xb8] sm:$0x3] %vm715, %v681
        %738 = vst.msk [vmem:[#allocation2 + $0xc0] sm:$0xff] %vm712, %v682
        %739 = vst.msk [vmem:[#allocation2 + $0xc8] sm:$0xff] %vm712, %v683
        %740 = vst.msk [vmem:[#allocation2 + $0xd0] sm:$0x3] %vm715, %v684
        %741 = vst.msk [vmem:[#allocation2 + $0xd8] sm:$0xff] %vm712, %v685
        %742 = vst.msk [vmem:[#allocation2 + $0xe0] sm:$0xff] %vm712, %v686
        %743 = vst.msk [vmem:[#allocation2 + $0xe8] sm:$0x3] %vm715, %v687
        %744 = vst.msk [vmem:[#allocation2 + $0xf0] sm:$0xff] %vm712, %v688
        %745 = vst.msk [vmem:[#allocation2 + $0xf8] sm:$0xff] %vm712, %v689
        %746 = vst.msk [vmem:[#allocation2 + $0x100] sm:$0x3] %vm715, %v690
        %747 = vst.msk [vmem:[#allocation2 + $0x108] sm:$0xff] %vm712, %v691
        %748 = vst.msk [vmem:[#allocation2 + $0x110] sm:$0xff] %vm712, %v692
        %749 = vst.msk [vmem:[#allocation2 + $0x118] sm:$0x3] %vm715, %v693
        %750 = vst.msk [vmem:[#allocation2 + $0x120] sm:$0xff] %vm712, %v694
        %751 = vst.msk [vmem:[#allocation2 + $0x128] sm:$0xff] %vm712, %v695
        %752 = vst.msk [vmem:[#allocation2 + $0x130] sm:$0x3] %vm715, %v696
        %753 = vst.msk [vmem:[#allocation2 + $0x138] sm:$0xff] %vm712, %v697
        %754 = vst.msk [vmem:[#allocation2 + $0x140] sm:$0xff] %vm712, %v698
        %755 = vst.msk [vmem:[#allocation2 + $0x148] sm:$0x3] %vm715, %v699
        %756 = vst.msk [vmem:[#allocation2 + $0x150] sm:$0xff] %vm712, %v700
        %757 = vst.msk [vmem:[#allocation2 + $0x158] sm:$0xff] %vm712, %v701
        %758 = vst.msk [vmem:[#allocation2 + $0x160] sm:$0x3] %vm715, %v702
        %759 = vst.msk [vmem:[#allocation2 + $0x168] sm:$0xff] %vm712, %v703
        %760 = vst.msk [vmem:[#allocation2 + $0x170] sm:$0xff] %vm712, %v704
        %761 = vst.msk [vmem:[#allocation2 + $0x178] sm:$0x3] %vm715, %v705
        %762 = vst.msk [vmem:[#allocation2 + $0x180] sm:$0xff] %vm712, %v706
        %763 = vst.msk [vmem:[#allocation2 + $0x188] sm:$0xff] %vm712, %v707
        %764 = vst.msk [vmem:[#allocation2 + $0x190] sm:$0x3] %vm715, %v708
        %765 = vst.msk [vmem:[#allocation2 + $0x198] sm:$0xff] %vm712, %v709
        %766 = vst.msk [vmem:[#allocation2 + $0x1a0] sm:$0xff] %vm712, %v710
        %767 = vst.msk [vmem:[#allocation2 + $0x1a8] sm:$0x3] %vm715, %v711
      $region44: #{double_conv_forward.4} parent=39 // pred_fallthru
        _
      %s768 = smul.u32 %s24, 8
      %s769 = smul.u32 %s768, 24
      %s770 = scalar_lea.vmem [#allocation2], %s769
      %v771 = vld [vmem:[%s770] sm:$0xff]
      %v772 = vld [vmem:[%s770 + $0x8] sm:$0xff]
      %v773 = vld [vmem:[%s770 + $0x18] sm:$0xff]
      %v774 = vld [vmem:[%s770 + $0x20] sm:$0xff]
      %v775 = vld [vmem:[%s770 + $0x30] sm:$0xff]
      %v776 = vld [vmem:[%s770 + $0x38] sm:$0xff]
      %v777 = vld [vmem:[%s770 + $0x48] sm:$0xff]
      %v778 = vld [vmem:[%s770 + $0x50] sm:$0xff]
      %v779 = vld [vmem:[%s770 + $0x60] sm:$0xff]
      %v780 = vld [vmem:[%s770 + $0x68] sm:$0xff]
      %v781 = vld [vmem:[%s770 + $0x78] sm:$0xff]
      %v782 = vld [vmem:[%s770 + $0x80] sm:$0xff]
      %v783 = vld [vmem:[%s770 + $0x90] sm:$0xff]
      %v784 = vld [vmem:[%s770 + $0x98] sm:$0xff]
      %v785 = vld [vmem:[%s770 + $0xa8] sm:$0xff]
      %v786 = vld [vmem:[%s770 + $0xb0] sm:$0xff]
      %v787 = vld [vmem:[%s770 + $0x1] sm:$0xff]
      %v788 = vld [vmem:[%s770 + $0x9] sm:$0xff]
      %v789 = vld [vmem:[%s770 + $0x19] sm:$0xff]
      %v790 = vld [vmem:[%s770 + $0x21] sm:$0xff]
      %v791 = vld [vmem:[%s770 + $0x31] sm:$0xff]
      %v792 = vld [vmem:[%s770 + $0x39] sm:$0xff]
      %v793 = vld [vmem:[%s770 + $0x49] sm:$0xff]
      %v794 = vld [vmem:[%s770 + $0x51] sm:$0xff]
      %v795 = vld [vmem:[%s770 + $0x61] sm:$0xff]
      %v796 = vld [vmem:[%s770 + $0x69] sm:$0xff]
      %v797 = vld [vmem:[%s770 + $0x79] sm:$0xff]
      %v798 = vld [vmem:[%s770 + $0x81] sm:$0xff]
      %v799 = vld [vmem:[%s770 + $0x91] sm:$0xff]
      %v800 = vld [vmem:[%s770 + $0x99] sm:$0xff]
      %v801 = vld [vmem:[%s770 + $0xa9] sm:$0xff]
      %v802 = vld [vmem:[%s770 + $0xb1] sm:$0xff]
      %v803 = vld [vmem:[%s770 + $0x2] sm:$0xff]
      %v804 = vld [vmem:[%s770 + $0xa] sm:$0xff]
      %v805 = vld [vmem:[%s770 + $0x1a] sm:$0xff]
      %v806 = vld [vmem:[%s770 + $0x22] sm:$0xff]
      %v807 = vld [vmem:[%s770 + $0x32] sm:$0xff]
      %v808 = vld [vmem:[%s770 + $0x3a] sm:$0xff]
      %v809 = vld [vmem:[%s770 + $0x4a] sm:$0xff]
      %v810 = vld [vmem:[%s770 + $0x52] sm:$0xff]
      %v811 = vld [vmem:[%s770 + $0x62] sm:$0xff]
      %v812 = vld [vmem:[%s770 + $0x6a] sm:$0xff]
      %v813 = vld [vmem:[%s770 + $0x7a] sm:$0xff]
      %v814 = vld [vmem:[%s770 + $0x82] sm:$0xff]
      %v815 = vld [vmem:[%s770 + $0x92] sm:$0xff]
      %v816 = vld [vmem:[%s770 + $0x9a] sm:$0xff]
      %v817 = vld [vmem:[%s770 + $0xaa] sm:$0xff]
      %v818 = vld [vmem:[%s770 + $0xb2] sm:$0xff]
      %s819 = sadd.s32 %s768, 1
      %s820 = smul.u32 %s819, 24
      %s821 = scalar_lea.vmem [#allocation2], %s820
      %v822 = vld [vmem:[%s821] sm:$0xff]
      %v823 = vld [vmem:[%s821 + $0x8] sm:$0xff]
      %v824 = vld [vmem:[%s821 + $0x18] sm:$0xff]
      %v825 = vld [vmem:[%s821 + $0x20] sm:$0xff]
      %v826 = vld [vmem:[%s821 + $0x30] sm:$0xff]
      %v827 = vld [vmem:[%s821 + $0x38] sm:$0xff]
      %v828 = vld [vmem:[%s821 + $0x48] sm:$0xff]
      %v829 = vld [vmem:[%s821 + $0x50] sm:$0xff]
      %v830 = vld [vmem:[%s821 + $0x60] sm:$0xff]
      %v831 = vld [vmem:[%s821 + $0x68] sm:$0xff]
      %v832 = vld [vmem:[%s821 + $0x78] sm:$0xff]
      %v833 = vld [vmem:[%s821 + $0x80] sm:$0xff]
      %v834 = vld [vmem:[%s821 + $0x90] sm:$0xff]
      %v835 = vld [vmem:[%s821 + $0x98] sm:$0xff]
      %v836 = vld [vmem:[%s821 + $0xa8] sm:$0xff]
      %v837 = vld [vmem:[%s821 + $0xb0] sm:$0xff]
      %v838 = vld [vmem:[%s821 + $0x1] sm:$0xff]
      %v839 = vld [vmem:[%s821 + $0x9] sm:$0xff]
      %v840 = vld [vmem:[%s821 + $0x19] sm:$0xff]
      %v841 = vld [vmem:[%s821 + $0x21] sm:$0xff]
      %v842 = vld [vmem:[%s821 + $0x31] sm:$0xff]
      %v843 = vld [vmem:[%s821 + $0x39] sm:$0xff]
      %v844 = vld [vmem:[%s821 + $0x49] sm:$0xff]
      %v845 = vld [vmem:[%s821 + $0x51] sm:$0xff]
      %v846 = vld [vmem:[%s821 + $0x61] sm:$0xff]
      %v847 = vld [vmem:[%s821 + $0x69] sm:$0xff]
      %v848 = vld [vmem:[%s821 + $0x79] sm:$0xff]
      %v849 = vld [vmem:[%s821 + $0x81] sm:$0xff]
      %v850 = vld [vmem:[%s821 + $0x91] sm:$0xff]
      %v851 = vld [vmem:[%s821 + $0x99] sm:$0xff]
      %v852 = vld [vmem:[%s821 + $0xa9] sm:$0xff]
      %v853 = vld [vmem:[%s821 + $0xb1] sm:$0xff]
      %v854 = vld [vmem:[%s821 + $0x2] sm:$0xff]
      %v855 = vld [vmem:[%s821 + $0xa] sm:$0xff]
      %v856 = vld [vmem:[%s821 + $0x1a] sm:$0xff]
      %v857 = vld [vmem:[%s821 + $0x22] sm:$0xff]
      %v858 = vld [vmem:[%s821 + $0x32] sm:$0xff]
      %v859 = vld [vmem:[%s821 + $0x3a] sm:$0xff]
      %v860 = vld [vmem:[%s821 + $0x4a] sm:$0xff]
      %v861 = vld [vmem:[%s821 + $0x52] sm:$0xff]
      %v862 = vld [vmem:[%s821 + $0x62] sm:$0xff]
      %v863 = vld [vmem:[%s821 + $0x6a] sm:$0xff]
      %v864 = vld [vmem:[%s821 + $0x7a] sm:$0xff]
      %v865 = vld [vmem:[%s821 + $0x82] sm:$0xff]
      %v866 = vld [vmem:[%s821 + $0x92] sm:$0xff]
      %v867 = vld [vmem:[%s821 + $0x9a] sm:$0xff]
      %v868 = vld [vmem:[%s821 + $0xaa] sm:$0xff]
      %v869 = vld [vmem:[%s821 + $0xb2] sm:$0xff]
      %s870 = sadd.s32 %s768, 2
      %s871 = smul.u32 %s870, 24
      %s872 = scalar_lea.vmem [#allocation2], %s871
      %v873 = vld [vmem:[%s872] sm:$0xff]
      %v874 = vld [vmem:[%s872 + $0x8] sm:$0xff]
      %v875 = vld [vmem:[%s872 + $0x18] sm:$0xff]
      %v876 = vld [vmem:[%s872 + $0x20] sm:$0xff]
      %v877 = vld [vmem:[%s872 + $0x30] sm:$0xff]
      %v878 = vld [vmem:[%s872 + $0x38] sm:$0xff]
      %v879 = vld [vmem:[%s872 + $0x48] sm:$0xff]
      %v880 = vld [vmem:[%s872 + $0x50] sm:$0xff]
      %v881 = vld [vmem:[%s872 + $0x60] sm:$0xff]
      %v882 = vld [vmem:[%s872 + $0x68] sm:$0xff]
      %v883 = vld [vmem:[%s872 + $0x78] sm:$0xff]
      %v884 = vld [vmem:[%s872 + $0x80] sm:$0xff]
      %v885 = vld [vmem:[%s872 + $0x90] sm:$0xff]
      %v886 = vld [vmem:[%s872 + $0x98] sm:$0xff]
      %v887 = vld [vmem:[%s872 + $0xa8] sm:$0xff]
      %v888 = vld [vmem:[%s872 + $0xb0] sm:$0xff]
      %v889 = vld [vmem:[%s872 + $0x1] sm:$0xff]
      %v890 = vld [vmem:[%s872 + $0x9] sm:$0xff]
      %v891 = vld [vmem:[%s872 + $0x19] sm:$0xff]
      %v892 = vld [vmem:[%s872 + $0x21] sm:$0xff]
      %v893 = vld [vmem:[%s872 + $0x31] sm:$0xff]
      %v894 = vld [vmem:[%s872 + $0x39] sm:$0xff]
      %v895 = vld [vmem:[%s872 + $0x49] sm:$0xff]
      %v896 = vld [vmem:[%s872 + $0x51] sm:$0xff]
      %v897 = vld [vmem:[%s872 + $0x61] sm:$0xff]
      %v898 = vld [vmem:[%s872 + $0x69] sm:$0xff]
      %v899 = vld [vmem:[%s872 + $0x79] sm:$0xff]
      %v900 = vld [vmem:[%s872 + $0x81] sm:$0xff]
      %v901 = vld [vmem:[%s872 + $0x91] sm:$0xff]
      %v902 = vld [vmem:[%s872 + $0x99] sm:$0xff]
      %v903 = vld [vmem:[%s872 + $0xa9] sm:$0xff]
      %v904 = vld [vmem:[%s872 + $0xb1] sm:$0xff]
      %v905 = vld [vmem:[%s872 + $0x2] sm:$0xff]
      %v906 = vld [vmem:[%s872 + $0xa] sm:$0xff]
      %v907 = vld [vmem:[%s872 + $0x1a] sm:$0xff]
      %v908 = vld [vmem:[%s872 + $0x22] sm:$0xff]
      %v909 = vld [vmem:[%s872 + $0x32] sm:$0xff]
      %v910 = vld [vmem:[%s872 + $0x3a] sm:$0xff]
      %v911 = vld [vmem:[%s872 + $0x4a] sm:$0xff]
      %v912 = vld [vmem:[%s872 + $0x52] sm:$0xff]
      %v913 = vld [vmem:[%s872 + $0x62] sm:$0xff]
      %v914 = vld [vmem:[%s872 + $0x6a] sm:$0xff]
      %v915 = vld [vmem:[%s872 + $0x7a] sm:$0xff]
      %v916 = vld [vmem:[%s872 + $0x82] sm:$0xff]
      %v917 = vld [vmem:[%s872 + $0x92] sm:$0xff]
      %v918 = vld [vmem:[%s872 + $0x9a] sm:$0xff]
      %v919 = vld [vmem:[%s872 + $0xaa] sm:$0xff]
      %v920 = vld [vmem:[%s872 + $0xb2] sm:$0xff]
      %937 = vrot.lane.b32.xlu0 %v787, 8
      %v938 = vpop.permute.xlu0 %937
      %939 = vrot.lane.b32.xlu0 %v788, 8
      %v940 = vpop.permute.xlu0 %939
      %941 = vrot.lane.b32.xlu0 %v789, 8
      %v942 = vpop.permute.xlu0 %941
      %943 = vrot.lane.b32.xlu0 %v790, 8
      %v944 = vpop.permute.xlu0 %943
      %945 = vrot.lane.b32.xlu0 %v791, 8
      %v946 = vpop.permute.xlu0 %945
      %947 = vrot.lane.b32.xlu0 %v792, 8
      %v948 = vpop.permute.xlu0 %947
      %949 = vrot.lane.b32.xlu0 %v793, 8
      %v950 = vpop.permute.xlu0 %949
      %951 = vrot.lane.b32.xlu0 %v794, 8
      %v952 = vpop.permute.xlu0 %951
      %953 = vrot.lane.b32.xlu0 %v795, 8
      %v954 = vpop.permute.xlu0 %953
      %955 = vrot.lane.b32.xlu0 %v796, 8
      %v956 = vpop.permute.xlu0 %955
      %957 = vrot.lane.b32.xlu0 %v797, 8
      %v958 = vpop.permute.xlu0 %957
      %959 = vrot.lane.b32.xlu0 %v798, 8
      %v960 = vpop.permute.xlu0 %959
      %961 = vrot.lane.b32.xlu0 %v799, 8
      %v962 = vpop.permute.xlu0 %961
      %963 = vrot.lane.b32.xlu0 %v800, 8
      %v964 = vpop.permute.xlu0 %963
      %965 = vrot.lane.b32.xlu0 %v801, 8
      %v966 = vpop.permute.xlu0 %965
      %967 = vrot.lane.b32.xlu0 %v802, 8
      %v968 = vpop.permute.xlu0 %967
      %1001 = vrot.lane.b32.xlu0 %v803, 16
      %v1002 = vpop.permute.xlu0 %1001
      %1003 = vrot.lane.b32.xlu0 %v804, 16
      %v1004 = vpop.permute.xlu0 %1003
      %1005 = vrot.lane.b32.xlu0 %v805, 16
      %v1006 = vpop.permute.xlu0 %1005
      %1007 = vrot.lane.b32.xlu0 %v806, 16
      %v1008 = vpop.permute.xlu0 %1007
      %1009 = vrot.lane.b32.xlu0 %v807, 16
      %v1010 = vpop.permute.xlu0 %1009
      %1011 = vrot.lane.b32.xlu0 %v808, 16
      %v1012 = vpop.permute.xlu0 %1011
      %1013 = vrot.lane.b32.xlu0 %v809, 16
      %v1014 = vpop.permute.xlu0 %1013
      %1015 = vrot.lane.b32.xlu0 %v810, 16
      %v1016 = vpop.permute.xlu0 %1015
      %1017 = vrot.lane.b32.xlu0 %v811, 16
      %v1018 = vpop.permute.xlu0 %1017
      %1019 = vrot.lane.b32.xlu0 %v812, 16
      %v1020 = vpop.permute.xlu0 %1019
      %1021 = vrot.lane.b32.xlu0 %v813, 16
      %v1022 = vpop.permute.xlu0 %1021
      %1023 = vrot.lane.b32.xlu0 %v814, 16
      %v1024 = vpop.permute.xlu0 %1023
      %1025 = vrot.lane.b32.xlu0 %v815, 16
      %v1026 = vpop.permute.xlu0 %1025
      %1027 = vrot.lane.b32.xlu0 %v816, 16
      %v1028 = vpop.permute.xlu0 %1027
      %1029 = vrot.lane.b32.xlu0 %v817, 16
      %v1030 = vpop.permute.xlu0 %1029
      %1031 = vrot.lane.b32.xlu0 %v818, 16
      %v1032 = vpop.permute.xlu0 %1031
      %1065 = vrot.lane.b32.xlu0 %v822, 24
      %v1066 = vpop.permute.xlu0 %1065
      %1067 = vrot.lane.b32.xlu0 %v823, 24
      %v1068 = vpop.permute.xlu0 %1067
      %1069 = vrot.lane.b32.xlu0 %v824, 24
      %v1070 = vpop.permute.xlu0 %1069
      %1071 = vrot.lane.b32.xlu0 %v825, 24
      %v1072 = vpop.permute.xlu0 %1071
      %1073 = vrot.lane.b32.xlu0 %v826, 24
      %v1074 = vpop.permute.xlu0 %1073
      %1075 = vrot.lane.b32.xlu0 %v827, 24
      %v1076 = vpop.permute.xlu0 %1075
      %1077 = vrot.lane.b32.xlu0 %v828, 24
      %v1078 = vpop.permute.xlu0 %1077
      %1079 = vrot.lane.b32.xlu0 %v829, 24
      %v1080 = vpop.permute.xlu0 %1079
      %1081 = vrot.lane.b32.xlu0 %v830, 24
      %v1082 = vpop.permute.xlu0 %1081
      %1083 = vrot.lane.b32.xlu0 %v831, 24
      %v1084 = vpop.permute.xlu0 %1083
      %1085 = vrot.lane.b32.xlu0 %v832, 24
      %v1086 = vpop.permute.xlu0 %1085
      %1087 = vrot.lane.b32.xlu0 %v833, 24
      %v1088 = vpop.permute.xlu0 %1087
      %1089 = vrot.lane.b32.xlu0 %v834, 24
      %v1090 = vpop.permute.xlu0 %1089
      %1091 = vrot.lane.b32.xlu0 %v835, 24
      %v1092 = vpop.permute.xlu0 %1091
      %1093 = vrot.lane.b32.xlu0 %v836, 24
      %v1094 = vpop.permute.xlu0 %1093
      %1095 = vrot.lane.b32.xlu0 %v837, 24
      %v1096 = vpop.permute.xlu0 %1095
      %1129 = vrot.lane.b32.xlu0 %v838, 32
      %v1130 = vpop.permute.xlu0 %1129
      %1131 = vrot.lane.b32.xlu0 %v839, 32
      %v1132 = vpop.permute.xlu0 %1131
      %1133 = vrot.lane.b32.xlu0 %v840, 32
      %v1134 = vpop.permute.xlu0 %1133
      %1135 = vrot.lane.b32.xlu0 %v841, 32
      %v1136 = vpop.permute.xlu0 %1135
      %1137 = vrot.lane.b32.xlu0 %v842, 32
      %v1138 = vpop.permute.xlu0 %1137
      %1139 = vrot.lane.b32.xlu0 %v843, 32
      %v1140 = vpop.permute.xlu0 %1139
      %1141 = vrot.lane.b32.xlu0 %v844, 32
      %v1142 = vpop.permute.xlu0 %1141
      %1143 = vrot.lane.b32.xlu0 %v845, 32
      %v1144 = vpop.permute.xlu0 %1143
      %1145 = vrot.lane.b32.xlu0 %v846, 32
      %v1146 = vpop.permute.xlu0 %1145
      %1147 = vrot.lane.b32.xlu0 %v847, 32
      %v1148 = vpop.permute.xlu0 %1147
      %1149 = vrot.lane.b32.xlu0 %v848, 32
      %v1150 = vpop.permute.xlu0 %1149
      %1151 = vrot.lane.b32.xlu0 %v849, 32
      %v1152 = vpop.permute.xlu0 %1151
      %1153 = vrot.lane.b32.xlu0 %v850, 32
      %v1154 = vpop.permute.xlu0 %1153
      %1155 = vrot.lane.b32.xlu0 %v851, 32
      %v1156 = vpop.permute.xlu0 %1155
      %1157 = vrot.lane.b32.xlu0 %v852, 32
      %v1158 = vpop.permute.xlu0 %1157
      %1159 = vrot.lane.b32.xlu0 %v853, 32
      %v1160 = vpop.permute.xlu0 %1159
      %1193 = vrot.lane.b32.xlu0 %v854, 40
      %v1194 = vpop.permute.xlu0 %1193
      %1195 = vrot.lane.b32.xlu0 %v855, 40
      %v1196 = vpop.permute.xlu0 %1195
      %1197 = vrot.lane.b32.xlu0 %v856, 40
      %v1198 = vpop.permute.xlu0 %1197
      %1199 = vrot.lane.b32.xlu0 %v857, 40
      %v1200 = vpop.permute.xlu0 %1199
      %1201 = vrot.lane.b32.xlu0 %v858, 40
      %v1202 = vpop.permute.xlu0 %1201
      %1203 = vrot.lane.b32.xlu0 %v859, 40
      %v1204 = vpop.permute.xlu0 %1203
      %1205 = vrot.lane.b32.xlu0 %v860, 40
      %v1206 = vpop.permute.xlu0 %1205
      %1207 = vrot.lane.b32.xlu0 %v861, 40
      %v1208 = vpop.permute.xlu0 %1207
      %1209 = vrot.lane.b32.xlu0 %v862, 40
      %v1210 = vpop.permute.xlu0 %1209
      %1211 = vrot.lane.b32.xlu0 %v863, 40
      %v1212 = vpop.permute.xlu0 %1211
      %1213 = vrot.lane.b32.xlu0 %v864, 40
      %v1214 = vpop.permute.xlu0 %1213
      %1215 = vrot.lane.b32.xlu0 %v865, 40
      %v1216 = vpop.permute.xlu0 %1215
      %1217 = vrot.lane.b32.xlu0 %v866, 40
      %v1218 = vpop.permute.xlu0 %1217
      %1219 = vrot.lane.b32.xlu0 %v867, 40
      %v1220 = vpop.permute.xlu0 %1219
      %1221 = vrot.lane.b32.xlu0 %v868, 40
      %v1222 = vpop.permute.xlu0 %1221
      %1223 = vrot.lane.b32.xlu0 %v869, 40
      %v1224 = vpop.permute.xlu0 %1223
      %1257 = vrot.lane.b32.xlu0 %v873, 48
      %v1258 = vpop.permute.xlu0 %1257
      %1259 = vrot.lane.b32.xlu0 %v874, 48
      %v1260 = vpop.permute.xlu0 %1259
      %1261 = vrot.lane.b32.xlu0 %v875, 48
      %v1262 = vpop.permute.xlu0 %1261
      %1263 = vrot.lane.b32.xlu0 %v876, 48
      %v1264 = vpop.permute.xlu0 %1263
      %1265 = vrot.lane.b32.xlu0 %v877, 48
      %v1266 = vpop.permute.xlu0 %1265
      %1267 = vrot.lane.b32.xlu0 %v878, 48
      %v1268 = vpop.permute.xlu0 %1267
      %1269 = vrot.lane.b32.xlu0 %v879, 48
      %v1270 = vpop.permute.xlu0 %1269
      %1271 = vrot.lane.b32.xlu0 %v880, 48
      %v1272 = vpop.permute.xlu0 %1271
      %1273 = vrot.lane.b32.xlu0 %v881, 48
      %v1274 = vpop.permute.xlu0 %1273
      %1275 = vrot.lane.b32.xlu0 %v882, 48
      %v1276 = vpop.permute.xlu0 %1275
      %1277 = vrot.lane.b32.xlu0 %v883, 48
      %v1278 = vpop.permute.xlu0 %1277
      %1279 = vrot.lane.b32.xlu0 %v884, 48
      %v1280 = vpop.permute.xlu0 %1279
      %1281 = vrot.lane.b32.xlu0 %v885, 48
      %v1282 = vpop.permute.xlu0 %1281
      %1283 = vrot.lane.b32.xlu0 %v886, 48
      %v1284 = vpop.permute.xlu0 %1283
      %1285 = vrot.lane.b32.xlu0 %v887, 48
      %v1286 = vpop.permute.xlu0 %1285
      %1287 = vrot.lane.b32.xlu0 %v888, 48
      %v1288 = vpop.permute.xlu0 %1287
      %1321 = vrot.lane.b32.xlu0 %v889, 56
      %v1322 = vpop.permute.xlu0 %1321
      %1323 = vrot.lane.b32.xlu0 %v890, 56
      %v1324 = vpop.permute.xlu0 %1323
      %1325 = vrot.lane.b32.xlu0 %v891, 56
      %v1326 = vpop.permute.xlu0 %1325
      %1327 = vrot.lane.b32.xlu0 %v892, 56
      %v1328 = vpop.permute.xlu0 %1327
      %1329 = vrot.lane.b32.xlu0 %v893, 56
      %v1330 = vpop.permute.xlu0 %1329
      %1331 = vrot.lane.b32.xlu0 %v894, 56
      %v1332 = vpop.permute.xlu0 %1331
      %1333 = vrot.lane.b32.xlu0 %v895, 56
      %v1334 = vpop.permute.xlu0 %1333
      %1335 = vrot.lane.b32.xlu0 %v896, 56
      %v1336 = vpop.permute.xlu0 %1335
      %1337 = vrot.lane.b32.xlu0 %v897, 56
      %v1338 = vpop.permute.xlu0 %1337
      %1339 = vrot.lane.b32.xlu0 %v898, 56
      %v1340 = vpop.permute.xlu0 %1339
      %1341 = vrot.lane.b32.xlu0 %v899, 56
      %v1342 = vpop.permute.xlu0 %1341
      %1343 = vrot.lane.b32.xlu0 %v900, 56
      %v1344 = vpop.permute.xlu0 %1343
      %1345 = vrot.lane.b32.xlu0 %v901, 56
      %v1346 = vpop.permute.xlu0 %1345
      %1347 = vrot.lane.b32.xlu0 %v902, 56
      %v1348 = vpop.permute.xlu0 %1347
      %1349 = vrot.lane.b32.xlu0 %v903, 56
      %v1350 = vpop.permute.xlu0 %1349
      %1351 = vrot.lane.b32.xlu0 %v904, 56
      %v1352 = vpop.permute.xlu0 %1351
      %1385 = vrot.lane.b32.xlu0 %v905, 64
      %v1386 = vpop.permute.xlu0 %1385
      %1387 = vrot.lane.b32.xlu0 %v906, 64
      %v1388 = vpop.permute.xlu0 %1387
      %1389 = vrot.lane.b32.xlu0 %v907, 64
      %v1390 = vpop.permute.xlu0 %1389
      %1391 = vrot.lane.b32.xlu0 %v908, 64
      %v1392 = vpop.permute.xlu0 %1391
      %1393 = vrot.lane.b32.xlu0 %v909, 64
      %v1394 = vpop.permute.xlu0 %1393
      %1395 = vrot.lane.b32.xlu0 %v910, 64
      %v1396 = vpop.permute.xlu0 %1395
      %1397 = vrot.lane.b32.xlu0 %v911, 64
      %v1398 = vpop.permute.xlu0 %1397
      %1399 = vrot.lane.b32.xlu0 %v912, 64
      %v1400 = vpop.permute.xlu0 %1399
      %1401 = vrot.lane.b32.xlu0 %v913, 64
      %v1402 = vpop.permute.xlu0 %1401
      %1403 = vrot.lane.b32.xlu0 %v914, 64
      %v1404 = vpop.permute.xlu0 %1403
      %1405 = vrot.lane.b32.xlu0 %v915, 64
      %v1406 = vpop.permute.xlu0 %1405
      %1407 = vrot.lane.b32.xlu0 %v916, 64
      %v1408 = vpop.permute.xlu0 %1407
      %1409 = vrot.lane.b32.xlu0 %v917, 64
      %v1410 = vpop.permute.xlu0 %1409
      %1411 = vrot.lane.b32.xlu0 %v918, 64
      %v1412 = vpop.permute.xlu0 %1411
      %1413 = vrot.lane.b32.xlu0 %v919, 64
      %v1414 = vpop.permute.xlu0 %1413
      %1415 = vrot.lane.b32.xlu0 %v920, 64
      %v1416 = vpop.permute.xlu0 %1415
      %vm1433 = vcmask 64512
      %v1434 = vsel %vm1433, %v771, %v938
      %v1435 = vsel %vm1433, %v772, %v940
      %v1436 = vsel %vm1433, %v773, %v942
      %v1437 = vsel %vm1433, %v774, %v944
      %v1438 = vsel %vm1433, %v775, %v946
      %v1439 = vsel %vm1433, %v776, %v948
      %v1440 = vsel %vm1433, %v777, %v950
      %v1441 = vsel %vm1433, %v778, %v952
      %v1442 = vsel %vm1433, %v779, %v954
      %v1443 = vsel %vm1433, %v780, %v956
      %v1444 = vsel %vm1433, %v781, %v958
      %v1445 = vsel %vm1433, %v782, %v960
      %v1446 = vsel %vm1433, %v783, %v962
      %v1447 = vsel %vm1433, %v784, %v964
      %v1448 = vsel %vm1433, %v785, %v966
      %v1449 = vsel %vm1433, %v786, %v968
      %vm1450 = vcmask 130048
      %v1451 = vsel %vm1450, %v1434, %v1002
      %v1452 = vsel %vm1450, %v1435, %v1004
      %v1453 = vsel %vm1450, %v1436, %v1006
      %v1454 = vsel %vm1450, %v1437, %v1008
      %v1455 = vsel %vm1450, %v1438, %v1010
      %v1456 = vsel %vm1450, %v1439, %v1012
      %v1457 = vsel %vm1450, %v1440, %v1014
      %v1458 = vsel %vm1450, %v1441, %v1016
      %v1459 = vsel %vm1450, %v1442, %v1018
      %v1460 = vsel %vm1450, %v1443, %v1020
      %v1461 = vsel %vm1450, %v1444, %v1022
      %v1462 = vsel %vm1450, %v1445, %v1024
      %v1463 = vsel %vm1450, %v1446, %v1026
      %v1464 = vsel %vm1450, %v1447, %v1028
      %v1465 = vsel %vm1450, %v1448, %v1030
      %v1466 = vsel %vm1450, %v1449, %v1032
      %vm1467 = vcmask 195584
      %v1468 = vsel %vm1467, %v1451, %v1066
      %v1469 = vsel %vm1467, %v1452, %v1068
      %v1470 = vsel %vm1467, %v1453, %v1070
      %v1471 = vsel %vm1467, %v1454, %v1072
      %v1472 = vsel %vm1467, %v1455, %v1074
      %v1473 = vsel %vm1467, %v1456, %v1076
      %v1474 = vsel %vm1467, %v1457, %v1078
      %v1475 = vsel %vm1467, %v1458, %v1080
      %v1476 = vsel %vm1467, %v1459, %v1082
      %v1477 = vsel %vm1467, %v1460, %v1084
      %v1478 = vsel %vm1467, %v1461, %v1086
      %v1479 = vsel %vm1467, %v1462, %v1088
      %v1480 = vsel %vm1467, %v1463, %v1090
      %v1481 = vsel %vm1467, %v1464, %v1092
      %v1482 = vsel %vm1467, %v1465, %v1094
      %v1483 = vsel %vm1467, %v1466, %v1096
      %vm1484 = vcmask 261120
      %v1485 = vsel %vm1484, %v1468, %v1130
      %v1486 = vsel %vm1484, %v1469, %v1132
      %v1487 = vsel %vm1484, %v1470, %v1134
      %v1488 = vsel %vm1484, %v1471, %v1136
      %v1489 = vsel %vm1484, %v1472, %v1138
      %v1490 = vsel %vm1484, %v1473, %v1140
      %v1491 = vsel %vm1484, %v1474, %v1142
      %v1492 = vsel %vm1484, %v1475, %v1144
      %v1493 = vsel %vm1484, %v1476, %v1146
      %v1494 = vsel %vm1484, %v1477, %v1148
      %v1495 = vsel %vm1484, %v1478, %v1150
      %v1496 = vsel %vm1484, %v1479, %v1152
      %v1497 = vsel %vm1484, %v1480, %v1154
      %v1498 = vsel %vm1484, %v1481, %v1156
      %v1499 = vsel %vm1484, %v1482, %v1158
      %v1500 = vsel %vm1484, %v1483, %v1160
      %vm1501 = vcmask 326656
      %v1502 = vsel %vm1501, %v1485, %v1194
      %v1503 = vsel %vm1501, %v1486, %v1196
      %v1504 = vsel %vm1501, %v1487, %v1198
      %v1505 = vsel %vm1501, %v1488, %v1200
      %v1506 = vsel %vm1501, %v1489, %v1202
      %v1507 = vsel %vm1501, %v1490, %v1204
      %v1508 = vsel %vm1501, %v1491, %v1206
      %v1509 = vsel %vm1501, %v1492, %v1208
      %v1510 = vsel %vm1501, %v1493, %v1210
      %v1511 = vsel %vm1501, %v1494, %v1212
      %v1512 = vsel %vm1501, %v1495, %v1214
      %v1513 = vsel %vm1501, %v1496, %v1216
      %v1514 = vsel %vm1501, %v1497, %v1218
      %v1515 = vsel %vm1501, %v1498, %v1220
      %v1516 = vsel %vm1501, %v1499, %v1222
      %v1517 = vsel %vm1501, %v1500, %v1224
      %vm1518 = vcmask 392192
      %v1519 = vsel %vm1518, %v1502, %v1258
      %v1520 = vsel %vm1518, %v1503, %v1260
      %v1521 = vsel %vm1518, %v1504, %v1262
      %v1522 = vsel %vm1518, %v1505, %v1264
      %v1523 = vsel %vm1518, %v1506, %v1266
      %v1524 = vsel %vm1518, %v1507, %v1268
      %v1525 = vsel %vm1518, %v1508, %v1270
      %v1526 = vsel %vm1518, %v1509, %v1272
      %v1527 = vsel %vm1518, %v1510, %v1274
      %v1528 = vsel %vm1518, %v1511, %v1276
      %v1529 = vsel %vm1518, %v1512, %v1278
      %v1530 = vsel %vm1518, %v1513, %v1280
      %v1531 = vsel %vm1518, %v1514, %v1282
      %v1532 = vsel %vm1518, %v1515, %v1284
      %v1533 = vsel %vm1518, %v1516, %v1286
      %v1534 = vsel %vm1518, %v1517, %v1288
      %vm1535 = vcmask 457728
      %v1536 = vsel %vm1535, %v1519, %v1322
      %v1537 = vsel %vm1535, %v1520, %v1324
      %v1538 = vsel %vm1535, %v1521, %v1326
      %v1539 = vsel %vm1535, %v1522, %v1328
      %v1540 = vsel %vm1535, %v1523, %v1330
      %v1541 = vsel %vm1535, %v1524, %v1332
      %v1542 = vsel %vm1535, %v1525, %v1334
      %v1543 = vsel %vm1535, %v1526, %v1336
      %v1544 = vsel %vm1535, %v1527, %v1338
      %v1545 = vsel %vm1535, %v1528, %v1340
      %v1546 = vsel %vm1535, %v1529, %v1342
      %v1547 = vsel %vm1535, %v1530, %v1344
      %v1548 = vsel %vm1535, %v1531, %v1346
      %v1549 = vsel %vm1535, %v1532, %v1348
      %v1550 = vsel %vm1535, %v1533, %v1350
      %v1551 = vsel %vm1535, %v1534, %v1352
      %vm1552 = vcmask 523264
      %v1553 = vsel %vm1552, %v1536, %v1386
      %v1554 = vsel %vm1552, %v1537, %v1388
      %v1555 = vsel %vm1552, %v1538, %v1390
      %v1556 = vsel %vm1552, %v1539, %v1392
      %v1557 = vsel %vm1552, %v1540, %v1394
      %v1558 = vsel %vm1552, %v1541, %v1396
      %v1559 = vsel %vm1552, %v1542, %v1398
      %v1560 = vsel %vm1552, %v1543, %v1400
      %v1561 = vsel %vm1552, %v1544, %v1402
      %v1562 = vsel %vm1552, %v1545, %v1404
      %v1563 = vsel %vm1552, %v1546, %v1406
      %v1564 = vsel %vm1552, %v1547, %v1408
      %v1565 = vsel %vm1552, %v1548, %v1410
      %v1566 = vsel %vm1552, %v1549, %v1412
      %v1567 = vsel %vm1552, %v1550, %v1414
      %v1568 = vsel %vm1552, %v1551, %v1416
      %v1569 = vpack.c.bf16 %v1554, %v1553
      %v1570 = vpack.c.bf16 %v1556, %v1555
      %v1571 = vpack.c.bf16 %v1558, %v1557
      %v1572 = vpack.c.bf16 %v1560, %v1559
      %v1573 = vpack.c.bf16 %v1562, %v1561
      %v1574 = vpack.c.bf16 %v1564, %v1563
      %v1575 = vpack.c.bf16 %v1566, %v1565
      %v1576 = vpack.c.bf16 %v1568, %v1567
      %v1577 = vld [vmem:[%s1] sm:$0xf]
      %v1578 = vld [vmem:[%s1 + $0x4] sm:$0xf]
      %v1579 = vld [vmem:[%s1 + $0x8] sm:$0xf]
      %v1580 = vld [vmem:[%s1 + $0xc] sm:$0xf]
      %v1581 = vld [vmem:[%s1 + $0x10] sm:$0xf]
      %v1582 = vld [vmem:[%s1 + $0x14] sm:$0xf]
      %v1583 = vld [vmem:[%s1 + $0x18] sm:$0xf]
      %v1584 = vld [vmem:[%s1 + $0x1c] sm:$0xf]
      %v1585 = vld [vmem:[%s1 + $0x20] sm:$0xf]
      %v1586 = vld [vmem:[%s2] sm:$0x1]
      %v1588 = vperm.slane %v1586, 0
      %v1599 = vunpack.c.l.b16 %v1577
      %v1600 = vunpack.c.l.b16 %v1578
      %v1601 = vunpack.c.l.b16 %v1579
      %v1602 = vunpack.c.l.b16 %v1580
      %v1603 = vunpack.c.l.b16 %v1581
      %v1604 = vunpack.c.l.b16 %v1582
      %v1605 = vunpack.c.l.b16 %v1583
      %v1606 = vunpack.c.l.b16 %v1584
      %v1607 = vunpack.c.l.b16 %v1585
      %v1608 = vpack.c.b16 %v1600, %v1599
      %v1609 = vpack.c.b16 %v1602, %v1601
      %v1610 = vpack.c.b16 %v1604, %v1603
      %v1611 = vpack.c.b16 %v1606, %v1605
      %v1612 = vpack.c.b16 %v1607, %v1607
      %vm1617 = vcmask 588800
      %v1619 = vsel %vm1617, %v1569, 0
      %v1622 = vsel %vm1617, %v1570, 0
      %v1625 = vsel %vm1617, %v1571, 0
      %v1628 = vsel %vm1617, %v1572, 0
      %v1631 = vsel %vm1617, %v1573, 0
      %v1634 = vsel %vm1617, %v1574, 0
      %v1637 = vsel %vm1617, %v1575, 0
      %v1640 = vsel %vm1617, %v1576, 0
      %vm1642 = vcmask 1043456
      %v1644 = vsel %vm1642, %v1612, 0
      %1646 = vmatpush.bf16.msra.mxu0 0
      %1647 = vmatpush.bf16.msra.mxu0 0
      %1648 = vmatpush.bf16.msra.mxu0 0
      %1649 = vmatpush.bf16.msra.mxu0 %v1644
      %1650 = vmatpush.bf16.msra.mxu0 %v1611
      %1651 = vmatpush.bf16.msra.mxu0 %v1610
      %1652 = vmatpush.bf16.msra.mxu0 %v1609
      %1653 = vmatpush.bf16.msra.mxu0 %v1608
      %1654 = vmatmul.bf16.gmra.mxu0 %v1619
      %v1655 = vpop.f32.mrf.mxu0
      %v1656 = vadd.f32 %v1588, %v1655
      %v1657 = vpop.f32.mrf.mxu0
      %v1658 = vadd.f32 %v1588, %v1657
      %1659 = vmatmul.bf16.gmra.mxu0 %v1622
      %v1660 = vpop.f32.mrf.mxu0
      %v1661 = vadd.f32 %v1588, %v1660
      %v1662 = vpop.f32.mrf.mxu0
      %v1663 = vadd.f32 %v1588, %v1662
      %1664 = vmatmul.bf16.gmra.mxu0 %v1625
      %v1665 = vpop.f32.mrf.mxu0
      %v1666 = vadd.f32 %v1588, %v1665
      %v1667 = vpop.f32.mrf.mxu0
      %v1668 = vadd.f32 %v1588, %v1667
      %1669 = vmatmul.bf16.gmra.mxu0 %v1628
      %v1670 = vpop.f32.mrf.mxu0
      %v1671 = vadd.f32 %v1588, %v1670
      %v1672 = vpop.f32.mrf.mxu0
      %v1673 = vadd.f32 %v1588, %v1672
      %1674 = vmatmul.bf16.gmra.mxu0 %v1631
      %v1675 = vpop.f32.mrf.mxu0
      %v1676 = vadd.f32 %v1588, %v1675
      %v1677 = vpop.f32.mrf.mxu0
      %v1678 = vadd.f32 %v1588, %v1677
      %1679 = vmatmul.bf16.gmra.mxu0 %v1634
      %v1680 = vpop.f32.mrf.mxu0
      %v1681 = vadd.f32 %v1588, %v1680
      %v1682 = vpop.f32.mrf.mxu0
      %v1683 = vadd.f32 %v1588, %v1682
      %1684 = vmatmul.bf16.gmra.mxu0 %v1637
      %v1685 = vpop.f32.mrf.mxu0
      %v1686 = vadd.f32 %v1588, %v1685
      %v1687 = vpop.f32.mrf.mxu0
      %v1688 = vadd.f32 %v1588, %v1687
      %1689 = vmatmul.bf16.gmra.mxu0 %v1640
      %v1690 = vpop.f32.mrf.mxu0
      %v1691 = vadd.f32 %v1588, %v1690
      %v1692 = vpop.f32.mrf.mxu0
      %v1693 = vadd.f32 %v1588, %v1692
      %1694 = vdwg.mxu0
      %v1695 = vsel %vm1433, %v1656, 0.0
      %v1696 = vsel %vm1433, %v1658, 0.0
      %v1697 = vadd.f32 %v1695, %v1696
      %v1698 = vsel %vm1433, %v1661, 0.0
      %v1699 = vadd.f32 %v1697, %v1698
      %v1700 = vsel %vm1433, %v1663, 0.0
      %v1701 = vadd.f32 %v1699, %v1700
      %v1702 = vsel %vm1433, %v1666, 0.0
      %v1703 = vadd.f32 %v1701, %v1702
      %v1704 = vsel %vm1433, %v1668, 0.0
      %v1705 = vadd.f32 %v1703, %v1704
      %v1706 = vsel %vm1433, %v1671, 0.0
      %v1707 = vadd.f32 %v1705, %v1706
      %v1708 = vsel %vm1433, %v1673, 0.0
      %v1709 = vadd.f32 %v1707, %v1708
      %v1710 = vsel %vm1433, %v1676, 0.0
      %v1711 = vadd.f32 %v1709, %v1710
      %v1712 = vsel %vm1433, %v1678, 0.0
      %v1713 = vadd.f32 %v1711, %v1712
      %v1714 = vsel %vm1433, %v1681, 0.0
      %v1715 = vadd.f32 %v1713, %v1714
      %v1716 = vsel %vm1433, %v1683, 0.0
      %v1717 = vadd.f32 %v1715, %v1716
      %v1718 = vsel %vm1433, %v1686, 0.0
      %v1719 = vadd.f32 %v1717, %v1718
      %v1720 = vsel %vm1433, %v1688, 0.0
      %v1721 = vadd.f32 %v1719, %v1720
      %v1722 = vsel %vm1433, %v1691, 0.0
      %v1723 = vadd.f32 %v1721, %v1722
      %v1724 = vsel %vm1433, %v1693, 0.0
      %v1725 = vadd.f32 %v1723, %v1724
      %v1726 = vrot.slane %v1725, 4
      %v1727 = vadd.f32 %v1725, %v1726
      %v1728 = vrot.slane %v1727, 2
      %v1729 = vadd.f32 %v1727, %v1728
      %v1730 = vrot.slane %v1729, 1
      %v1731 = vadd.f32 %v1729, %v1730
      %vm1732 = vcmask 57344
      %1733 = vst.msk [vmem:[%s333] sm:$0x1] %vm1732, %v1731
      %v1734 = vmul.f32 %v1656, %v1656
      %v1735 = vmul.f32 %v1658, %v1658
      %v1736 = vmul.f32 %v1661, %v1661
      %v1737 = vmul.f32 %v1663, %v1663
      %v1738 = vmul.f32 %v1666, %v1666
      %v1739 = vmul.f32 %v1668, %v1668
      %v1740 = vmul.f32 %v1671, %v1671
      %v1741 = vmul.f32 %v1673, %v1673
      %v1742 = vmul.f32 %v1676, %v1676
      %v1743 = vmul.f32 %v1678, %v1678
      %v1744 = vmul.f32 %v1681, %v1681
      %v1745 = vmul.f32 %v1683, %v1683
      %v1746 = vmul.f32 %v1686, %v1686
      %v1747 = vmul.f32 %v1688, %v1688
      %v1748 = vmul.f32 %v1691, %v1691
      %v1749 = vmul.f32 %v1693, %v1693
      %v1750 = vsel %vm1433, %v1734, 0.0
      %v1751 = vsel %vm1433, %v1735, 0.0
      %v1752 = vadd.f32 %v1750, %v1751
      %v1753 = vsel %vm1433, %v1736, 0.0
      %v1754 = vadd.f32 %v1752, %v1753
      %v1755 = vsel %vm1433, %v1737, 0.0
      %v1756 = vadd.f32 %v1754, %v1755
      %v1757 = vsel %vm1433, %v1738, 0.0
      %v1758 = vadd.f32 %v1756, %v1757
      %v1759 = vsel %vm1433, %v1739, 0.0
      %v1760 = vadd.f32 %v1758, %v1759
      %v1761 = vsel %vm1433, %v1740, 0.0
      %v1762 = vadd.f32 %v1760, %v1761
      %v1763 = vsel %vm1433, %v1741, 0.0
      %v1764 = vadd.f32 %v1762, %v1763
      %v1765 = vsel %vm1433, %v1742, 0.0
      %v1766 = vadd.f32 %v1764, %v1765
      %v1767 = vsel %vm1433, %v1743, 0.0
      %v1768 = vadd.f32 %v1766, %v1767
      %v1769 = vsel %vm1433, %v1744, 0.0
      %v1770 = vadd.f32 %v1768, %v1769
      %v1771 = vsel %vm1433, %v1745, 0.0
      %v1772 = vadd.f32 %v1770, %v1771
      %v1773 = vsel %vm1433, %v1746, 0.0
      %v1774 = vadd.f32 %v1772, %v1773
      %v1775 = vsel %vm1433, %v1747, 0.0
      %v1776 = vadd.f32 %v1774, %v1775
      %v1777 = vsel %vm1433, %v1748, 0.0
      %v1778 = vadd.f32 %v1776, %v1777
      %v1779 = vsel %vm1433, %v1749, 0.0
      %v1780 = vadd.f32 %v1778, %v1779
      %v1781 = vrot.slane %v1780, 4
      %v1782 = vadd.f32 %v1780, %v1781
      %v1783 = vrot.slane %v1782, 2
      %v1784 = vadd.f32 %v1782, %v1783
      %v1785 = vrot.slane %v1784, 1
      %v1786 = vadd.f32 %v1784, %v1785
      %1787 = vst.msk [vmem:[%s340] sm:$0x1] %vm1732, %v1786
      %1788 = vst.msk [vmem:[%s325] sm:$0xff] %vm1433, %v1656
      %1789 = vst.msk [vmem:[%s325 + $0x8] sm:$0xff] %vm1433, %v1658
      %1790 = vst.msk [vmem:[%s325 + $0x10] sm:$0xff] %vm1433, %v1661
      %1791 = vst.msk [vmem:[%s325 + $0x18] sm:$0xff] %vm1433, %v1663
      %1792 = vst.msk [vmem:[%s325 + $0x20] sm:$0xff] %vm1433, %v1666
      %1793 = vst.msk [vmem:[%s325 + $0x28] sm:$0xff] %vm1433, %v1668
      %1794 = vst.msk [vmem:[%s325 + $0x30] sm:$0xff] %vm1433, %v1671
      %1795 = vst.msk [vmem:[%s325 + $0x38] sm:$0xff] %vm1433, %v1673
      %1796 = vst.msk [vmem:[%s325 + $0x40] sm:$0xff] %vm1433, %v1676
      %1797 = vst.msk [vmem:[%s325 + $0x48] sm:$0xff] %vm1433, %v1678
      %1798 = vst.msk [vmem:[%s325 + $0x50] sm:$0xff] %vm1433, %v1681
      %1799 = vst.msk [vmem:[%s325 + $0x58] sm:$0xff] %vm1433, %v1683
      %1800 = vst.msk [vmem:[%s325 + $0x60] sm:$0xff] %vm1433, %v1686
      %1801 = vst.msk [vmem:[%s325 + $0x68] sm:$0xff] %vm1433, %v1688
      %1802 = vst.msk [vmem:[%s325 + $0x70] sm:$0xff] %vm1433, %v1691
      %1803 = vst.msk [vmem:[%s325 + $0x78] sm:$0xff] %vm1433, %v1693
      %s1804 = smul.u32 8, %s24
      %p1805 = scmp.lt.s32.totalorder %s23, 1
      %s1806 = scalar_select %p1805, %s23, 1
      %p1807 = scmp.lt.s32.totalorder %s1804, 15
      %s1808 = scalar_select %p1807, %s1804, 15
      %s1809 = smul.addr %s1808, 2
      %s1810 = smul.addr %s1806, 32
      %s1811 = sadd.s32 %s1809, %s1810
      %s1812 = smul.addr %s1811, 8
      %s1813 = scalar_lea.vmem %s5, %s1812
      %p1814 = scmp.lt.s32.totalorder %s23, 1
      %s1815 = scalar_select %p1814, %s23, 1
      %p1816 = scmp.lt.s32.totalorder %s24, 1
      %s1817 = scalar_select %p1816, %s24, 1
      %s1818 = smul.addr %s1815, 2
      %s1819 = sadd.s32 %s1817, %s1818
      %s1820 = scalar_lea.vmem %s6, %s1819
      %p1821 = scmp.lt.s32.totalorder %s23, 1
      %s1822 = scalar_select %p1821, %s23, 1
      %p1823 = scmp.lt.s32.totalorder %s24, 1
      %s1824 = scalar_select %p1823, %s24, 1
      %s1825 = smul.addr %s1822, 2
      %s1826 = sadd.s32 %s1824, %s1825
      %s1827 = scalar_lea.vmem %s7, %s1826
      // Predicated region
      $region45: #{double_conv_forward.4} parent=39 // pred_check
        %p1828 = pneg %p161
      $region46: #{double_conv_forward.4} parent=39 // pred_check_branch
        %1830 = sbr.rel (%p1828) target = $region48
      $region47: #{double_conv_forward.4} parent=39 // pred_region
        %s1831 = smul.u32 8, %s24
      $region48: #{double_conv_forward.4} parent=39 // pred_fallthru
        _
      // Predicated region
      $region49: #{double_conv_forward.4} parent=39 // pred_check
        %p1832 = pneg %p189
      $region50: #{double_conv_forward.4} parent=39 // pred_check_branch
        %1834 = sbr.rel (%p1832) target = $region52
      $region51: #{double_conv_forward.4} parent=39 // pred_region
        _
      $region52: #{double_conv_forward.4} parent=39 // pred_fallthru
        _
      // Predicated region
      $region53: #{double_conv_forward.4} parent=39 // pred_check
        %p1835 = pneg %p217
      $region54: #{double_conv_forward.4} parent=39 // pred_check_branch
        %1837 = sbr.rel (%p1835) target = $region56
      $region55: #{double_conv_forward.4} parent=39 // pred_region
        _
      $region56: #{double_conv_forward.4} parent=39 // pred_fallthru
        _
    $region40: #{double_conv_forward.4} parent=5 // pred_fallthru
      _
    %p1838 = scmp.le.s32.totalorder 2, %s14
    // Predicated region
    $region57: #{double_conv_forward.4} parent=5 // pred_check
      %p1839 = pneg %p1838
    $region58: #{double_conv_forward.4} parent=5 // pred_check_branch
      %1841 = sbr.rel (%p1839) target = $region60
    $region59: #{double_conv_forward.4} parent=5 // pred_region
      %s1842 = ssub.s32 %s14, 2
      // Predicated region
      $region61: #{double_conv_forward.4} parent=59 // pred_check
        %p1843 = pneg %p167
      $region62: #{double_conv_forward.4} parent=59 // pred_check_branch
        %1845 = sbr.rel (%p1843) target = $region64
      $region63: #{double_conv_forward.4} parent=59 // pred_region
        %s1846 = smul.u32 8, %s26
        %p1847 = scmp.lt.s32.totalorder %s25, 1
        %s1848 = scalar_select %p1847, %s25, 1
        %p1849 = scmp.lt.s32.totalorder %s1846, 15
        %s1850 = scalar_select %p1849, %s1846, 15
        %s1851 = smul.addr %s1850, 2
        %s1852 = smul.addr %s1848, 32
        %s1853 = sadd.s32 %s1851, %s1852
        %s1854 = smul.addr %s1853, 8
        %s1855 = scalar_lea.vmem %s5, %s1854
      $region64: #{double_conv_forward.4} parent=59 // pred_fallthru
        _
      // Predicated region
      $region65: #{double_conv_forward.4} parent=59 // pred_check
        %p1856 = pneg %p195
      $region66: #{double_conv_forward.4} parent=59 // pred_check_branch
        %1858 = sbr.rel (%p1856) target = $region68
      $region67: #{double_conv_forward.4} parent=59 // pred_region
        %p1859 = scmp.lt.s32.totalorder %s25, 1
        %s1860 = scalar_select %p1859, %s25, 1
        %p1861 = scmp.lt.s32.totalorder %s26, 1
        %s1862 = scalar_select %p1861, %s26, 1
        %s1863 = smul.addr %s1860, 2
        %s1864 = sadd.s32 %s1862, %s1863
        %s1865 = scalar_lea.vmem %s6, %s1864
      $region68: #{double_conv_forward.4} parent=59 // pred_fallthru
        _
      // Predicated region
      $region69: #{double_conv_forward.4} parent=59 // pred_check
        %p1866 = pneg %p223
      $region70: #{double_conv_forward.4} parent=59 // pred_check_branch
        %1868 = sbr.rel (%p1866) target = $region72
      $region71: #{double_conv_forward.4} parent=59 // pred_region
        %p1869 = scmp.lt.s32.totalorder %s25, 1
        %s1870 = scalar_select %p1869, %s25, 1
        %p1871 = scmp.lt.s32.totalorder %s26, 1
        %s1872 = scalar_select %p1871, %s26, 1
        %s1873 = smul.addr %s1870, 2
        %s1874 = sadd.s32 %s1872, %s1873
        %s1875 = scalar_lea.vmem %s7, %s1874
      $region72: #{double_conv_forward.4} parent=59 // pred_fallthru
        _
    $region60: #{double_conv_forward.4} parent=5 // pred_fallthru
      _
  $region6: #{double_conv_forward.4} parent=0 // loop_footer
    %s18 = sadd.s32 1, %s14
  $region7: #{double_conv_forward.4} parent=0 // loop_footer_branch
    %13 = sbr.rel target = $region3
  $region8: #{double_conv_forward.4} parent=0 // loop_exit
    _

</llo_original>
